<compile_context>
chip_gen: v7x
topology: tpu7x:2x2x1
jax: 0.10.0
libtpu: 0.0.40
codegen_flags: <defaults>
</compile_context>

<pallas_src>
import jax
import jax.numpy as jnp
from jax import lax
from jax.experimental import pallas as pl
from jax.experimental.pallas import tpu as pltpu

# ----------------------------- config ---------------------------------------
VOB_SIZE = 50
EMB_SIZE = 16
HIDDEN = 32
ATT_SIZE = 32          # must equal HIDDEN: `v` (HIDDEN,) broadcasts over att dim
BATCH = 2
T_TEXT = 12
T_HEAD = 6
B_PAD = 8              # batch padded to one full sublane tile

_VMEM_SPEC = pl.BlockSpec(memory_space=pltpu.MemorySpace.VMEM)


def _att_layout(H, A):
    """Row offsets of the packed attention/FC slab (width 2A)."""
    lay = {"wh": 0}
    lay["wst"] = 2 * H
    lay["bst"] = lay["wst"] + H
    lay["v"] = lay["bst"] + 1
    lay["bh"] = lay["v"] + 1
    lay["bout"] = lay["bh"] + 1
    lay["wmix"] = lay["bout"] + 1
    lay["wout"] = ((lay["wmix"] + 1 + 7) // 8) * 8     # 8-sublane aligned
    lay["rows"] = lay["wout"] + 2 * A
    return lay


# --------------------------- fused kernel ------------------------------------
def _make_att_cls_kernel(BP, T1, T2, V, H, A, VROWS, LAY):
    """Both LSTM+attention branches, mix, final softmax in one kernel."""
    N1, N2 = T1 * BP, T2 * BP

    def kernel(tok_ref, mbias_ref, wslab_ref, att_ref, out_ref,
               gx_ref, hall_ref):
        f32 = jnp.float32

        # ---- fused embedding + input projection: ONE one-hot matmul ---------
        # row r = t*BP + b carries (up to) two ones: the text token and the
        # (V-offset) headline token, so hot @ Gemb yields both branches' input
        # gates in the fused [i1 i2|f1 f2|o1 o2|g1 g2] column layout.
        tok = tok_ref[...]                                          # (N1, 2) i32
        col = lax.broadcasted_iota(jnp.int32, (N1, VROWS), 1)
        hot = ((tok[:, 0:1] == col).astype(f32)
               + (tok[:, 1:2] == col).astype(f32))                  # (N1, VROWS)
        gx_ref[...] = jnp.dot(hot, wslab_ref[0:VROWS, :],
                              preferred_element_type=f32)           # (N1, 8H)

        whh_bd = wslab_ref[VROWS:VROWS + 2 * H, :]                  # (2H, 8H)

        # ---- fused, fully-unrolled recurrence --------------------------------
        # One (BP,2H)@(2H,8H) matmul, one sigmoid(6H), one tanh(H*2) per step
        # covers BOTH branches (block-diagonal Whh keeps them independent).
        h_cat = jnp.zeros((BP, 2 * H), f32)
        c_cat = jnp.zeros((BP, 2 * H), f32)
        h2_last = h_cat[:, H:]
        for t in range(T1):                                         # static unroll
            g = gx_ref[t * BP:(t + 1) * BP, :] + jnp.dot(
                h_cat, whh_bd, preferred_element_type=f32)          # (BP, 8H)
            s = jax.nn.sigmoid(g[:, :6 * H])                        # i|f|o, both
            gg = jnp.tanh(g[:, 6 * H:])                             # g, both
            c_cat = s[:, 2 * H:4 * H] * c_cat + s[:, 0:2 * H] * gg
            h_cat = s[:, 4 * H:6 * H] * jnp.tanh(c_cat)
            hall_ref[t * BP:(t + 1) * BP, :] = h_cat[:, :H]         # text h_t
            if t < T2:                                              # headline h_t
                hall_ref[N1 + t * BP:N1 + (t + 1) * BP, :] = h_cat[:, H:]
            if t == T2 - 1:
                h2_last = h_cat[:, H:]
        h1_last = h_cat[:, :H]

        # ---- fused attention epilogue ----------------------------------------
        wh_bd = att_ref[LAY["wh"]:LAY["wh"] + 2 * H, :]             # (2H, 2A)
        wst = att_ref[LAY["wst"]:LAY["wst"] + H, 0:A]               # (H, A) shared
        bst = att_ref[LAY["bst"]:LAY["bst"] + 1, 0:A]               # (1, A)
        v_row = att_ref[LAY["v"]:LAY["v"] + 1, 0:A]                 # (1, A) shared
        bh_cat = att_ref[LAY["bh"]:LAY["bh"] + 1, :]                # (1, 2A)
        bout = att_ref[LAY["bout"]:LAY["bout"] + 1, 0:4]            # (1, 4)
        wmix = att_ref[LAY["wmix"]:LAY["wmix"] + 1, 0:1]            # (1, 1)
        wout_bd = att_ref[LAY["wout"]:LAY["wout"] + 2 * A, 0:4]     # (2A, 4)

        hall = hall_ref[...]                                        # (N1+N2, H)
        states = jnp.dot(hall, wst, preferred_element_type=f32) + bst

        hcat_last = jnp.concatenate([h1_last, h2_last], axis=1)     # (BP, 2H)
        hproj = jnp.dot(hcat_last, wh_bd,
                        preferred_element_type=f32) + bh_cat        # (BP, 2A)
        # replicate hproj over time with ONE selection matmul (no T-way concat)
        hstack = jnp.concatenate([hproj[:, :A], hproj[:, A:]], axis=0)  # (2BP, A)
        r_io = lax.broadcasted_iota(jnp.int32, (N1 + N2, 2 * BP), 0)
        c_io = lax.broadcasted_iota(jnp.int32, (N1 + N2, 2 * BP), 1)
        tgt = (r_io & (BP - 1)) + (r_io >= N1).astype(jnp.int32) * BP
        rep = (c_io == tgt).astype(f32)                             # (N1+N2, 2BP)
        hproj_rep = jnp.dot(rep, hstack, preferred_element_type=f32)

        tterm = jnp.tanh(states + hproj_rep)                        # (N1+N2, A)
        e = jnp.sum(tterm * v_row, axis=1, keepdims=True) + mbias_ref[...]

        def branch(e_b, states_b, N):
            m = jnp.max(e_b, axis=0, keepdims=True)     # branch-global shift
            p = jnp.exp(e_b - m)                                    # (N, 1)
            rr = lax.broadcasted_iota(jnp.int32, (BP, N), 1)
            bb = lax.broadcasted_iota(jnp.int32, (BP, N), 0)
            sel = ((rr & (BP - 1)) == bb).astype(f32)               # (BP, N)
            # denominator + unnormalized context in ONE matmul
            combo = jnp.dot(sel, jnp.concatenate([p, p * states_b], axis=1),
                            preferred_element_type=f32)             # (BP, 1+A)
            inv = pl.reciprocal(jnp.maximum(combo[:, 0:1], 1e-30), approx=True)
            return combo[:, 1:] * inv                               # (BP, A)

        ctx1 = branch(e[0:N1, :], states[0:N1, :], N1)
        ctx2 = branch(e[N1:, :], states[N1:, :], N2)
        out4 = jnp.dot(jnp.concatenate([ctx1, ctx2], axis=1), wout_bd,
                       preferred_element_type=f32) + bout           # (BP, 4)

        # ---- learned-scalar mix + final class softmax -------------------------
        r = wmix * out4[:, 0:2] + (1.0 - wmix) * out4[:, 2:4]       # (BP, 2)
        r = r - jnp.max(r, axis=-1, keepdims=True)
        ex = jnp.exp(r)
        out_ref[...] = ex / jnp.sum(ex, axis=-1, keepdims=True)     # exact div

    return kernel


# ------------------------------ forward --------------------------------------
@jax.jit
def att_cls_forward(params, text, text_pad_mask, headline, headline_mask):
    B, T1 = text.shape
    _, T2 = headline.shape
    assert T1 >= T2, "fused loop assumes text is at least as long as headline"
    V, _E = params["embed"].shape
    H = params["text"]["whh"].shape[0]
    A = params["wst"].shape[1]
    BP = B_PAD
    VROWS = ((2 * V + 7) // 8) * 8
    LAY = _att_layout(H, A)
    pt, ph = params["text"], params["head"]
    f32 = jnp.float32

    # ---- slab 1/2: token ids + mask bias (time-major rows r = t*BP + b) -----
    def pad_b(x, fill):
        return jnp.concatenate(
            [x, jnp.full((BP - B, x.shape[1]), fill, x.dtype)], axis=0)

    ids1 = pad_b(text.astype(jnp.int32), 0).T.reshape(T1 * BP)
    ids2 = pad_b(headline.astype(jnp.int32), 0).T.reshape(T2 * BP) + V
    ids2 = jnp.concatenate(
        [ids2, jnp.full(((T1 - T2) * BP,), -1, jnp.int32)], axis=0)
    tok = jnp.stack([ids1, ids2], axis=1)                           # (T1*BP, 2)

    neg = jnp.float32(-1e30)
    mb1 = jnp.where(pad_b(text_pad_mask, True).T.reshape(T1 * BP, 1), neg, 0.0)
    mb2 = jnp.where(pad_b(headline_mask, True).T.reshape(T2 * BP, 1), neg, 0.0)
    mbias = jnp.concatenate([mb1, mb2], axis=0).astype(f32)         # ((T1+T2)*BP,1)

    # ---- slab 3: embed-folded gate table + block-diag Whh (width 8H) --------
    def gsplit(w):
        return (w[:, :H], w[:, H:2 * H], w[:, 2 * H:3 * H], w[:, 3 * H:])

    def fuse_cols(b1, b2):
        # fused gate-column order [i1 i2 | f1 f2 | o1 o2 | g1 g2]
        return jnp.concatenate([b1[0], b2[0], b1[1], b2[1],
                                b1[2], b2[2], b1[3], b2[3]], axis=1)

    zV = (jnp.zeros((V, H), f32),) * 4
    zH = (jnp.zeros((H, H), f32),) * 4
    g1_tab = params["embed"] @ pt["wih"] + pt["blstm"]      # bias folded in
    g2_tab = params["embed_h"] @ ph["wih"] + ph["blstm"]
    gemb = jnp.concatenate(
        [fuse_cols(gsplit(g1_tab), zV),
         fuse_cols(zV, gsplit(g2_tab)),
         jnp.zeros((VROWS - 2 * V, 8 * H), f32)], axis=0)           # (VROWS, 8H)
    whh_bd = jnp.concatenate(
        [fuse_cols(gsplit(pt["whh"]), zH),
         fuse_cols(zH, gsplit(ph["whh"]))], axis=0)                 # (2H, 8H)
    w_slab = jnp.concatenate([gemb, whh_bd], axis=0)                # (VROWS+2H, 8H)

    # ---- slab 4: attention / FC weights, biases, mix scalar (width 2A) ------
    A2 = 2 * A

    def padw(x):
        return jnp.concatenate(
            [x, jnp.zeros((x.shape[0], A2 - x.shape[1]), f32)], axis=1)

    wh_bd = jnp.concatenate(
        [jnp.concatenate([pt["wh"], jnp.zeros((H, A), f32)], axis=1),
         jnp.concatenate([jnp.zeros((H, A), f32), ph["wh"]], axis=1)], axis=0)
    wout_bd = jnp.concatenate(
        [jnp.concatenate([pt["wout"], jnp.zeros((A, 2), f32)], axis=1),
         jnp.concatenate([jnp.zeros((A, 2), f32), ph["wout"]], axis=1)], axis=0)
    att_slab = jnp.concatenate(
        [wh_bd,                                                     # [0, 2H)
         padw(params["wst"]),                                       # [2H, 3H)
         padw(params["bst"]),                                       # bst row
         padw(params["v"]),                                         # v row
         jnp.concatenate([pt["bh"], ph["bh"]], axis=1),             # bh row
         padw(jnp.concatenate([pt["bout"], ph["bout"]], axis=1)),   # bout row
         padw(params["weight"]),                                    # wmix row
         jnp.zeros((LAY["wout"] - (LAY["wmix"] + 1), A2), f32),     # align pad
         padw(wout_bd)], axis=0)                                    # [wout, rows)

    kernel = _make_att_cls_kernel(BP, T1, T2, V, H, A, VROWS, LAY)
    out = pl.pallas_call(
        kernel,
        out_shape=jax.ShapeDtypeStruct((BP, 2), jnp.float32),
        in_specs=[_VMEM_SPEC] * 4,
        out_specs=_VMEM_SPEC,
        scratch_shapes=[pltpu.VMEM((T1 * BP, 8 * H), jnp.float32),       # gx
                        pltpu.VMEM(((T1 + T2) * BP, H), jnp.float32)],   # hall
        compiler_params=pltpu.CompilerParams(vmem_limit_bytes=8 * 1024 * 1024),
    )(tok, mbias, w_slab, att_slab)
    return out[:B]                                      # drop padded batch rows


# ---------------------------- parameter init ---------------------------------
def init_params(key):
    ks = jax.random.split(key, 12)
    s = 0.1

    def lin(k, din, dout):
        kw, kb = jax.random.split(k)
        return (jax.random.normal(kw, (din, dout), jnp.float32) * s,
                jax.random.normal(kb, (1, dout), jnp.float32) * s)

    def lstm(k, e, h):
        # gate columns laid out [i | f | o | g]; with random init this is just
        # a column permutation of PyTorch's [i|f|g|o] (same distribution).
        k1, k2, k3 = jax.random.split(k, 3)
        return (jax.random.normal(k1, (e, 4 * h), jnp.float32) * s,     # W_ih^T
                jax.random.normal(k2, (h, 4 * h), jnp.float32) * s,     # W_hh^T
                jax.random.normal(k3, (1, 4 * h), jnp.float32) * s)     # b_ih+b_hh

    params = {}
    params["embed"] = jax.random.normal(ks[0], (VOB_SIZE, EMB_SIZE), jnp.float32)
    params["embed_h"] = jax.random.normal(ks[1], (VOB_SIZE, EMB_SIZE), jnp.float32)

    wih, whh, bl = lstm(ks[2], EMB_SIZE, HIDDEN)
    wih_h, whh_h, bl_h = lstm(ks[3], EMB_SIZE, HIDDEN)

    wh, bh = lin(ks[4], HIDDEN, ATT_SIZE)            # fc_h
    wst, bst = lin(ks[5], HIDDEN, ATT_SIZE)          # fc_state (shared in fwd)
    wout, bout = lin(ks[6], ATT_SIZE, 2)             # fc_out
    wh_h, bh_h = lin(ks[7], HIDDEN, ATT_SIZE)        # fc_h_h
    _wst_h, _bst_h = lin(ks[8], HIDDEN, ATT_SIZE)    # fc_state_h (unused in fwd)
    wout_h, bout_h = lin(ks[9], ATT_SIZE, 2)         # fc_out_h

    params["wst"], params["bst"] = wst, bst
    params["v"] = jnp.ones((1, ATT_SIZE), jnp.float32)   # torch.ones(hiden), row
    _v_h = jnp.ones((1, ATT_SIZE), jnp.float32)          # unused in forward
    params["weight"] = jnp.full((1, 1), 0.5, jnp.float32)

    params["text"] = dict(wih=wih, whh=whh, blstm=bl,
                          wh=wh, bh=bh, wout=wout, bout=bout)
    params["head"] = dict(wih=wih_h, whh=whh_h, blstm=bl_h,
                          wh=wh_h, bh=bh_h, wout=wout_h, bout=bout_h)
    return params


# -------------------------------- main ---------------------------------------
if __name__ == "__main__":
    key = jax.random.PRNGKey(0)
    k_params, k_text, k_head = jax.random.split(key, 3)

    params = init_params(k_params)

    text = jax.random.randint(k_text, (BATCH, T_TEXT), 0, VOB_SIZE, jnp.int32)
    headline = jax.random.randint(k_head, (BATCH, T_HEAD), 0, VOB_SIZE, jnp.int32)

    # pad masks: True (1) == padded position; keep at least one valid token/row
    text_lens = jnp.array([T_TEXT, T_TEXT - 3])
    head_lens = jnp.array([T_HEAD, T_HEAD - 2])
    text_pad_mask = jnp.arange(T_TEXT)[None, :] >= text_lens[:, None]
    headline_mask = jnp.arange(T_HEAD)[None, :] >= head_lens[:, None]

    out = att_cls_forward(params, text, text_pad_mask, headline, headline_mask)
    out = jax.block_until_ready(out)

    assert out.shape == (BATCH, 2)
    assert bool(jnp.all(jnp.isfinite(out)))
    assert bool(jnp.allclose(jnp.sum(out, axis=-1), 1.0, atol=1e-5))
    print("KERNEL_OK")
</pallas_src>

<mosaic_0001>
module attributes {stable_mosaic.version = 11 : i64} {
  func.func @kernel(%arg0: memref<96x2xi32, #tpu.memory_space<vmem>>, %arg1: memref<144x1xf32, #tpu.memory_space<vmem>>, %arg2: memref<168x256xf32, #tpu.memory_space<vmem>>, %arg3: memref<168x64xf32, #tpu.memory_space<vmem>>, %arg4: memref<8x2xf32, #tpu.memory_space<vmem>>, %arg5: memref<96x256xf32, #tpu.memory_space<vmem>>, %arg6: memref<144x32xf32, #tpu.memory_space<vmem>>) attributes {dimension_semantics = [], scalar_prefetch = 0 : i64, scratch_operands = 2 : i64, tpu.core_type = #tpu.core_type<tc>} {
    %c0 = arith.constant 0 : index
    %c0_0 = arith.constant 0 : index
    %0 = vector.load %arg0[%c0, %c0_0] : memref<96x2xi32, #tpu.memory_space<vmem>>, vector<96x2xi32>
    %1 = tpu.iota {dimensions = array<i32: 1>} : vector<96x104xi32>
    %2 = vector.extract_strided_slice %0 {offsets = [0, 0], sizes = [96, 1], strides = [1, 1]} : vector<96x2xi32> to vector<96x1xi32>
    %3 = vector.broadcast %2 : vector<96x1xi32> to vector<96x104xi32>
    %4 = arith.cmpi eq, %3, %1 : vector<96x104xi32>
    %5 = arith.extui %4 : vector<96x104xi1> to vector<96x104xi32>
    %6 = arith.sitofp %5 : vector<96x104xi32> to vector<96x104xf32>
    %7 = vector.extract_strided_slice %0 {offsets = [0, 1], sizes = [96, 1], strides = [1, 1]} : vector<96x2xi32> to vector<96x1xi32>
    %8 = vector.broadcast %7 : vector<96x1xi32> to vector<96x104xi32>
    %9 = arith.cmpi eq, %8, %1 : vector<96x104xi32>
    %10 = arith.extui %9 : vector<96x104xi1> to vector<96x104xi32>
    %11 = arith.sitofp %10 : vector<96x104xi32> to vector<96x104xf32>
    %12 = arith.addf %6, %11 : vector<96x104xf32>
    %c0_1 = arith.constant 0 : index
    %c0_2 = arith.constant 0 : index
    %13 = vector.load %arg2[%c0_1, %c0_2] : memref<168x256xf32, #tpu.memory_space<vmem>>, vector<104x256xf32>
    %cst = arith.constant dense<0.000000e+00> : vector<96x256xf32>
    %14 = tpu.matmul %12, %13, %cst {dimension_numbers = #tpu.dot_dimension_numbers<[1], [0], [0], [1], [0, 0, 1, 1], [], []>} : vector<96x104xf32>, vector<104x256xf32>, vector<96x256xf32> -> vector<96x256xf32>
    %c0_3 = arith.constant 0 : index
    %c0_4 = arith.constant 0 : index
    %15 = vector.load %arg5[%c0_3, %c0_4] : memref<96x256xf32, #tpu.memory_space<vmem>>, vector<96x256xf32>
    tpu.vector_store %arg5[%c0_3, %c0_4], %14 {strides = array<i32>} : memref<96x256xf32, #tpu.memory_space<vmem>>, vector<96x256xf32>,
    %c104 = arith.constant 104 : index
    %c0_5 = arith.constant 0 : index
    %16 = vector.load %arg2[%c104, %c0_5] : memref<168x256xf32, #tpu.memory_space<vmem>>, vector<64x256xf32>
    %cst_6 = arith.constant 0.000000e+00 : f32
    %17 = vector.broadcast %cst_6 : f32 to vector<8x64xf32>
    %cst_7 = arith.constant 0.000000e+00 : f32
    %18 = vector.broadcast %cst_7 : f32 to vector<8x64xf32>
    %c0_8 = arith.constant 0 : index
    %c0_9 = arith.constant 0 : index
    %19 = vector.load %arg5[%c0_8, %c0_9] : memref<96x256xf32, #tpu.memory_space<vmem>>, vector<8x256xf32>
    %cst_10 = arith.constant dense<0.000000e+00> : vector<8x256xf32>
    %20 = tpu.matmul %17, %16, %cst_10 {dimension_numbers = #tpu.dot_dimension_numbers<[1], [0], [0], [1], [0, 0, 1, 1], [], []>} : vector<8x64xf32>, vector<64x256xf32>, vector<8x256xf32> -> vector<8x256xf32>
    %21 = arith.addf %19, %20 : vector<8x256xf32>
    %22 = vector.extract_strided_slice %21 {offsets = [0, 0], sizes = [8, 192], strides = [1, 1]} : vector<8x256xf32> to vector<8x192xf32>
    %23 = arith.negf %22 : vector<8x192xf32>
    %24 = math.exp %23 : vector<8x192xf32>
    %cst_11 = arith.constant 1.000000e+00 : f32
    %25 = vector.broadcast %cst_11 : f32 to vector<8x192xf32>
    %26 = arith.addf %25, %24 : vector<8x192xf32>
    %27 = arith.divf %25, %26 : vector<8x192xf32>
    %28 = vector.extract_strided_slice %21 {offsets = [0, 192], sizes = [8, 64], strides = [1, 1]} : vector<8x256xf32> to vector<8x64xf32>
    %29 = math.tanh %28 : vector<8x64xf32>
    %30 = vector.extract_strided_slice %27 {offsets = [0, 64], sizes = [8, 64], strides = [1, 1]} : vector<8x192xf32> to vector<8x64xf32>
    %31 = arith.mulf %30, %18 : vector<8x64xf32>
    %32 = vector.extract_strided_slice %27 {offsets = [0, 0], sizes = [8, 64], strides = [1, 1]} : vector<8x192xf32> to vector<8x64xf32>
    %33 = arith.mulf %32, %29 : vector<8x64xf32>
    %34 = arith.addf %31, %33 : vector<8x64xf32>
    %35 = vector.extract_strided_slice %27 {offsets = [0, 128], sizes = [8, 64], strides = [1, 1]} : vector<8x192xf32> to vector<8x64xf32>
    %36 = math.tanh %34 : vector<8x64xf32>
    %37 = arith.mulf %35, %36 : vector<8x64xf32>
    %38 = vector.extract_strided_slice %37 {offsets = [0, 0], sizes = [8, 32], strides = [1, 1]} : vector<8x64xf32> to vector<8x32xf32>
    %c0_12 = arith.constant 0 : index
    %c0_13 = arith.constant 0 : index
    %39 = vector.load %arg6[%c0_12, %c0_13] : memref<144x32xf32, #tpu.memory_space<vmem>>, vector<8x32xf32>
    tpu.vector_store %arg6[%c0_12, %c0_13], %38 {strides = array<i32>} : memref<144x32xf32, #tpu.memory_space<vmem>>, vector<8x32xf32>,
    %40 = vector.extract_strided_slice %37 {offsets = [0, 32], sizes = [8, 32], strides = [1, 1]} : vector<8x64xf32> to vector<8x32xf32>
    %c96 = arith.constant 96 : index
    %c0_14 = arith.constant 0 : index
    %41 = vector.load %arg6[%c96, %c0_14] : memref<144x32xf32, #tpu.memory_space<vmem>>, vector<8x32xf32>
    tpu.vector_store %arg6[%c96, %c0_14], %40 {strides = array<i32>} : memref<144x32xf32, #tpu.memory_space<vmem>>, vector<8x32xf32>,
    %c8 = arith.constant 8 : index
    %c0_15 = arith.constant 0 : index
    %42 = vector.load %arg5[%c8, %c0_15] : memref<96x256xf32, #tpu.memory_space<vmem>>, vector<8x256xf32>
    %cst_16 = arith.constant dense<0.000000e+00> : vector<8x256xf32>
    %43 = tpu.matmul %37, %16, %cst_16 {dimension_numbers = #tpu.dot_dimension_numbers<[1], [0], [0], [1], [0, 0, 1, 1], [], []>} : vector<8x64xf32>, vector<64x256xf32>, vector<8x256xf32> -> vector<8x256xf32>
    %44 = arith.addf %42, %43 : vector<8x256xf32>
    %45 = vector.extract_strided_slice %44 {offsets = [0, 0], sizes = [8, 192], strides = [1, 1]} : vector<8x256xf32> to vector<8x192xf32>
    %46 = arith.negf %45 : vector<8x192xf32>
    %47 = math.exp %46 : vector<8x192xf32>
    %cst_17 = arith.constant 1.000000e+00 : f32
    %48 = vector.broadcast %cst_17 : f32 to vector<8x192xf32>
    %49 = arith.addf %48, %47 : vector<8x192xf32>
    %50 = arith.divf %48, %49 : vector<8x192xf32>
    %51 = vector.extract_strided_slice %44 {offsets = [0, 192], sizes = [8, 64], strides = [1, 1]} : vector<8x256xf32> to vector<8x64xf32>
    %52 = math.tanh %51 : vector<8x64xf32>
    %53 = vector.extract_strided_slice %50 {offsets = [0, 64], sizes = [8, 64], strides = [1, 1]} : vector<8x192xf32> to vector<8x64xf32>
    %54 = arith.mulf %53, %34 : vector<8x64xf32>
    %55 = vector.extract_strided_slice %50 {offsets = [0, 0], sizes = [8, 64], strides = [1, 1]} : vector<8x192xf32> to vector<8x64xf32>
    %56 = arith.mulf %55, %52 : vector<8x64xf32>
    %57 = arith.addf %54, %56 : vector<8x64xf32>
    %58 = vector.extract_strided_slice %50 {offsets = [0, 128], sizes = [8, 64], strides = [1, 1]} : vector<8x192xf32> to vector<8x64xf32>
    %59 = math.tanh %57 : vector<8x64xf32>
    %60 = arith.mulf %58, %59 : vector<8x64xf32>
    %61 = vector.extract_strided_slice %60 {offsets = [0, 0], sizes = [8, 32], strides = [1, 1]} : vector<8x64xf32> to vector<8x32xf32>
    %c8_18 = arith.constant 8 : index
    %c0_19 = arith.constant 0 : index
    %62 = vector.load %arg6[%c8_18, %c0_19] : memref<144x32xf32, #tpu.memory_space<vmem>>, vector<8x32xf32>
    tpu.vector_store %arg6[%c8_18, %c0_19], %61 {strides = array<i32>} : memref<144x32xf32, #tpu.memory_space<vmem>>, vector<8x32xf32>,
    %63 = vector.extract_strided_slice %60 {offsets = [0, 32], sizes = [8, 32], strides = [1, 1]} : vector<8x64xf32> to vector<8x32xf32>
    %c104_20 = arith.constant 104 : index
    %c0_21 = arith.constant 0 : index
    %64 = vector.load %arg6[%c104_20, %c0_21] : memref<144x32xf32, #tpu.memory_space<vmem>>, vector<8x32xf32>
    tpu.vector_store %arg6[%c104_20, %c0_21], %63 {strides = array<i32>} : memref<144x32xf32, #tpu.memory_space<vmem>>, vector<8x32xf32>,
    %c16 = arith.constant 16 : index
    %c0_22 = arith.constant 0 : index
    %65 = vector.load %arg5[%c16, %c0_22] : memref<96x256xf32, #tpu.memory_space<vmem>>, vector<8x256xf32>
    %cst_23 = arith.constant dense<0.000000e+00> : vector<8x256xf32>
    %66 = tpu.matmul %60, %16, %cst_23 {dimension_numbers = #tpu.dot_dimension_numbers<[1], [0], [0], [1], [0, 0, 1, 1], [], []>} : vector<8x64xf32>, vector<64x256xf32>, vector<8x256xf32> -> vector<8x256xf32>
    %67 = arith.addf %65, %66 : vector<8x256xf32>
    %68 = vector.extract_strided_slice %67 {offsets = [0, 0], sizes = [8, 192], strides = [1, 1]} : vector<8x256xf32> to vector<8x192xf32>
    %69 = arith.negf %68 : vector<8x192xf32>
    %70 = math.exp %69 : vector<8x192xf32>
    %cst_24 = arith.constant 1.000000e+00 : f32
    %71 = vector.broadcast %cst_24 : f32 to vector<8x192xf32>
    %72 = arith.addf %71, %70 : vector<8x192xf32>
    %73 = arith.divf %71, %72 : vector<8x192xf32>
    %74 = vector.extract_strided_slice %67 {offsets = [0, 192], sizes = [8, 64], strides = [1, 1]} : vector<8x256xf32> to vector<8x64xf32>
    %75 = math.tanh %74 : vector<8x64xf32>
    %76 = vector.extract_strided_slice %73 {offsets = [0, 64], sizes = [8, 64], strides = [1, 1]} : vector<8x192xf32> to vector<8x64xf32>
    %77 = arith.mulf %76, %57 : vector<8x64xf32>
    %78 = vector.extract_strided_slice %73 {offsets = [0, 0], sizes = [8, 64], strides = [1, 1]} : vector<8x192xf32> to vector<8x64xf32>
    %79 = arith.mulf %78, %75 : vector<8x64xf32>
    %80 = arith.addf %77, %79 : vector<8x64xf32>
    %81 = vector.extract_strided_slice %73 {offsets = [0, 128], sizes = [8, 64], strides = [1, 1]} : vector<8x192xf32> to vector<8x64xf32>
    %82 = math.tanh %80 : vector<8x64xf32>
    %83 = arith.mulf %81, %82 : vector<8x64xf32>
    %84 = vector.extract_strided_slice %83 {offsets = [0, 0], sizes = [8, 32], strides = [1, 1]} : vector<8x64xf32> to vector<8x32xf32>
    %c16_25 = arith.constant 16 : index
    %c0_26 = arith.constant 0 : index
    %85 = vector.load %arg6[%c16_25, %c0_26] : memref<144x32xf32, #tpu.memory_space<vmem>>, vector<8x32xf32>
    tpu.vector_store %arg6[%c16_25, %c0_26], %84 {strides = array<i32>} : memref<144x32xf32, #tpu.memory_space<vmem>>, vector<8x32xf32>,
    %86 = vector.extract_strided_slice %83 {offsets = [0, 32], sizes = [8, 32], strides = [1, 1]} : vector<8x64xf32> to vector<8x32xf32>
    %c112 = arith.constant 112 : index
    %c0_27 = arith.constant 0 : index
    %87 = vector.load %arg6[%c112, %c0_27] : memref<144x32xf32, #tpu.memory_space<vmem>>, vector<8x32xf32>
    tpu.vector_store %arg6[%c112, %c0_27], %86 {strides = array<i32>} : memref<144x32xf32, #tpu.memory_space<vmem>>, vector<8x32xf32>,
    %c24 = arith.constant 24 : index
    %c0_28 = arith.constant 0 : index
    %88 = vector.load %arg5[%c24, %c0_28] : memref<96x256xf32, #tpu.memory_space<vmem>>, vector<8x256xf32>
    %cst_29 = arith.constant dense<0.000000e+00> : vector<8x256xf32>
    %89 = tpu.matmul %83, %16, %cst_29 {dimension_numbers = #tpu.dot_dimension_numbers<[1], [0], [0], [1], [0, 0, 1, 1], [], []>} : vector<8x64xf32>, vector<64x256xf32>, vector<8x256xf32> -> vector<8x256xf32>
    %90 = arith.addf %88, %89 : vector<8x256xf32>
    %91 = vector.extract_strided_slice %90 {offsets = [0, 0], sizes = [8, 192], strides = [1, 1]} : vector<8x256xf32> to vector<8x192xf32>
    %92 = arith.negf %91 : vector<8x192xf32>
    %93 = math.exp %92 : vector<8x192xf32>
    %cst_30 = arith.constant 1.000000e+00 : f32
    %94 = vector.broadcast %cst_30 : f32 to vector<8x192xf32>
    %95 = arith.addf %94, %93 : vector<8x192xf32>
    %96 = arith.divf %94, %95 : vector<8x192xf32>
    %97 = vector.extract_strided_slice %90 {offsets = [0, 192], sizes = [8, 64], strides = [1, 1]} : vector<8x256xf32> to vector<8x64xf32>
    %98 = math.tanh %97 : vector<8x64xf32>
    %99 = vector.extract_strided_slice %96 {offsets = [0, 64], sizes = [8, 64], strides = [1, 1]} : vector<8x192xf32> to vector<8x64xf32>
    %100 = arith.mulf %99, %80 : vector<8x64xf32>
    %101 = vector.extract_strided_slice %96 {offsets = [0, 0], sizes = [8, 64], strides = [1, 1]} : vector<8x192xf32> to vector<8x64xf32>
    %102 = arith.mulf %101, %98 : vector<8x64xf32>
    %103 = arith.addf %100, %102 : vector<8x64xf32>
    %104 = vector.extract_strided_slice %96 {offsets = [0, 128], sizes = [8, 64], strides = [1, 1]} : vector<8x192xf32> to vector<8x64xf32>
    %105 = math.tanh %103 : vector<8x64xf32>
    %106 = arith.mulf %104, %105 : vector<8x64xf32>
    %107 = vector.extract_strided_slice %106 {offsets = [0, 0], sizes = [8, 32], strides = [1, 1]} : vector<8x64xf32> to vector<8x32xf32>
    %c24_31 = arith.constant 24 : index
    %c0_32 = arith.constant 0 : index
    %108 = vector.load %arg6[%c24_31, %c0_32] : memref<144x32xf32, #tpu.memory_space<vmem>>, vector<8x32xf32>
    tpu.vector_store %arg6[%c24_31, %c0_32], %107 {strides = array<i32>} : memref<144x32xf32, #tpu.memory_space<vmem>>, vector<8x32xf32>,
    %109 = vector.extract_strided_slice %106 {offsets = [0, 32], sizes = [8, 32], strides = [1, 1]} : vector<8x64xf32> to vector<8x32xf32>
    %c120 = arith.constant 120 : index
    %c0_33 = arith.constant 0 : index
    %110 = vector.load %arg6[%c120, %c0_33] : memref<144x32xf32, #tpu.memory_space<vmem>>, vector<8x32xf32>
    tpu.vector_store %arg6[%c120, %c0_33], %109 {strides = array<i32>} : memref<144x32xf32, #tpu.memory_space<vmem>>, vector<8x32xf32>,
    %c32 = arith.constant 32 : index
    %c0_34 = arith.constant 0 : index
    %111 = vector.load %arg5[%c32, %c0_34] : memref<96x256xf32, #tpu.memory_space<vmem>>, vector<8x256xf32>
    %cst_35 = arith.constant dense<0.000000e+00> : vector<8x256xf32>
    %112 = tpu.matmul %106, %16, %cst_35 {dimension_numbers = #tpu.dot_dimension_numbers<[1], [0], [0], [1], [0, 0, 1, 1], [], []>} : vector<8x64xf32>, vector<64x256xf32>, vector<8x256xf32> -> vector<8x256xf32>
    %113 = arith.addf %111, %112 : vector<8x256xf32>
    %114 = vector.extract_strided_slice %113 {offsets = [0, 0], sizes = [8, 192], strides = [1, 1]} : vector<8x256xf32> to vector<8x192xf32>
    %115 = arith.negf %114 : vector<8x192xf32>
    %116 = math.exp %115 : vector<8x192xf32>
    %cst_36 = arith.constant 1.000000e+00 : f32
    %117 = vector.broadcast %cst_36 : f32 to vector<8x192xf32>
    %118 = arith.addf %117, %116 : vector<8x192xf32>
    %119 = arith.divf %117, %118 : vector<8x192xf32>
    %120 = vector.extract_strided_slice %113 {offsets = [0, 192], sizes = [8, 64], strides = [1, 1]} : vector<8x256xf32> to vector<8x64xf32>
    %121 = math.tanh %120 : vector<8x64xf32>
    %122 = vector.extract_strided_slice %119 {offsets = [0, 64], sizes = [8, 64], strides = [1, 1]} : vector<8x192xf32> to vector<8x64xf32>
    %123 = arith.mulf %122, %103 : vector<8x64xf32>
    %124 = vector.extract_strided_slice %119 {offsets = [0, 0], sizes = [8, 64], strides = [1, 1]} : vector<8x192xf32> to vector<8x64xf32>
    %125 = arith.mulf %124, %121 : vector<8x64xf32>
    %126 = arith.addf %123, %125 : vector<8x64xf32>
    %127 = vector.extract_strided_slice %119 {offsets = [0, 128], sizes = [8, 64], strides = [1, 1]} : vector<8x192xf32> to vector<8x64xf32>
    %128 = math.tanh %126 : vector<8x64xf32>
    %129 = arith.mulf %127, %128 : vector<8x64xf32>
    %130 = vector.extract_strided_slice %129 {offsets = [0, 0], sizes = [8, 32], strides = [1, 1]} : vector<8x64xf32> to vector<8x32xf32>
    %c32_37 = arith.constant 32 : index
    %c0_38 = arith.constant 0 : index
    %131 = vector.load %arg6[%c32_37, %c0_38] : memref<144x32xf32, #tpu.memory_space<vmem>>, vector<8x32xf32>
    tpu.vector_store %arg6[%c32_37, %c0_38], %130 {strides = array<i32>} : memref<144x32xf32, #tpu.memory_space<vmem>>, vector<8x32xf32>,
    %132 = vector.extract_strided_slice %129 {offsets = [0, 32], sizes = [8, 32], strides = [1, 1]} : vector<8x64xf32> to vector<8x32xf32>
    %c128 = arith.constant 128 : index
    %c0_39 = arith.constant 0 : index
    %133 = vector.load %arg6[%c128, %c0_39] : memref<144x32xf32, #tpu.memory_space<vmem>>, vector<8x32xf32>
    tpu.vector_store %arg6[%c128, %c0_39], %132 {strides = array<i32>} : memref<144x32xf32, #tpu.memory_space<vmem>>, vector<8x32xf32>,
    %c40 = arith.constant 40 : index
    %c0_40 = arith.constant 0 : index
    %134 = vector.load %arg5[%c40, %c0_40] : memref<96x256xf32, #tpu.memory_space<vmem>>, vector<8x256xf32>
    %cst_41 = arith.constant dense<0.000000e+00> : vector<8x256xf32>
    %135 = tpu.matmul %129, %16, %cst_41 {dimension_numbers = #tpu.dot_dimension_numbers<[1], [0], [0], [1], [0, 0, 1, 1], [], []>} : vector<8x64xf32>, vector<64x256xf32>, vector<8x256xf32> -> vector<8x256xf32>
    %136 = arith.addf %134, %135 : vector<8x256xf32>
    %137 = vector.extract_strided_slice %136 {offsets = [0, 0], sizes = [8, 192], strides = [1, 1]} : vector<8x256xf32> to vector<8x192xf32>
    %138 = arith.negf %137 : vector<8x192xf32>
    %139 = math.exp %138 : vector<8x192xf32>
    %cst_42 = arith.constant 1.000000e+00 : f32
    %140 = vector.broadcast %cst_42 : f32 to vector<8x192xf32>
    %141 = arith.addf %140, %139 : vector<8x192xf32>
    %142 = arith.divf %140, %141 : vector<8x192xf32>
    %143 = vector.extract_strided_slice %136 {offsets = [0, 192], sizes = [8, 64], strides = [1, 1]} : vector<8x256xf32> to vector<8x64xf32>
    %144 = math.tanh %143 : vector<8x64xf32>
    %145 = vector.extract_strided_slice %142 {offsets = [0, 64], sizes = [8, 64], strides = [1, 1]} : vector<8x192xf32> to vector<8x64xf32>
    %146 = arith.mulf %145, %126 : vector<8x64xf32>
    %147 = vector.extract_strided_slice %142 {offsets = [0, 0], sizes = [8, 64], strides = [1, 1]} : vector<8x192xf32> to vector<8x64xf32>
    %148 = arith.mulf %147, %144 : vector<8x64xf32>
    %149 = arith.addf %146, %148 : vector<8x64xf32>
    %150 = vector.extract_strided_slice %142 {offsets = [0, 128], sizes = [8, 64], strides = [1, 1]} : vector<8x192xf32> to vector<8x64xf32>
    %151 = math.tanh %149 : vector<8x64xf32>
    %152 = arith.mulf %150, %151 : vector<8x64xf32>
    %153 = vector.extract_strided_slice %152 {offsets = [0, 0], sizes = [8, 32], strides = [1, 1]} : vector<8x64xf32> to vector<8x32xf32>
    %c40_43 = arith.constant 40 : index
    %c0_44 = arith.constant 0 : index
    %154 = vector.load %arg6[%c40_43, %c0_44] : memref<144x32xf32, #tpu.memory_space<vmem>>, vector<8x32xf32>
    tpu.vector_store %arg6[%c40_43, %c0_44], %153 {strides = array<i32>} : memref<144x32xf32, #tpu.memory_space<vmem>>, vector<8x32xf32>,
    %155 = vector.extract_strided_slice %152 {offsets = [0, 32], sizes = [8, 32], strides = [1, 1]} : vector<8x64xf32> to vector<8x32xf32>
    %c136 = arith.constant 136 : index
    %c0_45 = arith.constant 0 : index
    %156 = vector.load %arg6[%c136, %c0_45] : memref<144x32xf32, #tpu.memory_space<vmem>>, vector<8x32xf32>
    tpu.vector_store %arg6[%c136, %c0_45], %155 {strides = array<i32>} : memref<144x32xf32, #tpu.memory_space<vmem>>, vector<8x32xf32>,
    %157 = vector.extract_strided_slice %152 {offsets = [0, 32], sizes = [8, 32], strides = [1, 1]} : vector<8x64xf32> to vector<8x32xf32>
    %c48 = arith.constant 48 : index
    %c0_46 = arith.constant 0 : index
    %158 = vector.load %arg5[%c48, %c0_46] : memref<96x256xf32, #tpu.memory_space<vmem>>, vector<8x256xf32>
    %cst_47 = arith.constant dense<0.000000e+00> : vector<8x256xf32>
    %159 = tpu.matmul %152, %16, %cst_47 {dimension_numbers = #tpu.dot_dimension_numbers<[1], [0], [0], [1], [0, 0, 1, 1], [], []>} : vector<8x64xf32>, vector<64x256xf32>, vector<8x256xf32> -> vector<8x256xf32>
    %160 = arith.addf %158, %159 : vector<8x256xf32>
    %161 = vector.extract_strided_slice %160 {offsets = [0, 0], sizes = [8, 192], strides = [1, 1]} : vector<8x256xf32> to vector<8x192xf32>
    %162 = arith.negf %161 : vector<8x192xf32>
    %163 = math.exp %162 : vector<8x192xf32>
    %cst_48 = arith.constant 1.000000e+00 : f32
    %164 = vector.broadcast %cst_48 : f32 to vector<8x192xf32>
    %165 = arith.addf %164, %163 : vector<8x192xf32>
    %166 = arith.divf %164, %165 : vector<8x192xf32>
    %167 = vector.extract_strided_slice %160 {offsets = [0, 192], sizes = [8, 64], strides = [1, 1]} : vector<8x256xf32> to vector<8x64xf32>
    %168 = math.tanh %167 : vector<8x64xf32>
    %169 = vector.extract_strided_slice %166 {offsets = [0, 64], sizes = [8, 64], strides = [1, 1]} : vector<8x192xf32> to vector<8x64xf32>
    %170 = arith.mulf %169, %149 : vector<8x64xf32>
    %171 = vector.extract_strided_slice %166 {offsets = [0, 0], sizes = [8, 64], strides = [1, 1]} : vector<8x192xf32> to vector<8x64xf32>
    %172 = arith.mulf %171, %168 : vector<8x64xf32>
    %173 = arith.addf %170, %172 : vector<8x64xf32>
    %174 = vector.extract_strided_slice %166 {offsets = [0, 128], sizes = [8, 64], strides = [1, 1]} : vector<8x192xf32> to vector<8x64xf32>
    %175 = math.tanh %173 : vector<8x64xf32>
    %176 = arith.mulf %174, %175 : vector<8x64xf32>
    %177 = vector.extract_strided_slice %176 {offsets = [0, 0], sizes = [8, 32], strides = [1, 1]} : vector<8x64xf32> to vector<8x32xf32>
    %c48_49 = arith.constant 48 : index
    %c0_50 = arith.constant 0 : index
    %178 = vector.load %arg6[%c48_49, %c0_50] : memref<144x32xf32, #tpu.memory_space<vmem>>, vector<8x32xf32>
    tpu.vector_store %arg6[%c48_49, %c0_50], %177 {strides = array<i32>} : memref<144x32xf32, #tpu.memory_space<vmem>>, vector<8x32xf32>,
    %c56 = arith.constant 56 : index
    %c0_51 = arith.constant 0 : index
    %179 = vector.load %arg5[%c56, %c0_51] : memref<96x256xf32, #tpu.memory_space<vmem>>, vector<8x256xf32>
    %cst_52 = arith.constant dense<0.000000e+00> : vector<8x256xf32>
    %180 = tpu.matmul %176, %16, %cst_52 {dimension_numbers = #tpu.dot_dimension_numbers<[1], [0], [0], [1], [0, 0, 1, 1], [], []>} : vector<8x64xf32>, vector<64x256xf32>, vector<8x256xf32> -> vector<8x256xf32>
    %181 = arith.addf %179, %180 : vector<8x256xf32>
    %182 = vector.extract_strided_slice %181 {offsets = [0, 0], sizes = [8, 192], strides = [1, 1]} : vector<8x256xf32> to vector<8x192xf32>
    %183 = arith.negf %182 : vector<8x192xf32>
    %184 = math.exp %183 : vector<8x192xf32>
    %cst_53 = arith.constant 1.000000e+00 : f32
    %185 = vector.broadcast %cst_53 : f32 to vector<8x192xf32>
    %186 = arith.addf %185, %184 : vector<8x192xf32>
    %187 = arith.divf %185, %186 : vector<8x192xf32>
    %188 = vector.extract_strided_slice %181 {offsets = [0, 192], sizes = [8, 64], strides = [1, 1]} : vector<8x256xf32> to vector<8x64xf32>
    %189 = math.tanh %188 : vector<8x64xf32>
    %190 = vector.extract_strided_slice %187 {offsets = [0, 64], sizes = [8, 64], strides = [1, 1]} : vector<8x192xf32> to vector<8x64xf32>
    %191 = arith.mulf %190, %173 : vector<8x64xf32>
    %192 = vector.extract_strided_slice %187 {offsets = [0, 0], sizes = [8, 64], strides = [1, 1]} : vector<8x192xf32> to vector<8x64xf32>
    %193 = arith.mulf %192, %189 : vector<8x64xf32>
    %194 = arith.addf %191, %193 : vector<8x64xf32>
    %195 = vector.extract_strided_slice %187 {offsets = [0, 128], sizes = [8, 64], strides = [1, 1]} : vector<8x192xf32> to vector<8x64xf32>
    %196 = math.tanh %194 : vector<8x64xf32>
    %197 = arith.mulf %195, %196 : vector<8x64xf32>
    %198 = vector.extract_strided_slice %197 {offsets = [0, 0], sizes = [8, 32], strides = [1, 1]} : vector<8x64xf32> to vector<8x32xf32>
    %c56_54 = arith.constant 56 : index
    %c0_55 = arith.constant 0 : index
    %199 = vector.load %arg6[%c56_54, %c0_55] : memref<144x32xf32, #tpu.memory_space<vmem>>, vector<8x32xf32>
    tpu.vector_store %arg6[%c56_54, %c0_55], %198 {strides = array<i32>} : memref<144x32xf32, #tpu.memory_space<vmem>>, vector<8x32xf32>,
    %c64 = arith.constant 64 : index
    %c0_56 = arith.constant 0 : index
    %200 = vector.load %arg5[%c64, %c0_56] : memref<96x256xf32, #tpu.memory_space<vmem>>, vector<8x256xf32>
    %cst_57 = arith.constant dense<0.000000e+00> : vector<8x256xf32>
    %201 = tpu.matmul %197, %16, %cst_57 {dimension_numbers = #tpu.dot_dimension_numbers<[1], [0], [0], [1], [0, 0, 1, 1], [], []>} : vector<8x64xf32>, vector<64x256xf32>, vector<8x256xf32> -> vector<8x256xf32>
    %202 = arith.addf %200, %201 : vector<8x256xf32>
    %203 = vector.extract_strided_slice %202 {offsets = [0, 0], sizes = [8, 192], strides = [1, 1]} : vector<8x256xf32> to vector<8x192xf32>
    %204 = arith.negf %203 : vector<8x192xf32>
    %205 = math.exp %204 : vector<8x192xf32>
    %cst_58 = arith.constant 1.000000e+00 : f32
    %206 = vector.broadcast %cst_58 : f32 to vector<8x192xf32>
    %207 = arith.addf %206, %205 : vector<8x192xf32>
    %208 = arith.divf %206, %207 : vector<8x192xf32>
    %209 = vector.extract_strided_slice %202 {offsets = [0, 192], sizes = [8, 64], strides = [1, 1]} : vector<8x256xf32> to vector<8x64xf32>
    %210 = math.tanh %209 : vector<8x64xf32>
    %211 = vector.extract_strided_slice %208 {offsets = [0, 64], sizes = [8, 64], strides = [1, 1]} : vector<8x192xf32> to vector<8x64xf32>
    %212 = arith.mulf %211, %194 : vector<8x64xf32>
    %213 = vector.extract_strided_slice %208 {offsets = [0, 0], sizes = [8, 64], strides = [1, 1]} : vector<8x192xf32> to vector<8x64xf32>
    %214 = arith.mulf %213, %210 : vector<8x64xf32>
    %215 = arith.addf %212, %214 : vector<8x64xf32>
    %216 = vector.extract_strided_slice %208 {offsets = [0, 128], sizes = [8, 64], strides = [1, 1]} : vector<8x192xf32> to vector<8x64xf32>
    %217 = math.tanh %215 : vector<8x64xf32>
    %218 = arith.mulf %216, %217 : vector<8x64xf32>
    %219 = vector.extract_strided_slice %218 {offsets = [0, 0], sizes = [8, 32], strides = [1, 1]} : vector<8x64xf32> to vector<8x32xf32>
    %c64_59 = arith.constant 64 : index
    %c0_60 = arith.constant 0 : index
    %220 = vector.load %arg6[%c64_59, %c0_60] : memref<144x32xf32, #tpu.memory_space<vmem>>, vector<8x32xf32>
    tpu.vector_store %arg6[%c64_59, %c0_60], %219 {strides = array<i32>} : memref<144x32xf32, #tpu.memory_space<vmem>>, vector<8x32xf32>,
    %c72 = arith.constant 72 : index
    %c0_61 = arith.constant 0 : index
    %221 = vector.load %arg5[%c72, %c0_61] : memref<96x256xf32, #tpu.memory_space<vmem>>, vector<8x256xf32>
    %cst_62 = arith.constant dense<0.000000e+00> : vector<8x256xf32>
    %222 = tpu.matmul %218, %16, %cst_62 {dimension_numbers = #tpu.dot_dimension_numbers<[1], [0], [0], [1], [0, 0, 1, 1], [], []>} : vector<8x64xf32>, vector<64x256xf32>, vector<8x256xf32> -> vector<8x256xf32>
    %223 = arith.addf %221, %222 : vector<8x256xf32>
    %224 = vector.extract_strided_slice %223 {offsets = [0, 0], sizes = [8, 192], strides = [1, 1]} : vector<8x256xf32> to vector<8x192xf32>
    %225 = arith.negf %224 : vector<8x192xf32>
    %226 = math.exp %225 : vector<8x192xf32>
    %cst_63 = arith.constant 1.000000e+00 : f32
    %227 = vector.broadcast %cst_63 : f32 to vector<8x192xf32>
    %228 = arith.addf %227, %226 : vector<8x192xf32>
    %229 = arith.divf %227, %228 : vector<8x192xf32>
    %230 = vector.extract_strided_slice %223 {offsets = [0, 192], sizes = [8, 64], strides = [1, 1]} : vector<8x256xf32> to vector<8x64xf32>
    %231 = math.tanh %230 : vector<8x64xf32>
    %232 = vector.extract_strided_slice %229 {offsets = [0, 64], sizes = [8, 64], strides = [1, 1]} : vector<8x192xf32> to vector<8x64xf32>
    %233 = arith.mulf %232, %215 : vector<8x64xf32>
    %234 = vector.extract_strided_slice %229 {offsets = [0, 0], sizes = [8, 64], strides = [1, 1]} : vector<8x192xf32> to vector<8x64xf32>
    %235 = arith.mulf %234, %231 : vector<8x64xf32>
    %236 = arith.addf %233, %235 : vector<8x64xf32>
    %237 = vector.extract_strided_slice %229 {offsets = [0, 128], sizes = [8, 64], strides = [1, 1]} : vector<8x192xf32> to vector<8x64xf32>
    %238 = math.tanh %236 : vector<8x64xf32>
    %239 = arith.mulf %237, %238 : vector<8x64xf32>
    %240 = vector.extract_strided_slice %239 {offsets = [0, 0], sizes = [8, 32], strides = [1, 1]} : vector<8x64xf32> to vector<8x32xf32>
    %c72_64 = arith.constant 72 : index
    %c0_65 = arith.constant 0 : index
    %241 = vector.load %arg6[%c72_64, %c0_65] : memref<144x32xf32, #tpu.memory_space<vmem>>, vector<8x32xf32>
    tpu.vector_store %arg6[%c72_64, %c0_65], %240 {strides = array<i32>} : memref<144x32xf32, #tpu.memory_space<vmem>>, vector<8x32xf32>,
    %c80 = arith.constant 80 : index
    %c0_66 = arith.constant 0 : index
    %242 = vector.load %arg5[%c80, %c0_66] : memref<96x256xf32, #tpu.memory_space<vmem>>, vector<8x256xf32>
    %cst_67 = arith.constant dense<0.000000e+00> : vector<8x256xf32>
    %243 = tpu.matmul %239, %16, %cst_67 {dimension_numbers = #tpu.dot_dimension_numbers<[1], [0], [0], [1], [0, 0, 1, 1], [], []>} : vector<8x64xf32>, vector<64x256xf32>, vector<8x256xf32> -> vector<8x256xf32>
    %244 = arith.addf %242, %243 : vector<8x256xf32>
    %245 = vector.extract_strided_slice %244 {offsets = [0, 0], sizes = [8, 192], strides = [1, 1]} : vector<8x256xf32> to vector<8x192xf32>
    %246 = arith.negf %245 : vector<8x192xf32>
    %247 = math.exp %246 : vector<8x192xf32>
    %cst_68 = arith.constant 1.000000e+00 : f32
    %248 = vector.broadcast %cst_68 : f32 to vector<8x192xf32>
    %249 = arith.addf %248, %247 : vector<8x192xf32>
    %250 = arith.divf %248, %249 : vector<8x192xf32>
    %251 = vector.extract_strided_slice %244 {offsets = [0, 192], sizes = [8, 64], strides = [1, 1]} : vector<8x256xf32> to vector<8x64xf32>
    %252 = math.tanh %251 : vector<8x64xf32>
    %253 = vector.extract_strided_slice %250 {offsets = [0, 64], sizes = [8, 64], strides = [1, 1]} : vector<8x192xf32> to vector<8x64xf32>
    %254 = arith.mulf %253, %236 : vector<8x64xf32>
    %255 = vector.extract_strided_slice %250 {offsets = [0, 0], sizes = [8, 64], strides = [1, 1]} : vector<8x192xf32> to vector<8x64xf32>
    %256 = arith.mulf %255, %252 : vector<8x64xf32>
    %257 = arith.addf %254, %256 : vector<8x64xf32>
    %258 = vector.extract_strided_slice %250 {offsets = [0, 128], sizes = [8, 64], strides = [1, 1]} : vector<8x192xf32> to vector<8x64xf32>
    %259 = math.tanh %257 : vector<8x64xf32>
    %260 = arith.mulf %258, %259 : vector<8x64xf32>
    %261 = vector.extract_strided_slice %260 {offsets = [0, 0], sizes = [8, 32], strides = [1, 1]} : vector<8x64xf32> to vector<8x32xf32>
    %c80_69 = arith.constant 80 : index
    %c0_70 = arith.constant 0 : index
    %262 = vector.load %arg6[%c80_69, %c0_70] : memref<144x32xf32, #tpu.memory_space<vmem>>, vector<8x32xf32>
    tpu.vector_store %arg6[%c80_69, %c0_70], %261 {strides = array<i32>} : memref<144x32xf32, #tpu.memory_space<vmem>>, vector<8x32xf32>,
    %c88 = arith.constant 88 : index
    %c0_71 = arith.constant 0 : index
    %263 = vector.load %arg5[%c88, %c0_71] : memref<96x256xf32, #tpu.memory_space<vmem>>, vector<8x256xf32>
    %cst_72 = arith.constant dense<0.000000e+00> : vector<8x256xf32>
    %264 = tpu.matmul %260, %16, %cst_72 {dimension_numbers = #tpu.dot_dimension_numbers<[1], [0], [0], [1], [0, 0, 1, 1], [], []>} : vector<8x64xf32>, vector<64x256xf32>, vector<8x256xf32> -> vector<8x256xf32>
    %265 = arith.addf %263, %264 : vector<8x256xf32>
    %266 = vector.extract_strided_slice %265 {offsets = [0, 0], sizes = [8, 192], strides = [1, 1]} : vector<8x256xf32> to vector<8x192xf32>
    %267 = arith.negf %266 : vector<8x192xf32>
    %268 = math.exp %267 : vector<8x192xf32>
    %cst_73 = arith.constant 1.000000e+00 : f32
    %269 = vector.broadcast %cst_73 : f32 to vector<8x192xf32>
    %270 = arith.addf %269, %268 : vector<8x192xf32>
    %271 = arith.divf %269, %270 : vector<8x192xf32>
    %272 = vector.extract_strided_slice %265 {offsets = [0, 192], sizes = [8, 64], strides = [1, 1]} : vector<8x256xf32> to vector<8x64xf32>
    %273 = math.tanh %272 : vector<8x64xf32>
    %274 = vector.extract_strided_slice %271 {offsets = [0, 64], sizes = [8, 64], strides = [1, 1]} : vector<8x192xf32> to vector<8x64xf32>
    %275 = arith.mulf %274, %257 : vector<8x64xf32>
    %276 = vector.extract_strided_slice %271 {offsets = [0, 0], sizes = [8, 64], strides = [1, 1]} : vector<8x192xf32> to vector<8x64xf32>
    %277 = arith.mulf %276, %273 : vector<8x64xf32>
    %278 = arith.addf %275, %277 : vector<8x64xf32>
    %279 = vector.extract_strided_slice %271 {offsets = [0, 128], sizes = [8, 64], strides = [1, 1]} : vector<8x192xf32> to vector<8x64xf32>
    %280 = math.tanh %278 : vector<8x64xf32>
    %281 = arith.mulf %279, %280 : vector<8x64xf32>
    %282 = vector.extract_strided_slice %281 {offsets = [0, 0], sizes = [8, 32], strides = [1, 1]} : vector<8x64xf32> to vector<8x32xf32>
    %c88_74 = arith.constant 88 : index
    %c0_75 = arith.constant 0 : index
    %283 = vector.load %arg6[%c88_74, %c0_75] : memref<144x32xf32, #tpu.memory_space<vmem>>, vector<8x32xf32>
    tpu.vector_store %arg6[%c88_74, %c0_75], %282 {strides = array<i32>} : memref<144x32xf32, #tpu.memory_space<vmem>>, vector<8x32xf32>,
    %284 = vector.extract_strided_slice %281 {offsets = [0, 0], sizes = [8, 32], strides = [1, 1]} : vector<8x64xf32> to vector<8x32xf32>
    %c0_76 = arith.constant 0 : index
    %c0_77 = arith.constant 0 : index
    %285 = vector.load %arg3[%c0_76, %c0_77] : memref<168x64xf32, #tpu.memory_space<vmem>>, vector<64x64xf32>
    %c64_78 = arith.constant 64 : index
    %c0_79 = arith.constant 0 : index
    %286 = vector.load %arg3[%c64_78, %c0_79] : memref<168x64xf32, #tpu.memory_space<vmem>>, vector<32x32xf32>
    %c96_80 = arith.constant 96 : index
    %c0_81 = arith.constant 0 : index
    %287 = vector.load %arg3[%c96_80, %c0_81] : memref<168x64xf32, #tpu.memory_space<vmem>>, vector<1x32xf32>
    %c97 = arith.constant 97 : index
    %c0_82 = arith.constant 0 : index
    %288 = vector.load %arg3[%c97, %c0_82] : memref<168x64xf32, #tpu.memory_space<vmem>>, vector<1x32xf32>
    %c98 = arith.constant 98 : index
    %c0_83 = arith.constant 0 : index
    %289 = vector.load %arg3[%c98, %c0_83] : memref<168x64xf32, #tpu.memory_space<vmem>>, vector<1x64xf32>
    %c99 = arith.constant 99 : index
    %c0_84 = arith.constant 0 : index
    %290 = vector.load %arg3[%c99, %c0_84] : memref<168x64xf32, #tpu.memory_space<vmem>>, vector<1x4xf32>
    %c100 = arith.constant 100 : index
    %c0_85 = arith.constant 0 : index
    %291 = vector.load %arg3[%c100, %c0_85] : memref<168x64xf32, #tpu.memory_space<vmem>>, vector<1x1xf32>
    %c104_86 = arith.constant 104 : index
    %c0_87 = arith.constant 0 : index
    %292 = vector.load %arg3[%c104_86, %c0_87] : memref<168x64xf32, #tpu.memory_space<vmem>>, vector<64x4xf32>
    %c0_88 = arith.constant 0 : index
    %c0_89 = arith.constant 0 : index
    %293 = vector.load %arg6[%c0_88, %c0_89] : memref<144x32xf32, #tpu.memory_space<vmem>>, vector<144x32xf32>
    %cst_90 = arith.constant dense<0.000000e+00> : vector<144x32xf32>
    %294 = tpu.matmul %293, %286, %cst_90 {dimension_numbers = #tpu.dot_dimension_numbers<[1], [0], [0], [1], [0, 0, 1, 1], [], []>} : vector<144x32xf32>, vector<32x32xf32>, vector<144x32xf32> -> vector<144x32xf32>
    %295 = vector.broadcast %287 : vector<1x32xf32> to vector<144x32xf32>
    %296 = arith.addf %294, %295 : vector<144x32xf32>
    %297 = tpu.concatenate %284, %157 in 1 : vector<8x32xf32>, vector<8x32xf32> -> vector<8x64xf32>
    %cst_91 = arith.constant dense<0.000000e+00> : vector<8x64xf32>
    %298 = tpu.matmul %297, %285, %cst_91 {dimension_numbers = #tpu.dot_dimension_numbers<[1], [0], [0], [1], [0, 0, 1, 1], [], []>} : vector<8x64xf32>, vector<64x64xf32>, vector<8x64xf32> -> vector<8x64xf32>
    %299 = vector.broadcast %289 : vector<1x64xf32> to vector<8x64xf32>
    %300 = arith.addf %298, %299 : vector<8x64xf32>
    %301 = vector.extract_strided_slice %300 {offsets = [0, 0], sizes = [8, 32], strides = [1, 1]} : vector<8x64xf32> to vector<8x32xf32>
    %302 = vector.extract_strided_slice %300 {offsets = [0, 32], sizes = [8, 32], strides = [1, 1]} : vector<8x64xf32> to vector<8x32xf32>
    %303 = tpu.concatenate %301, %302 in 0 : vector<8x32xf32>, vector<8x32xf32> -> vector<16x32xf32>
    %304 = tpu.iota {dimensions = array<i32: 0>} : vector<144x16xi32>
    %305 = tpu.iota {dimensions = array<i32: 1>} : vector<144x16xi32>
    %c7_i32 = arith.constant 7 : i32
    %306 = vector.broadcast %c7_i32 : i32 to vector<144x16xi32>
    %307 = arith.andi %304, %306 : vector<144x16xi32>
    %c96_i32 = arith.constant 96 : i32
    %308 = vector.broadcast %c96_i32 : i32 to vector<144x16xi32>
    %309 = arith.cmpi sge, %304, %308 : vector<144x16xi32>
    %310 = arith.extui %309 : vector<144x16xi1> to vector<144x16xi32>
    %c8_i32 = arith.constant 8 : i32
    %311 = vector.broadcast %c8_i32 : i32 to vector<144x16xi32>
    %312 = arith.muli %310, %311 : vector<144x16xi32>
    %313 = arith.addi %307, %312 : vector<144x16xi32>
    %314 = arith.cmpi eq, %305, %313 : vector<144x16xi32>
    %315 = arith.extui %314 : vector<144x16xi1> to vector<144x16xi32>
    %316 = arith.sitofp %315 : vector<144x16xi32> to vector<144x16xf32>
    %cst_92 = arith.constant dense<0.000000e+00> : vector<144x32xf32>
    %317 = tpu.matmul %316, %303, %cst_92 {dimension_numbers = #tpu.dot_dimension_numbers<[1], [0], [0], [1], [0, 0, 1, 1], [], []>} : vector<144x16xf32>, vector<16x32xf32>, vector<144x32xf32> -> vector<144x32xf32>
    %318 = arith.addf %296, %317 : vector<144x32xf32>
    %319 = math.tanh %318 : vector<144x32xf32>
    %320 = vector.broadcast %288 : vector<1x32xf32> to vector<144x32xf32>
    %321 = arith.mulf %319, %320 : vector<144x32xf32>
    %cst_93 = arith.constant dense<0.000000e+00> : vector<144xf32>
    %322 = vector.multi_reduction <add>, %321, %cst_93 [1] : vector<144x32xf32> to vector<144xf32>
    %323 = vector.shape_cast %322 : vector<144xf32> to vector<144x1xf32>
    %c0_94 = arith.constant 0 : index
    %c0_95 = arith.constant 0 : index
    %324 = vector.load %arg1[%c0_94, %c0_95] : memref<144x1xf32, #tpu.memory_space<vmem>>, vector<144x1xf32>
    %325 = arith.addf %323, %324 : vector<144x1xf32>
    %326 = vector.extract_strided_slice %325 {offsets = [0, 0], sizes = [96, 1], strides = [1, 1]} : vector<144x1xf32> to vector<96x1xf32>
    %327 = vector.extract_strided_slice %296 {offsets = [0, 0], sizes = [96, 32], strides = [1, 1]} : vector<144x32xf32> to vector<96x32xf32>
    %cst_96 = arith.constant dense<0xFF800000> : vector<1xf32>
    %328 = vector.multi_reduction <maximumf>, %326, %cst_96 [0] : vector<96x1xf32> to vector<1xf32>
    %329 = vector.shape_cast %328 : vector<1xf32> to vector<1x1xf32>
    %330 = vector.broadcast %329 : vector<1x1xf32> to vector<96x1xf32>
    %331 = arith.subf %326, %330 : vector<96x1xf32>
    %332 = math.exp %331 : vector<96x1xf32>
    %333 = tpu.iota {dimensions = array<i32: 1>} : vector<8x96xi32>
    %334 = tpu.iota {dimensions = array<i32: 0>} : vector<8x96xi32>
    %c7_i32_97 = arith.constant 7 : i32
    %335 = vector.broadcast %c7_i32_97 : i32 to vector<8x96xi32>
    %336 = arith.andi %333, %335 : vector<8x96xi32>
    %337 = arith.cmpi eq, %336, %334 : vector<8x96xi32>
    %338 = arith.extui %337 : vector<8x96xi1> to vector<8x96xi32>
    %339 = arith.sitofp %338 : vector<8x96xi32> to vector<8x96xf32>
    %340 = vector.broadcast %332 : vector<96x1xf32> to vector<96x32xf32>
    %341 = arith.mulf %340, %327 : vector<96x32xf32>
    %342 = tpu.concatenate %332, %341 in 1 : vector<96x1xf32>, vector<96x32xf32> -> vector<96x33xf32>
    %cst_98 = arith.constant dense<0.000000e+00> : vector<8x33xf32>
    %343 = tpu.matmul %339, %342, %cst_98 {dimension_numbers = #tpu.dot_dimension_numbers<[1], [0], [0], [1], [0, 0, 1, 1], [], []>} : vector<8x96xf32>, vector<96x33xf32>, vector<8x33xf32> -> vector<8x33xf32>
    %344 = vector.extract_strided_slice %343 {offsets = [0, 0], sizes = [8, 1], strides = [1, 1]} : vector<8x33xf32> to vector<8x1xf32>
    %cst_99 = arith.constant 1.000000e-30 : f32
    %345 = vector.broadcast %cst_99 : f32 to vector<8x1xf32>
    %346 = arith.maximumf %344, %345 : vector<8x1xf32>
    %347 = tpu.reciprocal %346 {approx = true} : vector<8x1xf32> -> vector<8x1xf32>
    %348 = vector.extract_strided_slice %343 {offsets = [0, 1], sizes = [8, 32], strides = [1, 1]} : vector<8x33xf32> to vector<8x32xf32>
    %349 = vector.broadcast %347 : vector<8x1xf32> to vector<8x32xf32>
    %350 = arith.mulf %348, %349 : vector<8x32xf32>
    %351 = vector.extract_strided_slice %325 {offsets = [96, 0], sizes = [48, 1], strides = [1, 1]} : vector<144x1xf32> to vector<48x1xf32>
    %352 = vector.extract_strided_slice %296 {offsets = [96, 0], sizes = [48, 32], strides = [1, 1]} : vector<144x32xf32> to vector<48x32xf32>
    %cst_100 = arith.constant dense<0xFF800000> : vector<1xf32>
    %353 = vector.multi_reduction <maximumf>, %351, %cst_100 [0] : vector<48x1xf32> to vector<1xf32>
    %354 = vector.shape_cast %353 : vector<1xf32> to vector<1x1xf32>
    %355 = vector.broadcast %354 : vector<1x1xf32> to vector<48x1xf32>
    %356 = arith.subf %351, %355 : vector<48x1xf32>
    %357 = math.exp %356 : vector<48x1xf32>
    %358 = tpu.iota {dimensions = array<i32: 1>} : vector<8x48xi32>
    %359 = tpu.iota {dimensions = array<i32: 0>} : vector<8x48xi32>
    %c7_i32_101 = arith.constant 7 : i32
    %360 = vector.broadcast %c7_i32_101 : i32 to vector<8x48xi32>
    %361 = arith.andi %358, %360 : vector<8x48xi32>
    %362 = arith.cmpi eq, %361, %359 : vector<8x48xi32>
    %363 = arith.extui %362 : vector<8x48xi1> to vector<8x48xi32>
    %364 = arith.sitofp %363 : vector<8x48xi32> to vector<8x48xf32>
    %365 = vector.broadcast %357 : vector<48x1xf32> to vector<48x32xf32>
    %366 = arith.mulf %365, %352 : vector<48x32xf32>
    %367 = tpu.concatenate %357, %366 in 1 : vector<48x1xf32>, vector<48x32xf32> -> vector<48x33xf32>
    %cst_102 = arith.constant dense<0.000000e+00> : vector<8x33xf32>
    %368 = tpu.matmul %364, %367, %cst_102 {dimension_numbers = #tpu.dot_dimension_numbers<[1], [0], [0], [1], [0, 0, 1, 1], [], []>} : vector<8x48xf32>, vector<48x33xf32>, vector<8x33xf32> -> vector<8x33xf32>
    %369 = vector.extract_strided_slice %368 {offsets = [0, 0], sizes = [8, 1], strides = [1, 1]} : vector<8x33xf32> to vector<8x1xf32>
    %cst_103 = arith.constant 1.000000e-30 : f32
    %370 = vector.broadcast %cst_103 : f32 to vector<8x1xf32>
    %371 = arith.maximumf %369, %370 : vector<8x1xf32>
    %372 = tpu.reciprocal %371 {approx = true} : vector<8x1xf32> -> vector<8x1xf32>
    %373 = vector.extract_strided_slice %368 {offsets = [0, 1], sizes = [8, 32], strides = [1, 1]} : vector<8x33xf32> to vector<8x32xf32>
    %374 = vector.broadcast %372 : vector<8x1xf32> to vector<8x32xf32>
    %375 = arith.mulf %373, %374 : vector<8x32xf32>
    %376 = tpu.concatenate %350, %375 in 1 : vector<8x32xf32>, vector<8x32xf32> -> vector<8x64xf32>
    %cst_104 = arith.constant dense<0.000000e+00> : vector<8x4xf32>
    %377 = tpu.matmul %376, %292, %cst_104 {dimension_numbers = #tpu.dot_dimension_numbers<[1], [0], [0], [1], [0, 0, 1, 1], [], []>} : vector<8x64xf32>, vector<64x4xf32>, vector<8x4xf32> -> vector<8x4xf32>
    %378 = vector.broadcast %290 : vector<1x4xf32> to vector<8x4xf32>
    %379 = arith.addf %377, %378 : vector<8x4xf32>
    %380 = vector.extract_strided_slice %379 {offsets = [0, 0], sizes = [8, 2], strides = [1, 1]} : vector<8x4xf32> to vector<8x2xf32>
    %381 = vector.broadcast %291 : vector<1x1xf32> to vector<8x2xf32>
    %382 = arith.mulf %381, %380 : vector<8x2xf32>
    %cst_105 = arith.constant 1.000000e+00 : f32
    %383 = vector.broadcast %cst_105 : f32 to vector<1x1xf32>
    %384 = arith.subf %383, %291 : vector<1x1xf32>
    %385 = vector.extract_strided_slice %379 {offsets = [0, 2], sizes = [8, 2], strides = [1, 1]} : vector<8x4xf32> to vector<8x2xf32>
    %386 = vector.broadcast %384 : vector<1x1xf32> to vector<8x2xf32>
    %387 = arith.mulf %386, %385 : vector<8x2xf32>
    %388 = arith.addf %382, %387 : vector<8x2xf32>
    %cst_106 = arith.constant dense<0xFF800000> : vector<8xf32>
    %389 = vector.multi_reduction <maximumf>, %388, %cst_106 [1] : vector<8x2xf32> to vector<8xf32>
    %390 = vector.shape_cast %389 : vector<8xf32> to vector<8x1xf32>
    %391 = vector.broadcast %390 : vector<8x1xf32> to vector<8x2xf32>
    %392 = arith.subf %388, %391 : vector<8x2xf32>
    %393 = math.exp %392 : vector<8x2xf32>
    %cst_107 = arith.constant dense<0.000000e+00> : vector<8xf32>
    %394 = vector.multi_reduction <add>, %393, %cst_107 [1] : vector<8x2xf32> to vector<8xf32>
    %395 = vector.shape_cast %394 : vector<8xf32> to vector<8x1xf32>
    %396 = vector.broadcast %395 : vector<8x1xf32> to vector<8x2xf32>
    %397 = arith.divf %393, %396 : vector<8x2xf32>
    %c0_108 = arith.constant 0 : index
    %c0_109 = arith.constant 0 : index
    %398 = vector.load %arg4[%c0_108, %c0_109] : memref<8x2xf32, #tpu.memory_space<vmem>>, vector<8x2xf32>
    tpu.vector_store %arg4[%c0_108, %c0_109], %397 {strides = array<i32>} : memref<8x2xf32, #tpu.memory_space<vmem>>, vector<8x2xf32>,
    return
  }
}

</mosaic_0001>

<llo_original>
// kernel: att_cls_forward.1
$region0: #{att_cls_forward.1}
  #allocation0 [shape = 'u32[]', space=smem, size = 0x4, offset = 0x4, fixed_abs, tag = 'smem constant byte address 0x4 - core index']
  #allocation1 [shape = 'u32[144,128]{1,0:T(1,128)}', space=vmem, size = 0x12000, scoped, tag = 'internal scratch']
  #allocation2 [shape = 'f32[96,256]{1,0:T(8,128)}', space=vmem, size = 0x18000, scoped, tag = 'scratch operand']
  #allocation3 [shape = 'f32[144,32]{1,0:T(8,128)}', space=vmem, size = 0x12000, scoped, tag = 'scratch operand']
  %s0 = inlined_call_operand.vmem [shape: s32[96,2], index: 0, kind: input, shape index: {}]
  %s1 = inlined_call_operand.vmem [shape: f32[144,1], index: 1, kind: input, shape index: {}]
  %s2 = inlined_call_operand.vmem [shape: f32[168,256], index: 2, kind: input, shape index: {}]
  %s3 = inlined_call_operand.vmem [shape: f32[168,64], index: 3, kind: input, shape index: {}]
  %s4 = inlined_call_operand.vmem [shape: f32[8,2], index: 4, kind: output, shape index: {}]
  %s5 = sld [smem:[#allocation0]]
  $region26: #{att_cls_forward.1} parent=0
    _
  %s7 = ssub.s32 1, %s5
  %s8 = scalar_select 0, %s7, %s5
  // Predicated region
  $region2: #{att_cls_forward.1} parent=0 // pred_check
    _
  $region3: #{att_cls_forward.1} parent=0 // pred_check_branch
    %10 = sbr.rel (0) target = $region5
  $region4: #{att_cls_forward.1} parent=0 // pred_region
    _
  $region5: #{att_cls_forward.1} parent=0 // pred_fallthru
    _
  // Predicated region
  $region6: #{att_cls_forward.1} parent=0 // pred_check
    _
  $region7: #{att_cls_forward.1} parent=0 // pred_check_branch
    %12 = sbr.rel (0) target = $region9
  $region8: #{att_cls_forward.1} parent=0 // pred_region
    _
  $region9: #{att_cls_forward.1} parent=0 // pred_fallthru
    _
  // Predicated region
  $region10: #{att_cls_forward.1} parent=0 // pred_check
    _
  $region11: #{att_cls_forward.1} parent=0 // pred_check_branch
    %14 = sbr.rel (0) target = $region13
  $region12: #{att_cls_forward.1} parent=0 // pred_region
    _
  $region13: #{att_cls_forward.1} parent=0 // pred_fallthru
    _
  // Predicated region
  $region14: #{att_cls_forward.1} parent=0 // pred_check
    _
  $region15: #{att_cls_forward.1} parent=0 // pred_check_branch
    %16 = sbr.rel (0) target = $region17
  $region16: #{att_cls_forward.1} parent=0 // pred_region
    _
  $region17: #{att_cls_forward.1} parent=0 // pred_fallthru
    _
  %v17 = vld [vmem:[%s0] sm:$0xff]
  %v18 = vld [vmem:[%s0 + $0x8] sm:$0xff]
  %v19 = vld [vmem:[%s0 + $0x10] sm:$0xff]
  %v20 = vld [vmem:[%s0 + $0x18] sm:$0xff]
  %v21 = vld [vmem:[%s0 + $0x20] sm:$0xff]
  %v22 = vld [vmem:[%s0 + $0x28] sm:$0xff]
  %v23 = vld [vmem:[%s0 + $0x30] sm:$0xff]
  %v24 = vld [vmem:[%s0 + $0x38] sm:$0xff]
  %v25 = vld [vmem:[%s0 + $0x40] sm:$0xff]
  %v26 = vld [vmem:[%s0 + $0x48] sm:$0xff]
  %v27 = vld [vmem:[%s0 + $0x50] sm:$0xff]
  %v28 = vld [vmem:[%s0 + $0x58] sm:$0xff]
  %v29 = vlaneseq
  %v30 = vand.u32 %v29, 127
  %31 = vset.pattern.permute.xlu0 0
  %32 = vperm.xlu0 %31, %v17
  %v33 = vpop.permute.xlu0 %32
  %34 = vset.pattern.permute.xlu0 0
  %35 = vperm.xlu0 %34, %v18
  %v36 = vpop.permute.xlu0 %35
  %37 = vset.pattern.permute.xlu0 0
  %38 = vperm.xlu0 %37, %v19
  %v39 = vpop.permute.xlu0 %38
  %40 = vset.pattern.permute.xlu0 0
  %41 = vperm.xlu0 %40, %v20
  %v42 = vpop.permute.xlu0 %41
  %43 = vset.pattern.permute.xlu0 0
  %44 = vperm.xlu0 %43, %v21
  %v45 = vpop.permute.xlu0 %44
  %46 = vset.pattern.permute.xlu0 0
  %47 = vperm.xlu0 %46, %v22
  %v48 = vpop.permute.xlu0 %47
  %49 = vset.pattern.permute.xlu0 0
  %50 = vperm.xlu0 %49, %v23
  %v51 = vpop.permute.xlu0 %50
  %52 = vset.pattern.permute.xlu0 0
  %53 = vperm.xlu0 %52, %v24
  %v54 = vpop.permute.xlu0 %53
  %55 = vset.pattern.permute.xlu0 0
  %56 = vperm.xlu0 %55, %v25
  %v57 = vpop.permute.xlu0 %56
  %58 = vset.pattern.permute.xlu0 0
  %59 = vperm.xlu0 %58, %v26
  %v60 = vpop.permute.xlu0 %59
  %61 = vset.pattern.permute.xlu0 0
  %62 = vperm.xlu0 %61, %v27
  %v63 = vpop.permute.xlu0 %62
  %64 = vset.pattern.permute.xlu0 0
  %65 = vperm.xlu0 %64, %v28
  %v66 = vpop.permute.xlu0 %65
  %vm67 = vcmp.eq.s32.totalorder %v33, %v30
  %vm68 = vcmp.eq.s32.totalorder %v36, %v30
  %vm69 = vcmp.eq.s32.totalorder %v39, %v30
  %vm70 = vcmp.eq.s32.totalorder %v42, %v30
  %vm71 = vcmp.eq.s32.totalorder %v45, %v30
  %vm72 = vcmp.eq.s32.totalorder %v48, %v30
  %vm73 = vcmp.eq.s32.totalorder %v51, %v30
  %vm74 = vcmp.eq.s32.totalorder %v54, %v30
  %vm75 = vcmp.eq.s32.totalorder %v57, %v30
  %vm76 = vcmp.eq.s32.totalorder %v60, %v30
  %vm77 = vcmp.eq.s32.totalorder %v63, %v30
  %vm78 = vcmp.eq.s32.totalorder %v66, %v30
  %v79 = vsel %vm67, 1, 0
  %v80 = vsel %vm68, 1, 0
  %v81 = vsel %vm69, 1, 0
  %v82 = vsel %vm70, 1, 0
  %v83 = vsel %vm71, 1, 0
  %v84 = vsel %vm72, 1, 0
  %v85 = vsel %vm73, 1, 0
  %v86 = vsel %vm74, 1, 0
  %v87 = vsel %vm75, 1, 0
  %v88 = vsel %vm76, 1, 0
  %v89 = vsel %vm77, 1, 0
  %v90 = vsel %vm78, 1, 0
  %v91 = vcvt.s32.f32 %v79
  %v92 = vcvt.s32.f32 %v80
  %v93 = vcvt.s32.f32 %v81
  %v94 = vcvt.s32.f32 %v82
  %v95 = vcvt.s32.f32 %v83
  %v96 = vcvt.s32.f32 %v84
  %v97 = vcvt.s32.f32 %v85
  %v98 = vcvt.s32.f32 %v86
  %v99 = vcvt.s32.f32 %v87
  %v100 = vcvt.s32.f32 %v88
  %v101 = vcvt.s32.f32 %v89
  %v102 = vcvt.s32.f32 %v90
  %103 = vset.pattern.permute.xlu0 1
  %104 = vperm.xlu0 %103, %v17
  %v105 = vpop.permute.xlu0 %104
  %106 = vset.pattern.permute.xlu0 1
  %107 = vperm.xlu0 %106, %v18
  %v108 = vpop.permute.xlu0 %107
  %109 = vset.pattern.permute.xlu0 1
  %110 = vperm.xlu0 %109, %v19
  %v111 = vpop.permute.xlu0 %110
  %112 = vset.pattern.permute.xlu0 1
  %113 = vperm.xlu0 %112, %v20
  %v114 = vpop.permute.xlu0 %113
  %115 = vset.pattern.permute.xlu0 1
  %116 = vperm.xlu0 %115, %v21
  %v117 = vpop.permute.xlu0 %116
  %118 = vset.pattern.permute.xlu0 1
  %119 = vperm.xlu0 %118, %v22
  %v120 = vpop.permute.xlu0 %119
  %121 = vset.pattern.permute.xlu0 1
  %122 = vperm.xlu0 %121, %v23
  %v123 = vpop.permute.xlu0 %122
  %124 = vset.pattern.permute.xlu0 1
  %125 = vperm.xlu0 %124, %v24
  %v126 = vpop.permute.xlu0 %125
  %127 = vset.pattern.permute.xlu0 1
  %128 = vperm.xlu0 %127, %v25
  %v129 = vpop.permute.xlu0 %128
  %130 = vset.pattern.permute.xlu0 1
  %131 = vperm.xlu0 %130, %v26
  %v132 = vpop.permute.xlu0 %131
  %133 = vset.pattern.permute.xlu0 1
  %134 = vperm.xlu0 %133, %v27
  %v135 = vpop.permute.xlu0 %134
  %136 = vset.pattern.permute.xlu0 1
  %137 = vperm.xlu0 %136, %v28
  %v138 = vpop.permute.xlu0 %137
  %vm139 = vcmp.eq.s32.totalorder %v105, %v30
  %vm140 = vcmp.eq.s32.totalorder %v108, %v30
  %vm141 = vcmp.eq.s32.totalorder %v111, %v30
  %vm142 = vcmp.eq.s32.totalorder %v114, %v30
  %vm143 = vcmp.eq.s32.totalorder %v117, %v30
  %vm144 = vcmp.eq.s32.totalorder %v120, %v30
  %vm145 = vcmp.eq.s32.totalorder %v123, %v30
  %vm146 = vcmp.eq.s32.totalorder %v126, %v30
  %vm147 = vcmp.eq.s32.totalorder %v129, %v30
  %vm148 = vcmp.eq.s32.totalorder %v132, %v30
  %vm149 = vcmp.eq.s32.totalorder %v135, %v30
  %vm150 = vcmp.eq.s32.totalorder %v138, %v30
  %v151 = vsel %vm139, 1, 0
  %v152 = vsel %vm140, 1, 0
  %v153 = vsel %vm141, 1, 0
  %v154 = vsel %vm142, 1, 0
  %v155 = vsel %vm143, 1, 0
  %v156 = vsel %vm144, 1, 0
  %v157 = vsel %vm145, 1, 0
  %v158 = vsel %vm146, 1, 0
  %v159 = vsel %vm147, 1, 0
  %v160 = vsel %vm148, 1, 0
  %v161 = vsel %vm149, 1, 0
  %v162 = vsel %vm150, 1, 0
  %v163 = vcvt.s32.f32 %v151
  %v164 = vcvt.s32.f32 %v152
  %v165 = vcvt.s32.f32 %v153
  %v166 = vcvt.s32.f32 %v154
  %v167 = vcvt.s32.f32 %v155
  %v168 = vcvt.s32.f32 %v156
  %v169 = vcvt.s32.f32 %v157
  %v170 = vcvt.s32.f32 %v158
  %v171 = vcvt.s32.f32 %v159
  %v172 = vcvt.s32.f32 %v160
  %v173 = vcvt.s32.f32 %v161
  %v174 = vcvt.s32.f32 %v162
  %v175 = vadd.f32 %v91, %v163
  %v176 = vadd.f32 %v92, %v164
  %v177 = vadd.f32 %v93, %v165
  %v178 = vadd.f32 %v94, %v166
  %v179 = vadd.f32 %v95, %v167
  %v180 = vadd.f32 %v96, %v168
  %v181 = vadd.f32 %v97, %v169
  %v182 = vadd.f32 %v98, %v170
  %v183 = vadd.f32 %v99, %v171
  %v184 = vadd.f32 %v100, %v172
  %v185 = vadd.f32 %v101, %v173
  %v186 = vadd.f32 %v102, %v174
  %v187 = vld [vmem:[%s2] sm:$0xff]
  %v188 = vld [vmem:[%s2 + $0x8] sm:$0xff]
  %v189 = vld [vmem:[%s2 + $0x10] sm:$0xff]
  %v190 = vld [vmem:[%s2 + $0x18] sm:$0xff]
  %v191 = vld [vmem:[%s2 + $0x20] sm:$0xff]
  %v192 = vld [vmem:[%s2 + $0x28] sm:$0xff]
  %v193 = vld [vmem:[%s2 + $0x30] sm:$0xff]
  %v194 = vld [vmem:[%s2 + $0x38] sm:$0xff]
  %v195 = vld [vmem:[%s2 + $0x40] sm:$0xff]
  %v196 = vld [vmem:[%s2 + $0x48] sm:$0xff]
  %v197 = vld [vmem:[%s2 + $0x50] sm:$0xff]
  %v198 = vld [vmem:[%s2 + $0x58] sm:$0xff]
  %v199 = vld [vmem:[%s2 + $0x60] sm:$0xff]
  %v200 = vld [vmem:[%s2 + $0x68] sm:$0xff]
  %v201 = vld [vmem:[%s2 + $0x70] sm:$0xff]
  %v202 = vld [vmem:[%s2 + $0x78] sm:$0xff]
  %v203 = vld [vmem:[%s2 + $0x80] sm:$0xff]
  %v204 = vld [vmem:[%s2 + $0x88] sm:$0xff]
  %v205 = vld [vmem:[%s2 + $0x90] sm:$0xff]
  %v206 = vld [vmem:[%s2 + $0x98] sm:$0xff]
  %v207 = vld [vmem:[%s2 + $0xa0] sm:$0xff]
  %v208 = vld [vmem:[%s2 + $0xa8] sm:$0xff]
  %v209 = vld [vmem:[%s2 + $0xb0] sm:$0xff]
  %v210 = vld [vmem:[%s2 + $0xb8] sm:$0xff]
  %v211 = vld [vmem:[%s2 + $0xc0] sm:$0xff]
  %v212 = vld [vmem:[%s2 + $0xc8] sm:$0xff]
  %vm213 = vcmask 850944
  %v215 = vsel %vm213, %v175, 0
  %v218 = vsel %vm213, %v176, 0
  %v221 = vsel %vm213, %v177, 0
  %v224 = vsel %vm213, %v178, 0
  %v227 = vsel %vm213, %v179, 0
  %v230 = vsel %vm213, %v180, 0
  %v233 = vsel %vm213, %v181, 0
  %v236 = vsel %vm213, %v182, 0
  %v239 = vsel %vm213, %v183, 0
  %v242 = vsel %vm213, %v184, 0
  %v245 = vsel %vm213, %v185, 0
  %v248 = vsel %vm213, %v186, 0
  %250 = vmatprep.subr.mxu0 %v188
  %251 = vmatpush1.msra.mxu0 %v187
  %252 = vmatprep.subr.mxu0 %v190
  %253 = vmatpush1.msra.mxu0 %v189
  %254 = vmatprep.subr.mxu0 %v192
  %255 = vmatpush1.msra.mxu0 %v191
  %256 = vmatprep.subr.mxu0 %v194
  %257 = vmatpush1.msra.mxu0 %v193
  %258 = vmatprep.subr.mxu0 %v196
  %259 = vmatpush1.msra.mxu0 %v195
  %260 = vmatprep.subr.mxu0 %v198
  %261 = vmatpush1.msra.mxu0 %v197
  %262 = vmatprep.subr.mxu0 %v200
  %263 = vmatpush1.msra.mxu0 %v199
  %264 = vmatprep.subr.mxu0 %v202
  %265 = vmatpush1.msra.mxu0 %v201
  %266 = vmatprep.subr.mxu0 %v204
  %267 = vmatpush1.msra.mxu0 %v203
  %268 = vmatprep.subr.mxu0 %v206
  %269 = vmatpush1.msra.mxu0 %v205
  %270 = vmatprep.subr.mxu0 %v208
  %271 = vmatpush1.msra.mxu0 %v207
  %272 = vmatprep.subr.mxu0 %v210
  %273 = vmatpush1.msra.mxu0 %v209
  %274 = vmatprep.subr.mxu0 %v212
  %275 = vmatpush1.msra.mxu0 %v211
  %276 = vmatprep.subr.mxu0 0.0
  %277 = vmatpush1.msra.mxu0 0.0
  %278 = vmatprep.subr.mxu0 0.0
  %279 = vmatpush1.msra.mxu0 0.0
  %280 = vmatprep.subr.mxu0 0.0
  %281 = vmatpush1.msra.mxu0 0.0
  %282 = vmatprep.subr.mxu0 0.0
  %283 = vmatpush1.msra.mxu0 0.0
  %284 = vmatprep.subr.mxu0 0.0
  %285 = vmatpush1.msra.mxu0 0.0
  %286 = vmatprep.subr.mxu0 0.0
  %287 = vmatpush1.msra.mxu0 0.0
  %288 = vmatprep.subr.mxu0 0.0
  %289 = vmatpush1.msra.mxu0 0.0
  %290 = vmatprep.subr.mxu0 0.0
  %291 = vmatpush1.msra.mxu0 0.0
  %292 = vmatprep.subr.mxu0 0.0
  %293 = vmatpush1.msra.mxu0 0.0
  %294 = vmatprep.subr.mxu0 0.0
  %295 = vmatpush1.msra.mxu0 0.0
  %296 = vmatprep.subr.mxu0 0.0
  %297 = vmatpush1.msra.mxu0 0.0
  %298 = vmatprep.subr.mxu0 0.0
  %299 = vmatpush1.msra.mxu0 0.0
  %300 = vmatprep.subr.mxu0 0.0
  %301 = vmatpush1.msra.mxu0 0.0
  %302 = vmatprep.subr.mxu0 0.0
  %303 = vmatpush1.msra.mxu0 0.0
  %304 = vmatprep.subr.mxu0 0.0
  %305 = vmatpush1.msra.mxu0 0.0
  %306 = vmatprep.subr.mxu0 0.0
  %307 = vmatpush1.msra.mxu0 0.0
  %308 = vmatprep.subr.mxu0 0.0
  %309 = vmatpush1.msra.mxu0 0.0
  %310 = vmatprep.subr.mxu0 0.0
  %311 = vmatpush1.msra.mxu0 0.0
  %312 = vmatprep.subr.mxu0 0.0
  %313 = vmatpush1.msra.mxu0 0.0
  %314 = vmatprep.mubr.f32.mxu0 0.0
  %315 = vmatmul.mubr.f32.gmra.mrb[0].mxu0 %v215
  %v316 = vpop.f32.mrb[0].mxu0
  %v317 = vadd.f32 0.0, %v316
  %v318 = vpop.f32.mrb[0].mxu0
  %v319 = vadd.f32 0.0, %v318
  %320 = vmatprep.mubr.f32.mxu0 0.0
  %321 = vmatmul.mubr.f32.gmra.mrb[0].mxu0 %v218
  %v322 = vpop.f32.mrb[0].mxu0
  %v323 = vadd.f32 0.0, %v322
  %v324 = vpop.f32.mrb[0].mxu0
  %v325 = vadd.f32 0.0, %v324
  %326 = vmatprep.mubr.f32.mxu0 0.0
  %327 = vmatmul.mubr.f32.gmra.mrb[0].mxu0 %v221
  %v328 = vpop.f32.mrb[0].mxu0
  %v329 = vadd.f32 0.0, %v328
  %v330 = vpop.f32.mrb[0].mxu0
  %v331 = vadd.f32 0.0, %v330
  %332 = vmatprep.mubr.f32.mxu0 0.0
  %333 = vmatmul.mubr.f32.gmra.mrb[0].mxu0 %v224
  %v334 = vpop.f32.mrb[0].mxu0
  %v335 = vadd.f32 0.0, %v334
  %v336 = vpop.f32.mrb[0].mxu0
  %v337 = vadd.f32 0.0, %v336
  %338 = vmatprep.mubr.f32.mxu0 0.0
  %339 = vmatmul.mubr.f32.gmra.mrb[0].mxu0 %v227
  %v340 = vpop.f32.mrb[0].mxu0
  %v341 = vadd.f32 0.0, %v340
  %v342 = vpop.f32.mrb[0].mxu0
  %v343 = vadd.f32 0.0, %v342
  %344 = vmatprep.mubr.f32.mxu0 0.0
  %345 = vmatmul.mubr.f32.gmra.mrb[0].mxu0 %v230
  %v346 = vpop.f32.mrb[0].mxu0
  %v347 = vadd.f32 0.0, %v346
  %v348 = vpop.f32.mrb[0].mxu0
  %v349 = vadd.f32 0.0, %v348
  %350 = vmatprep.mubr.f32.mxu0 0.0
  %351 = vmatmul.mubr.f32.gmra.mrb[0].mxu0 %v233
  %v352 = vpop.f32.mrb[0].mxu0
  %v353 = vadd.f32 0.0, %v352
  %v354 = vpop.f32.mrb[0].mxu0
  %v355 = vadd.f32 0.0, %v354
  %356 = vmatprep.mubr.f32.mxu0 0.0
  %357 = vmatmul.mubr.f32.gmra.mrb[0].mxu0 %v236
  %v358 = vpop.f32.mrb[0].mxu0
  %v359 = vadd.f32 0.0, %v358
  %v360 = vpop.f32.mrb[0].mxu0
  %v361 = vadd.f32 0.0, %v360
  %362 = vmatprep.mubr.f32.mxu0 0.0
  %363 = vmatmul.mubr.f32.gmra.mrb[0].mxu0 %v239
  %v364 = vpop.f32.mrb[0].mxu0
  %v365 = vadd.f32 0.0, %v364
  %v366 = vpop.f32.mrb[0].mxu0
  %v367 = vadd.f32 0.0, %v366
  %368 = vmatprep.mubr.f32.mxu0 0.0
  %369 = vmatmul.mubr.f32.gmra.mrb[0].mxu0 %v242
  %v370 = vpop.f32.mrb[0].mxu0
  %v371 = vadd.f32 0.0, %v370
  %v372 = vpop.f32.mrb[0].mxu0
  %v373 = vadd.f32 0.0, %v372
  %374 = vmatprep.mubr.f32.mxu0 0.0
  %375 = vmatmul.mubr.f32.gmra.mrb[0].mxu0 %v245
  %v376 = vpop.f32.mrb[0].mxu0
  %v377 = vadd.f32 0.0, %v376
  %v378 = vpop.f32.mrb[0].mxu0
  %v379 = vadd.f32 0.0, %v378
  %380 = vmatprep.mubr.f32.mxu0 0.0
  %381 = vmatmul.mubr.f32.gmra.mrb[0].mxu0 %v248
  %v382 = vpop.f32.mrb[0].mxu0
  %v383 = vadd.f32 0.0, %v382
  %v384 = vpop.f32.mrb[0].mxu0
  %v385 = vadd.f32 0.0, %v384
  %386 = vdwg.mxu0
  %387 = vst [vmem:[#allocation2] sm:$0xff] %v317
  %388 = vst [vmem:[#allocation2 + $0x8] sm:$0xff] %v319
  %389 = vst [vmem:[#allocation2 + $0x10] sm:$0xff] %v323
  %390 = vst [vmem:[#allocation2 + $0x18] sm:$0xff] %v325
  %391 = vst [vmem:[#allocation2 + $0x20] sm:$0xff] %v329
  %392 = vst [vmem:[#allocation2 + $0x28] sm:$0xff] %v331
  %393 = vst [vmem:[#allocation2 + $0x30] sm:$0xff] %v335
  %394 = vst [vmem:[#allocation2 + $0x38] sm:$0xff] %v337
  %395 = vst [vmem:[#allocation2 + $0x40] sm:$0xff] %v341
  %396 = vst [vmem:[#allocation2 + $0x48] sm:$0xff] %v343
  %397 = vst [vmem:[#allocation2 + $0x50] sm:$0xff] %v347
  %398 = vst [vmem:[#allocation2 + $0x58] sm:$0xff] %v349
  %399 = vst [vmem:[#allocation2 + $0x60] sm:$0xff] %v353
  %400 = vst [vmem:[#allocation2 + $0x68] sm:$0xff] %v355
  %401 = vst [vmem:[#allocation2 + $0x70] sm:$0xff] %v359
  %402 = vst [vmem:[#allocation2 + $0x78] sm:$0xff] %v361
  %403 = vst [vmem:[#allocation2 + $0x80] sm:$0xff] %v365
  %404 = vst [vmem:[#allocation2 + $0x88] sm:$0xff] %v367
  %405 = vst [vmem:[#allocation2 + $0x90] sm:$0xff] %v371
  %406 = vst [vmem:[#allocation2 + $0x98] sm:$0xff] %v373
  %407 = vst [vmem:[#allocation2 + $0xa0] sm:$0xff] %v377
  %408 = vst [vmem:[#allocation2 + $0xa8] sm:$0xff] %v379
  %409 = vst [vmem:[#allocation2 + $0xb0] sm:$0xff] %v383
  %410 = vst [vmem:[#allocation2 + $0xb8] sm:$0xff] %v385
  %v411 = vld [vmem:[%s2 + $0xd0] sm:$0xff]
  %v412 = vld [vmem:[%s2 + $0xd8] sm:$0xff]
  %v413 = vld [vmem:[%s2 + $0xe0] sm:$0xff]
  %v414 = vld [vmem:[%s2 + $0xe8] sm:$0xff]
  %v415 = vld [vmem:[%s2 + $0xf0] sm:$0xff]
  %v416 = vld [vmem:[%s2 + $0xf8] sm:$0xff]
  %v417 = vld [vmem:[%s2 + $0x100] sm:$0xff]
  %v418 = vld [vmem:[%s2 + $0x108] sm:$0xff]
  %v419 = vld [vmem:[%s2 + $0x110] sm:$0xff]
  %v420 = vld [vmem:[%s2 + $0x118] sm:$0xff]
  %v421 = vld [vmem:[%s2 + $0x120] sm:$0xff]
  %v422 = vld [vmem:[%s2 + $0x128] sm:$0xff]
  %v423 = vld [vmem:[%s2 + $0x130] sm:$0xff]
  %v424 = vld [vmem:[%s2 + $0x138] sm:$0xff]
  %v425 = vld [vmem:[%s2 + $0x140] sm:$0xff]
  %v426 = vld [vmem:[%s2 + $0x148] sm:$0xff]
  %v427 = vld [vmem:[#allocation2] sm:$0xff]
  %v428 = vld [vmem:[#allocation2 + $0x8] sm:$0xff]
  %vm429 = vcmask 523264
  %v431 = vsel %vm429, 0.0, 0
  %433 = vmatprep.subr.mxu0 %v412
  %434 = vmatpush1.msra.mxu0 %v411
  %435 = vmatprep.subr.mxu0 %v414
  %436 = vmatpush1.msra.mxu0 %v413
  %437 = vmatprep.subr.mxu0 %v416
  %438 = vmatpush1.msra.mxu0 %v415
  %439 = vmatprep.subr.mxu0 %v418
  %440 = vmatpush1.msra.mxu0 %v417
  %441 = vmatprep.subr.mxu0 %v420
  %442 = vmatpush1.msra.mxu0 %v419
  %443 = vmatprep.subr.mxu0 %v422
  %444 = vmatpush1.msra.mxu0 %v421
  %445 = vmatprep.subr.mxu0 %v424
  %446 = vmatpush1.msra.mxu0 %v423
  %447 = vmatprep.subr.mxu0 %v426
  %448 = vmatpush1.msra.mxu0 %v425
  %449 = vmatprep.subr.mxu0 0.0
  %450 = vmatpush1.msra.mxu0 0.0
  %451 = vmatprep.subr.mxu0 0.0
  %452 = vmatpush1.msra.mxu0 0.0
  %453 = vmatprep.subr.mxu0 0.0
  %454 = vmatpush1.msra.mxu0 0.0
  %455 = vmatprep.subr.mxu0 0.0
  %456 = vmatpush1.msra.mxu0 0.0
  %457 = vmatprep.subr.mxu0 0.0
  %458 = vmatpush1.msra.mxu0 0.0
  %459 = vmatprep.subr.mxu0 0.0
  %460 = vmatpush1.msra.mxu0 0.0
  %461 = vmatprep.subr.mxu0 0.0
  %462 = vmatpush1.msra.mxu0 0.0
  %463 = vmatprep.subr.mxu0 0.0
  %464 = vmatpush1.msra.mxu0 0.0
  %465 = vmatprep.subr.mxu0 0.0
  %466 = vmatpush1.msra.mxu0 0.0
  %467 = vmatprep.subr.mxu0 0.0
  %468 = vmatpush1.msra.mxu0 0.0
  %469 = vmatprep.subr.mxu0 0.0
  %470 = vmatpush1.msra.mxu0 0.0
  %471 = vmatprep.subr.mxu0 0.0
  %472 = vmatpush1.msra.mxu0 0.0
  %473 = vmatprep.subr.mxu0 0.0
  %474 = vmatpush1.msra.mxu0 0.0
  %475 = vmatprep.subr.mxu0 0.0
  %476 = vmatpush1.msra.mxu0 0.0
  %477 = vmatprep.subr.mxu0 0.0
  %478 = vmatpush1.msra.mxu0 0.0
  %479 = vmatprep.subr.mxu0 0.0
  %480 = vmatpush1.msra.mxu0 0.0
  %481 = vmatprep.subr.mxu0 0.0
  %482 = vmatpush1.msra.mxu0 0.0
  %483 = vmatprep.subr.mxu0 0.0
  %484 = vmatpush1.msra.mxu0 0.0
  %485 = vmatprep.subr.mxu0 0.0
  %486 = vmatpush1.msra.mxu0 0.0
  %487 = vmatprep.subr.mxu0 0.0
  %488 = vmatpush1.msra.mxu0 0.0
  %489 = vmatprep.subr.mxu0 0.0
  %490 = vmatpush1.msra.mxu0 0.0
  %491 = vmatprep.subr.mxu0 0.0
  %492 = vmatpush1.msra.mxu0 0.0
  %493 = vmatprep.subr.mxu0 0.0
  %494 = vmatpush1.msra.mxu0 0.0
  %495 = vmatprep.subr.mxu0 0.0
  %496 = vmatpush1.msra.mxu0 0.0
  %497 = vmatprep.mubr.f32.mxu0 0.0
  %498 = vmatmul.mubr.f32.gmra.mrb[0].mxu0 %v431
  %v499 = vpop.f32.mrb[0].mxu0
  %v500 = vadd.f32 0.0, %v499
  %v501 = vpop.f32.mrb[0].mxu0
  %v502 = vadd.f32 0.0, %v501
  %503 = vdwg.mxu0
  %v504 = vadd.f32 %v427, %v500
  %v505 = vadd.f32 %v428, %v502
  %v506 = vxor.u32 %v504, 2147483648
  %v507 = vxor.u32 %v505, 2147483648
  %v508 = vmul.f32 %v506, 1.442695
  %v509 = vpow.pop %v508
  %v510 = vmul.f32 %v507, 1.442695
  %v511 = vpow.pop %v510
  %v512 = vadd.f32 %v509, 1.0
  %v513 = vadd.f32 %v511, 1.0
  %v514 = vrcp.pop %v512
  %v515 = vmul.f32 1.0, %v514
  %v516 = vrcp.pop %v513
  %v517 = vmul.f32 1.0, %v516
  %v518 = vtanh.pop %v505
  %v519 = vmul.f32 %v515, 0.0
  %521 = vrot.lane.b32.xlu0 %v518, 64
  %v522 = vpop.permute.xlu0 %521
  %v524 = vmul.f32 %v515, %v522
  %526 = vrot.lane.b32.xlu0 %v524, 64
  %v527 = vpop.permute.xlu0 %526
  %v529 = vadd.f32 %v519, %v527
  %v530 = vtanh.pop %v529
  %532 = vrot.lane.b32.xlu0 %v530, 64
  %v533 = vpop.permute.xlu0 %532
  %v535 = vmul.f32 %v517, %v533
  %vm536 = vcmask 261120
  %537 = vst.msk [vmem:[#allocation3] sm:$0xff] %vm536, %v535
  %539 = vrot.lane.b32.xlu0 %v535, 96
  %v540 = vpop.permute.xlu0 %539
  %542 = vst.msk [vmem:[#allocation3 + $0x60] sm:$0xff] %vm536, %v540
  %v543 = vld [vmem:[#allocation2 + $0x10] sm:$0xff]
  %v544 = vld [vmem:[#allocation2 + $0x18] sm:$0xff]
  %v545 = vsel %vm429, %v535, 0
  %547 = vmatprep.subr.mxu0 %v412
  %548 = vmatpush1.msra.mxu0 %v411
  %549 = vmatprep.subr.mxu0 %v414
  %550 = vmatpush1.msra.mxu0 %v413
  %551 = vmatprep.subr.mxu0 %v416
  %552 = vmatpush1.msra.mxu0 %v415
  %553 = vmatprep.subr.mxu0 %v418
  %554 = vmatpush1.msra.mxu0 %v417
  %555 = vmatprep.subr.mxu0 %v420
  %556 = vmatpush1.msra.mxu0 %v419
  %557 = vmatprep.subr.mxu0 %v422
  %558 = vmatpush1.msra.mxu0 %v421
  %559 = vmatprep.subr.mxu0 %v424
  %560 = vmatpush1.msra.mxu0 %v423
  %561 = vmatprep.subr.mxu0 %v426
  %562 = vmatpush1.msra.mxu0 %v425
  %563 = vmatprep.subr.mxu0 0.0
  %564 = vmatpush1.msra.mxu0 0.0
  %565 = vmatprep.subr.mxu0 0.0
  %566 = vmatpush1.msra.mxu0 0.0
  %567 = vmatprep.subr.mxu0 0.0
  %568 = vmatpush1.msra.mxu0 0.0
  %569 = vmatprep.subr.mxu0 0.0
  %570 = vmatpush1.msra.mxu0 0.0
  %571 = vmatprep.subr.mxu0 0.0
  %572 = vmatpush1.msra.mxu0 0.0
  %573 = vmatprep.subr.mxu0 0.0
  %574 = vmatpush1.msra.mxu0 0.0
  %575 = vmatprep.subr.mxu0 0.0
  %576 = vmatpush1.msra.mxu0 0.0
  %577 = vmatprep.subr.mxu0 0.0
  %578 = vmatpush1.msra.mxu0 0.0
  %579 = vmatprep.subr.mxu0 0.0
  %580 = vmatpush1.msra.mxu0 0.0
  %581 = vmatprep.subr.mxu0 0.0
  %582 = vmatpush1.msra.mxu0 0.0
  %583 = vmatprep.subr.mxu0 0.0
  %584 = vmatpush1.msra.mxu0 0.0
  %585 = vmatprep.subr.mxu0 0.0
  %586 = vmatpush1.msra.mxu0 0.0
  %587 = vmatprep.subr.mxu0 0.0
  %588 = vmatpush1.msra.mxu0 0.0
  %589 = vmatprep.subr.mxu0 0.0
  %590 = vmatpush1.msra.mxu0 0.0
  %591 = vmatprep.subr.mxu0 0.0
  %592 = vmatpush1.msra.mxu0 0.0
  %593 = vmatprep.subr.mxu0 0.0
  %594 = vmatpush1.msra.mxu0 0.0
  %595 = vmatprep.subr.mxu0 0.0
  %596 = vmatpush1.msra.mxu0 0.0
  %597 = vmatprep.subr.mxu0 0.0
  %598 = vmatpush1.msra.mxu0 0.0
  %599 = vmatprep.subr.mxu0 0.0
  %600 = vmatpush1.msra.mxu0 0.0
  %601 = vmatprep.subr.mxu0 0.0
  %602 = vmatpush1.msra.mxu0 0.0
  %603 = vmatprep.subr.mxu0 0.0
  %604 = vmatpush1.msra.mxu0 0.0
  %605 = vmatprep.subr.mxu0 0.0
  %606 = vmatpush1.msra.mxu0 0.0
  %607 = vmatprep.subr.mxu0 0.0
  %608 = vmatpush1.msra.mxu0 0.0
  %609 = vmatprep.subr.mxu0 0.0
  %610 = vmatpush1.msra.mxu0 0.0
  %611 = vmatprep.mubr.f32.mxu0 0.0
  %612 = vmatmul.mubr.f32.gmra.mrb[0].mxu0 %v545
  %v613 = vpop.f32.mrb[0].mxu0
  %v614 = vadd.f32 0.0, %v613
  %v615 = vpop.f32.mrb[0].mxu0
  %v616 = vadd.f32 0.0, %v615
  %617 = vdwg.mxu0
  %v618 = vadd.f32 %v543, %v614
  %v619 = vadd.f32 %v544, %v616
  %v620 = vxor.u32 %v618, 2147483648
  %v621 = vxor.u32 %v619, 2147483648
  %v622 = vmul.f32 %v620, 1.442695
  %v623 = vpow.pop %v622
  %v624 = vmul.f32 %v621, 1.442695
  %v625 = vpow.pop %v624
  %v626 = vadd.f32 %v623, 1.0
  %v627 = vadd.f32 %v625, 1.0
  %v628 = vrcp.pop %v626
  %v629 = vmul.f32 1.0, %v628
  %v630 = vrcp.pop %v627
  %v631 = vmul.f32 1.0, %v630
  %v632 = vtanh.pop %v619
  %v633 = vmul.f32 %v629, %v529
  %635 = vrot.lane.b32.xlu0 %v632, 64
  %v636 = vpop.permute.xlu0 %635
  %v638 = vmul.f32 %v629, %v636
  %640 = vrot.lane.b32.xlu0 %v638, 64
  %v641 = vpop.permute.xlu0 %640
  %v643 = vadd.f32 %v633, %v641
  %v644 = vtanh.pop %v643
  %646 = vrot.lane.b32.xlu0 %v644, 64
  %v647 = vpop.permute.xlu0 %646
  %v649 = vmul.f32 %v631, %v647
  %650 = vst.msk [vmem:[#allocation3 + $0x8] sm:$0xff] %vm536, %v649
  %652 = vrot.lane.b32.xlu0 %v649, 96
  %v653 = vpop.permute.xlu0 %652
  %655 = vst.msk [vmem:[#allocation3 + $0x68] sm:$0xff] %vm536, %v653
  %v656 = vld [vmem:[#allocation2 + $0x20] sm:$0xff]
  %v657 = vld [vmem:[#allocation2 + $0x28] sm:$0xff]
  %v658 = vsel %vm429, %v649, 0
  %660 = vmatprep.subr.mxu0 %v412
  %661 = vmatpush1.msra.mxu0 %v411
  %662 = vmatprep.subr.mxu0 %v414
  %663 = vmatpush1.msra.mxu0 %v413
  %664 = vmatprep.subr.mxu0 %v416
  %665 = vmatpush1.msra.mxu0 %v415
  %666 = vmatprep.subr.mxu0 %v418
  %667 = vmatpush1.msra.mxu0 %v417
  %668 = vmatprep.subr.mxu0 %v420
  %669 = vmatpush1.msra.mxu0 %v419
  %670 = vmatprep.subr.mxu0 %v422
  %671 = vmatpush1.msra.mxu0 %v421
  %672 = vmatprep.subr.mxu0 %v424
  %673 = vmatpush1.msra.mxu0 %v423
  %674 = vmatprep.subr.mxu0 %v426
  %675 = vmatpush1.msra.mxu0 %v425
  %676 = vmatprep.subr.mxu0 0.0
  %677 = vmatpush1.msra.mxu0 0.0
  %678 = vmatprep.subr.mxu0 0.0
  %679 = vmatpush1.msra.mxu0 0.0
  %680 = vmatprep.subr.mxu0 0.0
  %681 = vmatpush1.msra.mxu0 0.0
  %682 = vmatprep.subr.mxu0 0.0
  %683 = vmatpush1.msra.mxu0 0.0
  %684 = vmatprep.subr.mxu0 0.0
  %685 = vmatpush1.msra.mxu0 0.0
  %686 = vmatprep.subr.mxu0 0.0
  %687 = vmatpush1.msra.mxu0 0.0
  %688 = vmatprep.subr.mxu0 0.0
  %689 = vmatpush1.msra.mxu0 0.0
  %690 = vmatprep.subr.mxu0 0.0
  %691 = vmatpush1.msra.mxu0 0.0
  %692 = vmatprep.subr.mxu0 0.0
  %693 = vmatpush1.msra.mxu0 0.0
  %694 = vmatprep.subr.mxu0 0.0
  %695 = vmatpush1.msra.mxu0 0.0
  %696 = vmatprep.subr.mxu0 0.0
  %697 = vmatpush1.msra.mxu0 0.0
  %698 = vmatprep.subr.mxu0 0.0
  %699 = vmatpush1.msra.mxu0 0.0
  %700 = vmatprep.subr.mxu0 0.0
  %701 = vmatpush1.msra.mxu0 0.0
  %702 = vmatprep.subr.mxu0 0.0
  %703 = vmatpush1.msra.mxu0 0.0
  %704 = vmatprep.subr.mxu0 0.0
  %705 = vmatpush1.msra.mxu0 0.0
  %706 = vmatprep.subr.mxu0 0.0
  %707 = vmatpush1.msra.mxu0 0.0
  %708 = vmatprep.subr.mxu0 0.0
  %709 = vmatpush1.msra.mxu0 0.0
  %710 = vmatprep.subr.mxu0 0.0
  %711 = vmatpush1.msra.mxu0 0.0
  %712 = vmatprep.subr.mxu0 0.0
  %713 = vmatpush1.msra.mxu0 0.0
  %714 = vmatprep.subr.mxu0 0.0
  %715 = vmatpush1.msra.mxu0 0.0
  %716 = vmatprep.subr.mxu0 0.0
  %717 = vmatpush1.msra.mxu0 0.0
  %718 = vmatprep.subr.mxu0 0.0
  %719 = vmatpush1.msra.mxu0 0.0
  %720 = vmatprep.subr.mxu0 0.0
  %721 = vmatpush1.msra.mxu0 0.0
  %722 = vmatprep.subr.mxu0 0.0
  %723 = vmatpush1.msra.mxu0 0.0
  %724 = vmatprep.mubr.f32.mxu0 0.0
  %725 = vmatmul.mubr.f32.gmra.mrb[0].mxu0 %v658
  %v726 = vpop.f32.mrb[0].mxu0
  %v727 = vadd.f32 0.0, %v726
  %v728 = vpop.f32.mrb[0].mxu0
  %v729 = vadd.f32 0.0, %v728
  %730 = vdwg.mxu0
  %v731 = vadd.f32 %v656, %v727
  %v732 = vadd.f32 %v657, %v729
  %v733 = vxor.u32 %v731, 2147483648
  %v734 = vxor.u32 %v732, 2147483648
  %v735 = vmul.f32 %v733, 1.442695
  %v736 = vpow.pop %v735
  %v737 = vmul.f32 %v734, 1.442695
  %v738 = vpow.pop %v737
  %v739 = vadd.f32 %v736, 1.0
  %v740 = vadd.f32 %v738, 1.0
  %v741 = vrcp.pop %v739
  %v742 = vmul.f32 1.0, %v741
  %v743 = vrcp.pop %v740
  %v744 = vmul.f32 1.0, %v743
  %v745 = vtanh.pop %v732
  %v746 = vmul.f32 %v742, %v643
  %748 = vrot.lane.b32.xlu0 %v745, 64
  %v749 = vpop.permute.xlu0 %748
  %v751 = vmul.f32 %v742, %v749
  %753 = vrot.lane.b32.xlu0 %v751, 64
  %v754 = vpop.permute.xlu0 %753
  %v756 = vadd.f32 %v746, %v754
  %v757 = vtanh.pop %v756
  %759 = vrot.lane.b32.xlu0 %v757, 64
  %v760 = vpop.permute.xlu0 %759
  %v762 = vmul.f32 %v744, %v760
  %763 = vst.msk [vmem:[#allocation3 + $0x10] sm:$0xff] %vm536, %v762
  %765 = vrot.lane.b32.xlu0 %v762, 96
  %v766 = vpop.permute.xlu0 %765
  %768 = vst.msk [vmem:[#allocation3 + $0x70] sm:$0xff] %vm536, %v766
  %v769 = vld [vmem:[#allocation2 + $0x30] sm:$0xff]
  %v770 = vld [vmem:[#allocation2 + $0x38] sm:$0xff]
  %v771 = vsel %vm429, %v762, 0
  %773 = vmatprep.subr.mxu0 %v412
  %774 = vmatpush1.msra.mxu0 %v411
  %775 = vmatprep.subr.mxu0 %v414
  %776 = vmatpush1.msra.mxu0 %v413
  %777 = vmatprep.subr.mxu0 %v416
  %778 = vmatpush1.msra.mxu0 %v415
  %779 = vmatprep.subr.mxu0 %v418
  %780 = vmatpush1.msra.mxu0 %v417
  %781 = vmatprep.subr.mxu0 %v420
  %782 = vmatpush1.msra.mxu0 %v419
  %783 = vmatprep.subr.mxu0 %v422
  %784 = vmatpush1.msra.mxu0 %v421
  %785 = vmatprep.subr.mxu0 %v424
  %786 = vmatpush1.msra.mxu0 %v423
  %787 = vmatprep.subr.mxu0 %v426
  %788 = vmatpush1.msra.mxu0 %v425
  %789 = vmatprep.subr.mxu0 0.0
  %790 = vmatpush1.msra.mxu0 0.0
  %791 = vmatprep.subr.mxu0 0.0
  %792 = vmatpush1.msra.mxu0 0.0
  %793 = vmatprep.subr.mxu0 0.0
  %794 = vmatpush1.msra.mxu0 0.0
  %795 = vmatprep.subr.mxu0 0.0
  %796 = vmatpush1.msra.mxu0 0.0
  %797 = vmatprep.subr.mxu0 0.0
  %798 = vmatpush1.msra.mxu0 0.0
  %799 = vmatprep.subr.mxu0 0.0
  %800 = vmatpush1.msra.mxu0 0.0
  %801 = vmatprep.subr.mxu0 0.0
  %802 = vmatpush1.msra.mxu0 0.0
  %803 = vmatprep.subr.mxu0 0.0
  %804 = vmatpush1.msra.mxu0 0.0
  %805 = vmatprep.subr.mxu0 0.0
  %806 = vmatpush1.msra.mxu0 0.0
  %807 = vmatprep.subr.mxu0 0.0
  %808 = vmatpush1.msra.mxu0 0.0
  %809 = vmatprep.subr.mxu0 0.0
  %810 = vmatpush1.msra.mxu0 0.0
  %811 = vmatprep.subr.mxu0 0.0
  %812 = vmatpush1.msra.mxu0 0.0
  %813 = vmatprep.subr.mxu0 0.0
  %814 = vmatpush1.msra.mxu0 0.0
  %815 = vmatprep.subr.mxu0 0.0
  %816 = vmatpush1.msra.mxu0 0.0
  %817 = vmatprep.subr.mxu0 0.0
  %818 = vmatpush1.msra.mxu0 0.0
  %819 = vmatprep.subr.mxu0 0.0
  %820 = vmatpush1.msra.mxu0 0.0
  %821 = vmatprep.subr.mxu0 0.0
  %822 = vmatpush1.msra.mxu0 0.0
  %823 = vmatprep.subr.mxu0 0.0
  %824 = vmatpush1.msra.mxu0 0.0
  %825 = vmatprep.subr.mxu0 0.0
  %826 = vmatpush1.msra.mxu0 0.0
  %827 = vmatprep.subr.mxu0 0.0
  %828 = vmatpush1.msra.mxu0 0.0
  %829 = vmatprep.subr.mxu0 0.0
  %830 = vmatpush1.msra.mxu0 0.0
  %831 = vmatprep.subr.mxu0 0.0
  %832 = vmatpush1.msra.mxu0 0.0
  %833 = vmatprep.subr.mxu0 0.0
  %834 = vmatpush1.msra.mxu0 0.0
  %835 = vmatprep.subr.mxu0 0.0
  %836 = vmatpush1.msra.mxu0 0.0
  %837 = vmatprep.mubr.f32.mxu0 0.0
  %838 = vmatmul.mubr.f32.gmra.mrb[0].mxu0 %v771
  %v839 = vpop.f32.mrb[0].mxu0
  %v840 = vadd.f32 0.0, %v839
  %v841 = vpop.f32.mrb[0].mxu0
  %v842 = vadd.f32 0.0, %v841
  %843 = vdwg.mxu0
  %v844 = vadd.f32 %v769, %v840
  %v845 = vadd.f32 %v770, %v842
  %v846 = vxor.u32 %v844, 2147483648
  %v847 = vxor.u32 %v845, 2147483648
  %v848 = vmul.f32 %v846, 1.442695
  %v849 = vpow.pop %v848
  %v850 = vmul.f32 %v847, 1.442695
  %v851 = vpow.pop %v850
  %v852 = vadd.f32 %v849, 1.0
  %v853 = vadd.f32 %v851, 1.0
  %v854 = vrcp.pop %v852
  %v855 = vmul.f32 1.0, %v854
  %v856 = vrcp.pop %v853
  %v857 = vmul.f32 1.0, %v856
  %v858 = vtanh.pop %v845
  %v859 = vmul.f32 %v855, %v756
  %861 = vrot.lane.b32.xlu0 %v858, 64
  %v862 = vpop.permute.xlu0 %861
  %v864 = vmul.f32 %v855, %v862
  %866 = vrot.lane.b32.xlu0 %v864, 64
  %v867 = vpop.permute.xlu0 %866
  %v869 = vadd.f32 %v859, %v867
  %v870 = vtanh.pop %v869
  %872 = vrot.lane.b32.xlu0 %v870, 64
  %v873 = vpop.permute.xlu0 %872
  %v875 = vmul.f32 %v857, %v873
  %876 = vst.msk [vmem:[#allocation3 + $0x18] sm:$0xff] %vm536, %v875
  %878 = vrot.lane.b32.xlu0 %v875, 96
  %v879 = vpop.permute.xlu0 %878
  %881 = vst.msk [vmem:[#allocation3 + $0x78] sm:$0xff] %vm536, %v879
  %v882 = vld [vmem:[#allocation2 + $0x40] sm:$0xff]
  %v883 = vld [vmem:[#allocation2 + $0x48] sm:$0xff]
  %v884 = vsel %vm429, %v875, 0
  %886 = vmatprep.subr.mxu0 %v412
  %887 = vmatpush1.msra.mxu0 %v411
  %888 = vmatprep.subr.mxu0 %v414
  %889 = vmatpush1.msra.mxu0 %v413
  %890 = vmatprep.subr.mxu0 %v416
  %891 = vmatpush1.msra.mxu0 %v415
  %892 = vmatprep.subr.mxu0 %v418
  %893 = vmatpush1.msra.mxu0 %v417
  %894 = vmatprep.subr.mxu0 %v420
  %895 = vmatpush1.msra.mxu0 %v419
  %896 = vmatprep.subr.mxu0 %v422
  %897 = vmatpush1.msra.mxu0 %v421
  %898 = vmatprep.subr.mxu0 %v424
  %899 = vmatpush1.msra.mxu0 %v423
  %900 = vmatprep.subr.mxu0 %v426
  %901 = vmatpush1.msra.mxu0 %v425
  %902 = vmatprep.subr.mxu0 0.0
  %903 = vmatpush1.msra.mxu0 0.0
  %904 = vmatprep.subr.mxu0 0.0
  %905 = vmatpush1.msra.mxu0 0.0
  %906 = vmatprep.subr.mxu0 0.0
  %907 = vmatpush1.msra.mxu0 0.0
  %908 = vmatprep.subr.mxu0 0.0
  %909 = vmatpush1.msra.mxu0 0.0
  %910 = vmatprep.subr.mxu0 0.0
  %911 = vmatpush1.msra.mxu0 0.0
  %912 = vmatprep.subr.mxu0 0.0
  %913 = vmatpush1.msra.mxu0 0.0
  %914 = vmatprep.subr.mxu0 0.0
  %915 = vmatpush1.msra.mxu0 0.0
  %916 = vmatprep.subr.mxu0 0.0
  %917 = vmatpush1.msra.mxu0 0.0
  %918 = vmatprep.subr.mxu0 0.0
  %919 = vmatpush1.msra.mxu0 0.0
  %920 = vmatprep.subr.mxu0 0.0
  %921 = vmatpush1.msra.mxu0 0.0
  %922 = vmatprep.subr.mxu0 0.0
  %923 = vmatpush1.msra.mxu0 0.0
  %924 = vmatprep.subr.mxu0 0.0
  %925 = vmatpush1.msra.mxu0 0.0
  %926 = vmatprep.subr.mxu0 0.0
  %927 = vmatpush1.msra.mxu0 0.0
  %928 = vmatprep.subr.mxu0 0.0
  %929 = vmatpush1.msra.mxu0 0.0
  %930 = vmatprep.subr.mxu0 0.0
  %931 = vmatpush1.msra.mxu0 0.0
  %932 = vmatprep.subr.mxu0 0.0
  %933 = vmatpush1.msra.mxu0 0.0
  %934 = vmatprep.subr.mxu0 0.0
  %935 = vmatpush1.msra.mxu0 0.0
  %936 = vmatprep.subr.mxu0 0.0
  %937 = vmatpush1.msra.mxu0 0.0
  %938 = vmatprep.subr.mxu0 0.0
  %939 = vmatpush1.msra.mxu0 0.0
  %940 = vmatprep.subr.mxu0 0.0
  %941 = vmatpush1.msra.mxu0 0.0
  %942 = vmatprep.subr.mxu0 0.0
  %943 = vmatpush1.msra.mxu0 0.0
  %944 = vmatprep.subr.mxu0 0.0
  %945 = vmatpush1.msra.mxu0 0.0
  %946 = vmatprep.subr.mxu0 0.0
  %947 = vmatpush1.msra.mxu0 0.0
  %948 = vmatprep.subr.mxu0 0.0
  %949 = vmatpush1.msra.mxu0 0.0
  %950 = vmatprep.mubr.f32.mxu0 0.0
  %951 = vmatmul.mubr.f32.gmra.mrb[0].mxu0 %v884
  %v952 = vpop.f32.mrb[0].mxu0
  %v953 = vadd.f32 0.0, %v952
  %v954 = vpop.f32.mrb[0].mxu0
  %v955 = vadd.f32 0.0, %v954
  %956 = vdwg.mxu0
  %v957 = vadd.f32 %v882, %v953
  %v958 = vadd.f32 %v883, %v955
  %v959 = vxor.u32 %v957, 2147483648
  %v960 = vxor.u32 %v958, 2147483648
  %v961 = vmul.f32 %v959, 1.442695
  %v962 = vpow.pop %v961
  %v963 = vmul.f32 %v960, 1.442695
  %v964 = vpow.pop %v963
  %v965 = vadd.f32 %v962, 1.0
  %v966 = vadd.f32 %v964, 1.0
  %v967 = vrcp.pop %v965
  %v968 = vmul.f32 1.0, %v967
  %v969 = vrcp.pop %v966
  %v970 = vmul.f32 1.0, %v969
  %v971 = vtanh.pop %v958
  %v972 = vmul.f32 %v968, %v869
  %974 = vrot.lane.b32.xlu0 %v971, 64
  %v975 = vpop.permute.xlu0 %974
  %v977 = vmul.f32 %v968, %v975
  %979 = vrot.lane.b32.xlu0 %v977, 64
  %v980 = vpop.permute.xlu0 %979
  %v982 = vadd.f32 %v972, %v980
  %v983 = vtanh.pop %v982
  %985 = vrot.lane.b32.xlu0 %v983, 64
  %v986 = vpop.permute.xlu0 %985
  %v988 = vmul.f32 %v970, %v986
  %989 = vst.msk [vmem:[#allocation3 + $0x20] sm:$0xff] %vm536, %v988
  %991 = vrot.lane.b32.xlu0 %v988, 96
  %v992 = vpop.permute.xlu0 %991
  %994 = vst.msk [vmem:[#allocation3 + $0x80] sm:$0xff] %vm536, %v992
  %v995 = vld [vmem:[#allocation2 + $0x50] sm:$0xff]
  %v996 = vld [vmem:[#allocation2 + $0x58] sm:$0xff]
  %v997 = vsel %vm429, %v988, 0
  %999 = vmatprep.subr.mxu0 %v412
  %1000 = vmatpush1.msra.mxu0 %v411
  %1001 = vmatprep.subr.mxu0 %v414
  %1002 = vmatpush1.msra.mxu0 %v413
  %1003 = vmatprep.subr.mxu0 %v416
  %1004 = vmatpush1.msra.mxu0 %v415
  %1005 = vmatprep.subr.mxu0 %v418
  %1006 = vmatpush1.msra.mxu0 %v417
  %1007 = vmatprep.subr.mxu0 %v420
  %1008 = vmatpush1.msra.mxu0 %v419
  %1009 = vmatprep.subr.mxu0 %v422
  %1010 = vmatpush1.msra.mxu0 %v421
  %1011 = vmatprep.subr.mxu0 %v424
  %1012 = vmatpush1.msra.mxu0 %v423
  %1013 = vmatprep.subr.mxu0 %v426
  %1014 = vmatpush1.msra.mxu0 %v425
  %1015 = vmatprep.subr.mxu0 0.0
  %1016 = vmatpush1.msra.mxu0 0.0
  %1017 = vmatprep.subr.mxu0 0.0
  %1018 = vmatpush1.msra.mxu0 0.0
  %1019 = vmatprep.subr.mxu0 0.0
  %1020 = vmatpush1.msra.mxu0 0.0
  %1021 = vmatprep.subr.mxu0 0.0
  %1022 = vmatpush1.msra.mxu0 0.0
  %1023 = vmatprep.subr.mxu0 0.0
  %1024 = vmatpush1.msra.mxu0 0.0
  %1025 = vmatprep.subr.mxu0 0.0
  %1026 = vmatpush1.msra.mxu0 0.0
  %1027 = vmatprep.subr.mxu0 0.0
  %1028 = vmatpush1.msra.mxu0 0.0
  %1029 = vmatprep.subr.mxu0 0.0
  %1030 = vmatpush1.msra.mxu0 0.0
  %1031 = vmatprep.subr.mxu0 0.0
  %1032 = vmatpush1.msra.mxu0 0.0
  %1033 = vmatprep.subr.mxu0 0.0
  %1034 = vmatpush1.msra.mxu0 0.0
  %1035 = vmatprep.subr.mxu0 0.0
  %1036 = vmatpush1.msra.mxu0 0.0
  %1037 = vmatprep.subr.mxu0 0.0
  %1038 = vmatpush1.msra.mxu0 0.0
  %1039 = vmatprep.subr.mxu0 0.0
  %1040 = vmatpush1.msra.mxu0 0.0
  %1041 = vmatprep.subr.mxu0 0.0
  %1042 = vmatpush1.msra.mxu0 0.0
  %1043 = vmatprep.subr.mxu0 0.0
  %1044 = vmatpush1.msra.mxu0 0.0
  %1045 = vmatprep.subr.mxu0 0.0
  %1046 = vmatpush1.msra.mxu0 0.0
  %1047 = vmatprep.subr.mxu0 0.0
  %1048 = vmatpush1.msra.mxu0 0.0
  %1049 = vmatprep.subr.mxu0 0.0
  %1050 = vmatpush1.msra.mxu0 0.0
  %1051 = vmatprep.subr.mxu0 0.0
  %1052 = vmatpush1.msra.mxu0 0.0
  %1053 = vmatprep.subr.mxu0 0.0
  %1054 = vmatpush1.msra.mxu0 0.0
  %1055 = vmatprep.subr.mxu0 0.0
  %1056 = vmatpush1.msra.mxu0 0.0
  %1057 = vmatprep.subr.mxu0 0.0
  %1058 = vmatpush1.msra.mxu0 0.0
  %1059 = vmatprep.subr.mxu0 0.0
  %1060 = vmatpush1.msra.mxu0 0.0
  %1061 = vmatprep.subr.mxu0 0.0
  %1062 = vmatpush1.msra.mxu0 0.0
  %1063 = vmatprep.mubr.f32.mxu0 0.0
  %1064 = vmatmul.mubr.f32.gmra.mrb[0].mxu0 %v997
  %v1065 = vpop.f32.mrb[0].mxu0
  %v1066 = vadd.f32 0.0, %v1065
  %v1067 = vpop.f32.mrb[0].mxu0
  %v1068 = vadd.f32 0.0, %v1067
  %1069 = vdwg.mxu0
  %v1070 = vadd.f32 %v995, %v1066
  %v1071 = vadd.f32 %v996, %v1068
  %v1072 = vxor.u32 %v1070, 2147483648
  %v1073 = vxor.u32 %v1071, 2147483648
  %v1074 = vmul.f32 %v1072, 1.442695
  %v1075 = vpow.pop %v1074
  %v1076 = vmul.f32 %v1073, 1.442695
  %v1077 = vpow.pop %v1076
  %v1078 = vadd.f32 %v1075, 1.0
  %v1079 = vadd.f32 %v1077, 1.0
  %v1080 = vrcp.pop %v1078
  %v1081 = vmul.f32 1.0, %v1080
  %v1082 = vrcp.pop %v1079
  %v1083 = vmul.f32 1.0, %v1082
  %v1084 = vtanh.pop %v1071
  %v1085 = vmul.f32 %v1081, %v982
  %1087 = vrot.lane.b32.xlu0 %v1084, 64
  %v1088 = vpop.permute.xlu0 %1087
  %v1090 = vmul.f32 %v1081, %v1088
  %1092 = vrot.lane.b32.xlu0 %v1090, 64
  %v1093 = vpop.permute.xlu0 %1092
  %v1095 = vadd.f32 %v1085, %v1093
  %v1096 = vtanh.pop %v1095
  %1098 = vrot.lane.b32.xlu0 %v1096, 64
  %v1099 = vpop.permute.xlu0 %1098
  %v1101 = vmul.f32 %v1083, %v1099
  %1102 = vst.msk [vmem:[#allocation3 + $0x28] sm:$0xff] %vm536, %v1101
  %1104 = vrot.lane.b32.xlu0 %v1101, 96
  %v1105 = vpop.permute.xlu0 %1104
  %1107 = vst.msk [vmem:[#allocation3 + $0x88] sm:$0xff] %vm536, %v1105
  %v1108 = vld [vmem:[#allocation2 + $0x60] sm:$0xff]
  %v1109 = vld [vmem:[#allocation2 + $0x68] sm:$0xff]
  %v1110 = vsel %vm429, %v1101, 0
  %1112 = vmatprep.subr.mxu0 %v412
  %1113 = vmatpush1.msra.mxu0 %v411
  %1114 = vmatprep.subr.mxu0 %v414
  %1115 = vmatpush1.msra.mxu0 %v413
  %1116 = vmatprep.subr.mxu0 %v416
  %1117 = vmatpush1.msra.mxu0 %v415
  %1118 = vmatprep.subr.mxu0 %v418
  %1119 = vmatpush1.msra.mxu0 %v417
  %1120 = vmatprep.subr.mxu0 %v420
  %1121 = vmatpush1.msra.mxu0 %v419
  %1122 = vmatprep.subr.mxu0 %v422
  %1123 = vmatpush1.msra.mxu0 %v421
  %1124 = vmatprep.subr.mxu0 %v424
  %1125 = vmatpush1.msra.mxu0 %v423
  %1126 = vmatprep.subr.mxu0 %v426
  %1127 = vmatpush1.msra.mxu0 %v425
  %1128 = vmatprep.subr.mxu0 0.0
  %1129 = vmatpush1.msra.mxu0 0.0
  %1130 = vmatprep.subr.mxu0 0.0
  %1131 = vmatpush1.msra.mxu0 0.0
  %1132 = vmatprep.subr.mxu0 0.0
  %1133 = vmatpush1.msra.mxu0 0.0
  %1134 = vmatprep.subr.mxu0 0.0
  %1135 = vmatpush1.msra.mxu0 0.0
  %1136 = vmatprep.subr.mxu0 0.0
  %1137 = vmatpush1.msra.mxu0 0.0
  %1138 = vmatprep.subr.mxu0 0.0
  %1139 = vmatpush1.msra.mxu0 0.0
  %1140 = vmatprep.subr.mxu0 0.0
  %1141 = vmatpush1.msra.mxu0 0.0
  %1142 = vmatprep.subr.mxu0 0.0
  %1143 = vmatpush1.msra.mxu0 0.0
  %1144 = vmatprep.subr.mxu0 0.0
  %1145 = vmatpush1.msra.mxu0 0.0
  %1146 = vmatprep.subr.mxu0 0.0
  %1147 = vmatpush1.msra.mxu0 0.0
  %1148 = vmatprep.subr.mxu0 0.0
  %1149 = vmatpush1.msra.mxu0 0.0
  %1150 = vmatprep.subr.mxu0 0.0
  %1151 = vmatpush1.msra.mxu0 0.0
  %1152 = vmatprep.subr.mxu0 0.0
  %1153 = vmatpush1.msra.mxu0 0.0
  %1154 = vmatprep.subr.mxu0 0.0
  %1155 = vmatpush1.msra.mxu0 0.0
  %1156 = vmatprep.subr.mxu0 0.0
  %1157 = vmatpush1.msra.mxu0 0.0
  %1158 = vmatprep.subr.mxu0 0.0
  %1159 = vmatpush1.msra.mxu0 0.0
  %1160 = vmatprep.subr.mxu0 0.0
  %1161 = vmatpush1.msra.mxu0 0.0
  %1162 = vmatprep.subr.mxu0 0.0
  %1163 = vmatpush1.msra.mxu0 0.0
  %1164 = vmatprep.subr.mxu0 0.0
  %1165 = vmatpush1.msra.mxu0 0.0
  %1166 = vmatprep.subr.mxu0 0.0
  %1167 = vmatpush1.msra.mxu0 0.0
  %1168 = vmatprep.subr.mxu0 0.0
  %1169 = vmatpush1.msra.mxu0 0.0
  %1170 = vmatprep.subr.mxu0 0.0
  %1171 = vmatpush1.msra.mxu0 0.0
  %1172 = vmatprep.subr.mxu0 0.0
  %1173 = vmatpush1.msra.mxu0 0.0
  %1174 = vmatprep.subr.mxu0 0.0
  %1175 = vmatpush1.msra.mxu0 0.0
  %1176 = vmatprep.mubr.f32.mxu0 0.0
  %1177 = vmatmul.mubr.f32.gmra.mrb[0].mxu0 %v1110
  %v1178 = vpop.f32.mrb[0].mxu0
  %v1179 = vadd.f32 0.0, %v1178
  %v1180 = vpop.f32.mrb[0].mxu0
  %v1181 = vadd.f32 0.0, %v1180
  %1182 = vdwg.mxu0
  %v1183 = vadd.f32 %v1108, %v1179
  %v1184 = vadd.f32 %v1109, %v1181
  %v1185 = vxor.u32 %v1183, 2147483648
  %v1186 = vxor.u32 %v1184, 2147483648
  %v1187 = vmul.f32 %v1185, 1.442695
  %v1188 = vpow.pop %v1187
  %v1189 = vmul.f32 %v1186, 1.442695
  %v1190 = vpow.pop %v1189
  %v1191 = vadd.f32 %v1188, 1.0
  %v1192 = vadd.f32 %v1190, 1.0
  %v1193 = vrcp.pop %v1191
  %v1194 = vmul.f32 1.0, %v1193
  %v1195 = vrcp.pop %v1192
  %v1196 = vmul.f32 1.0, %v1195
  %v1197 = vtanh.pop %v1184
  %v1198 = vmul.f32 %v1194, %v1095
  %1200 = vrot.lane.b32.xlu0 %v1197, 64
  %v1201 = vpop.permute.xlu0 %1200
  %v1203 = vmul.f32 %v1194, %v1201
  %1205 = vrot.lane.b32.xlu0 %v1203, 64
  %v1206 = vpop.permute.xlu0 %1205
  %v1208 = vadd.f32 %v1198, %v1206
  %v1209 = vtanh.pop %v1208
  %1211 = vrot.lane.b32.xlu0 %v1209, 64
  %v1212 = vpop.permute.xlu0 %1211
  %v1214 = vmul.f32 %v1196, %v1212
  %1215 = vst.msk [vmem:[#allocation3 + $0x30] sm:$0xff] %vm536, %v1214
  %v1216 = vld [vmem:[#allocation2 + $0x70] sm:$0xff]
  %v1217 = vld [vmem:[#allocation2 + $0x78] sm:$0xff]
  %v1219 = vsel %vm429, %v1214, 0
  %1221 = vmatprep.subr.mxu0 %v412
  %1222 = vmatpush1.msra.mxu0 %v411
  %1223 = vmatprep.subr.mxu0 %v414
  %1224 = vmatpush1.msra.mxu0 %v413
  %1225 = vmatprep.subr.mxu0 %v416
  %1226 = vmatpush1.msra.mxu0 %v415
  %1227 = vmatprep.subr.mxu0 %v418
  %1228 = vmatpush1.msra.mxu0 %v417
  %1229 = vmatprep.subr.mxu0 %v420
  %1230 = vmatpush1.msra.mxu0 %v419
  %1231 = vmatprep.subr.mxu0 %v422
  %1232 = vmatpush1.msra.mxu0 %v421
  %1233 = vmatprep.subr.mxu0 %v424
  %1234 = vmatpush1.msra.mxu0 %v423
  %1235 = vmatprep.subr.mxu0 %v426
  %1236 = vmatpush1.msra.mxu0 %v425
  %1237 = vmatprep.subr.mxu0 0.0
  %1238 = vmatpush1.msra.mxu0 0.0
  %1239 = vmatprep.subr.mxu0 0.0
  %1240 = vmatpush1.msra.mxu0 0.0
  %1241 = vmatprep.subr.mxu0 0.0
  %1242 = vmatpush1.msra.mxu0 0.0
  %1243 = vmatprep.subr.mxu0 0.0
  %1244 = vmatpush1.msra.mxu0 0.0
  %1245 = vmatprep.subr.mxu0 0.0
  %1246 = vmatpush1.msra.mxu0 0.0
  %1247 = vmatprep.subr.mxu0 0.0
  %1248 = vmatpush1.msra.mxu0 0.0
  %1249 = vmatprep.subr.mxu0 0.0
  %1250 = vmatpush1.msra.mxu0 0.0
  %1251 = vmatprep.subr.mxu0 0.0
  %1252 = vmatpush1.msra.mxu0 0.0
  %1253 = vmatprep.subr.mxu0 0.0
  %1254 = vmatpush1.msra.mxu0 0.0
  %1255 = vmatprep.subr.mxu0 0.0
  %1256 = vmatpush1.msra.mxu0 0.0
  %1257 = vmatprep.subr.mxu0 0.0
  %1258 = vmatpush1.msra.mxu0 0.0
  %1259 = vmatprep.subr.mxu0 0.0
  %1260 = vmatpush1.msra.mxu0 0.0
  %1261 = vmatprep.subr.mxu0 0.0
  %1262 = vmatpush1.msra.mxu0 0.0
  %1263 = vmatprep.subr.mxu0 0.0
  %1264 = vmatpush1.msra.mxu0 0.0
  %1265 = vmatprep.subr.mxu0 0.0
  %1266 = vmatpush1.msra.mxu0 0.0
  %1267 = vmatprep.subr.mxu0 0.0
  %1268 = vmatpush1.msra.mxu0 0.0
  %1269 = vmatprep.subr.mxu0 0.0
  %1270 = vmatpush1.msra.mxu0 0.0
  %1271 = vmatprep.subr.mxu0 0.0
  %1272 = vmatpush1.msra.mxu0 0.0
  %1273 = vmatprep.subr.mxu0 0.0
  %1274 = vmatpush1.msra.mxu0 0.0
  %1275 = vmatprep.subr.mxu0 0.0
  %1276 = vmatpush1.msra.mxu0 0.0
  %1277 = vmatprep.subr.mxu0 0.0
  %1278 = vmatpush1.msra.mxu0 0.0
  %1279 = vmatprep.subr.mxu0 0.0
  %1280 = vmatpush1.msra.mxu0 0.0
  %1281 = vmatprep.subr.mxu0 0.0
  %1282 = vmatpush1.msra.mxu0 0.0
  %1283 = vmatprep.subr.mxu0 0.0
  %1284 = vmatpush1.msra.mxu0 0.0
  %1285 = vmatprep.mubr.f32.mxu0 0.0
  %1286 = vmatmul.mubr.f32.gmra.mrb[0].mxu0 %v1219
  %v1287 = vpop.f32.mrb[0].mxu0
  %v1288 = vadd.f32 0.0, %v1287
  %v1289 = vpop.f32.mrb[0].mxu0
  %v1290 = vadd.f32 0.0, %v1289
  %1291 = vdwg.mxu0
  %v1292 = vadd.f32 %v1216, %v1288
  %v1293 = vadd.f32 %v1217, %v1290
  %v1294 = vxor.u32 %v1292, 2147483648
  %v1295 = vxor.u32 %v1293, 2147483648
  %v1296 = vmul.f32 %v1294, 1.442695
  %v1297 = vpow.pop %v1296
  %v1298 = vmul.f32 %v1295, 1.442695
  %v1299 = vpow.pop %v1298
  %v1300 = vadd.f32 %v1297, 1.0
  %v1301 = vadd.f32 %v1299, 1.0
  %v1302 = vrcp.pop %v1300
  %v1303 = vmul.f32 1.0, %v1302
  %v1304 = vrcp.pop %v1301
  %v1305 = vmul.f32 1.0, %v1304
  %v1306 = vtanh.pop %v1293
  %v1307 = vmul.f32 %v1303, %v1208
  %1309 = vrot.lane.b32.xlu0 %v1306, 64
  %v1310 = vpop.permute.xlu0 %1309
  %v1312 = vmul.f32 %v1303, %v1310
  %1314 = vrot.lane.b32.xlu0 %v1312, 64
  %v1315 = vpop.permute.xlu0 %1314
  %v1317 = vadd.f32 %v1307, %v1315
  %v1318 = vtanh.pop %v1317
  %1320 = vrot.lane.b32.xlu0 %v1318, 64
  %v1321 = vpop.permute.xlu0 %1320
  %v1323 = vmul.f32 %v1305, %v1321
  %1324 = vst.msk [vmem:[#allocation3 + $0x38] sm:$0xff] %vm536, %v1323
  %v1325 = vld [vmem:[#allocation2 + $0x80] sm:$0xff]
  %v1326 = vld [vmem:[#allocation2 + $0x88] sm:$0xff]
  %v1328 = vsel %vm429, %v1323, 0
  %1330 = vmatprep.subr.mxu0 %v412
  %1331 = vmatpush1.msra.mxu0 %v411
  %1332 = vmatprep.subr.mxu0 %v414
  %1333 = vmatpush1.msra.mxu0 %v413
  %1334 = vmatprep.subr.mxu0 %v416
  %1335 = vmatpush1.msra.mxu0 %v415
  %1336 = vmatprep.subr.mxu0 %v418
  %1337 = vmatpush1.msra.mxu0 %v417
  %1338 = vmatprep.subr.mxu0 %v420
  %1339 = vmatpush1.msra.mxu0 %v419
  %1340 = vmatprep.subr.mxu0 %v422
  %1341 = vmatpush1.msra.mxu0 %v421
  %1342 = vmatprep.subr.mxu0 %v424
  %1343 = vmatpush1.msra.mxu0 %v423
  %1344 = vmatprep.subr.mxu0 %v426
  %1345 = vmatpush1.msra.mxu0 %v425
  %1346 = vmatprep.subr.mxu0 0.0
  %1347 = vmatpush1.msra.mxu0 0.0
  %1348 = vmatprep.subr.mxu0 0.0
  %1349 = vmatpush1.msra.mxu0 0.0
  %1350 = vmatprep.subr.mxu0 0.0
  %1351 = vmatpush1.msra.mxu0 0.0
  %1352 = vmatprep.subr.mxu0 0.0
  %1353 = vmatpush1.msra.mxu0 0.0
  %1354 = vmatprep.subr.mxu0 0.0
  %1355 = vmatpush1.msra.mxu0 0.0
  %1356 = vmatprep.subr.mxu0 0.0
  %1357 = vmatpush1.msra.mxu0 0.0
  %1358 = vmatprep.subr.mxu0 0.0
  %1359 = vmatpush1.msra.mxu0 0.0
  %1360 = vmatprep.subr.mxu0 0.0
  %1361 = vmatpush1.msra.mxu0 0.0
  %1362 = vmatprep.subr.mxu0 0.0
  %1363 = vmatpush1.msra.mxu0 0.0
  %1364 = vmatprep.subr.mxu0 0.0
  %1365 = vmatpush1.msra.mxu0 0.0
  %1366 = vmatprep.subr.mxu0 0.0
  %1367 = vmatpush1.msra.mxu0 0.0
  %1368 = vmatprep.subr.mxu0 0.0
  %1369 = vmatpush1.msra.mxu0 0.0
  %1370 = vmatprep.subr.mxu0 0.0
  %1371 = vmatpush1.msra.mxu0 0.0
  %1372 = vmatprep.subr.mxu0 0.0
  %1373 = vmatpush1.msra.mxu0 0.0
  %1374 = vmatprep.subr.mxu0 0.0
  %1375 = vmatpush1.msra.mxu0 0.0
  %1376 = vmatprep.subr.mxu0 0.0
  %1377 = vmatpush1.msra.mxu0 0.0
  %1378 = vmatprep.subr.mxu0 0.0
  %1379 = vmatpush1.msra.mxu0 0.0
  %1380 = vmatprep.subr.mxu0 0.0
  %1381 = vmatpush1.msra.mxu0 0.0
  %1382 = vmatprep.subr.mxu0 0.0
  %1383 = vmatpush1.msra.mxu0 0.0
  %1384 = vmatprep.subr.mxu0 0.0
  %1385 = vmatpush1.msra.mxu0 0.0
  %1386 = vmatprep.subr.mxu0 0.0
  %1387 = vmatpush1.msra.mxu0 0.0
  %1388 = vmatprep.subr.mxu0 0.0
  %1389 = vmatpush1.msra.mxu0 0.0
  %1390 = vmatprep.subr.mxu0 0.0
  %1391 = vmatpush1.msra.mxu0 0.0
  %1392 = vmatprep.subr.mxu0 0.0
  %1393 = vmatpush1.msra.mxu0 0.0
  %1394 = vmatprep.mubr.f32.mxu0 0.0
  %1395 = vmatmul.mubr.f32.gmra.mrb[0].mxu0 %v1328
  %v1396 = vpop.f32.mrb[0].mxu0
  %v1397 = vadd.f32 0.0, %v1396
  %v1398 = vpop.f32.mrb[0].mxu0
  %v1399 = vadd.f32 0.0, %v1398
  %1400 = vdwg.mxu0
  %v1401 = vadd.f32 %v1325, %v1397
  %v1402 = vadd.f32 %v1326, %v1399
  %v1403 = vxor.u32 %v1401, 2147483648
  %v1404 = vxor.u32 %v1402, 2147483648
  %v1405 = vmul.f32 %v1403, 1.442695
  %v1406 = vpow.pop %v1405
  %v1407 = vmul.f32 %v1404, 1.442695
  %v1408 = vpow.pop %v1407
  %v1409 = vadd.f32 %v1406, 1.0
  %v1410 = vadd.f32 %v1408, 1.0
  %v1411 = vrcp.pop %v1409
  %v1412 = vmul.f32 1.0, %v1411
  %v1413 = vrcp.pop %v1410
  %v1414 = vmul.f32 1.0, %v1413
  %v1415 = vtanh.pop %v1402
  %v1416 = vmul.f32 %v1412, %v1317
  %1418 = vrot.lane.b32.xlu0 %v1415, 64
  %v1419 = vpop.permute.xlu0 %1418
  %v1421 = vmul.f32 %v1412, %v1419
  %1423 = vrot.lane.b32.xlu0 %v1421, 64
  %v1424 = vpop.permute.xlu0 %1423
  %v1426 = vadd.f32 %v1416, %v1424
  %v1427 = vtanh.pop %v1426
  %1429 = vrot.lane.b32.xlu0 %v1427, 64
  %v1430 = vpop.permute.xlu0 %1429
  %v1432 = vmul.f32 %v1414, %v1430
  %1433 = vst.msk [vmem:[#allocation3 + $0x40] sm:$0xff] %vm536, %v1432
  %v1434 = vld [vmem:[#allocation2 + $0x90] sm:$0xff]
  %v1435 = vld [vmem:[#allocation2 + $0x98] sm:$0xff]
  %v1437 = vsel %vm429, %v1432, 0
  %1439 = vmatprep.subr.mxu0 %v412
  %1440 = vmatpush1.msra.mxu0 %v411
  %1441 = vmatprep.subr.mxu0 %v414
  %1442 = vmatpush1.msra.mxu0 %v413
  %1443 = vmatprep.subr.mxu0 %v416
  %1444 = vmatpush1.msra.mxu0 %v415
  %1445 = vmatprep.subr.mxu0 %v418
  %1446 = vmatpush1.msra.mxu0 %v417
  %1447 = vmatprep.subr.mxu0 %v420
  %1448 = vmatpush1.msra.mxu0 %v419
  %1449 = vmatprep.subr.mxu0 %v422
  %1450 = vmatpush1.msra.mxu0 %v421
  %1451 = vmatprep.subr.mxu0 %v424
  %1452 = vmatpush1.msra.mxu0 %v423
  %1453 = vmatprep.subr.mxu0 %v426
  %1454 = vmatpush1.msra.mxu0 %v425
  %1455 = vmatprep.subr.mxu0 0.0
  %1456 = vmatpush1.msra.mxu0 0.0
  %1457 = vmatprep.subr.mxu0 0.0
  %1458 = vmatpush1.msra.mxu0 0.0
  %1459 = vmatprep.subr.mxu0 0.0
  %1460 = vmatpush1.msra.mxu0 0.0
  %1461 = vmatprep.subr.mxu0 0.0
  %1462 = vmatpush1.msra.mxu0 0.0
  %1463 = vmatprep.subr.mxu0 0.0
  %1464 = vmatpush1.msra.mxu0 0.0
  %1465 = vmatprep.subr.mxu0 0.0
  %1466 = vmatpush1.msra.mxu0 0.0
  %1467 = vmatprep.subr.mxu0 0.0
  %1468 = vmatpush1.msra.mxu0 0.0
  %1469 = vmatprep.subr.mxu0 0.0
  %1470 = vmatpush1.msra.mxu0 0.0
  %1471 = vmatprep.subr.mxu0 0.0
  %1472 = vmatpush1.msra.mxu0 0.0
  %1473 = vmatprep.subr.mxu0 0.0
  %1474 = vmatpush1.msra.mxu0 0.0
  %1475 = vmatprep.subr.mxu0 0.0
  %1476 = vmatpush1.msra.mxu0 0.0
  %1477 = vmatprep.subr.mxu0 0.0
  %1478 = vmatpush1.msra.mxu0 0.0
  %1479 = vmatprep.subr.mxu0 0.0
  %1480 = vmatpush1.msra.mxu0 0.0
  %1481 = vmatprep.subr.mxu0 0.0
  %1482 = vmatpush1.msra.mxu0 0.0
  %1483 = vmatprep.subr.mxu0 0.0
  %1484 = vmatpush1.msra.mxu0 0.0
  %1485 = vmatprep.subr.mxu0 0.0
  %1486 = vmatpush1.msra.mxu0 0.0
  %1487 = vmatprep.subr.mxu0 0.0
  %1488 = vmatpush1.msra.mxu0 0.0
  %1489 = vmatprep.subr.mxu0 0.0
  %1490 = vmatpush1.msra.mxu0 0.0
  %1491 = vmatprep.subr.mxu0 0.0
  %1492 = vmatpush1.msra.mxu0 0.0
  %1493 = vmatprep.subr.mxu0 0.0
  %1494 = vmatpush1.msra.mxu0 0.0
  %1495 = vmatprep.subr.mxu0 0.0
  %1496 = vmatpush1.msra.mxu0 0.0
  %1497 = vmatprep.subr.mxu0 0.0
  %1498 = vmatpush1.msra.mxu0 0.0
  %1499 = vmatprep.subr.mxu0 0.0
  %1500 = vmatpush1.msra.mxu0 0.0
  %1501 = vmatprep.subr.mxu0 0.0
  %1502 = vmatpush1.msra.mxu0 0.0
  %1503 = vmatprep.mubr.f32.mxu0 0.0
  %1504 = vmatmul.mubr.f32.gmra.mrb[0].mxu0 %v1437
  %v1505 = vpop.f32.mrb[0].mxu0
  %v1506 = vadd.f32 0.0, %v1505
  %v1507 = vpop.f32.mrb[0].mxu0
  %v1508 = vadd.f32 0.0, %v1507
  %1509 = vdwg.mxu0
  %v1510 = vadd.f32 %v1434, %v1506
  %v1511 = vadd.f32 %v1435, %v1508
  %v1512 = vxor.u32 %v1510, 2147483648
  %v1513 = vxor.u32 %v1511, 2147483648
  %v1514 = vmul.f32 %v1512, 1.442695
  %v1515 = vpow.pop %v1514
  %v1516 = vmul.f32 %v1513, 1.442695
  %v1517 = vpow.pop %v1516
  %v1518 = vadd.f32 %v1515, 1.0
  %v1519 = vadd.f32 %v1517, 1.0
  %v1520 = vrcp.pop %v1518
  %v1521 = vmul.f32 1.0, %v1520
  %v1522 = vrcp.pop %v1519
  %v1523 = vmul.f32 1.0, %v1522
  %v1524 = vtanh.pop %v1511
  %v1525 = vmul.f32 %v1521, %v1426
  %1527 = vrot.lane.b32.xlu0 %v1524, 64
  %v1528 = vpop.permute.xlu0 %1527
  %v1530 = vmul.f32 %v1521, %v1528
  %1532 = vrot.lane.b32.xlu0 %v1530, 64
  %v1533 = vpop.permute.xlu0 %1532
  %v1535 = vadd.f32 %v1525, %v1533
  %v1536 = vtanh.pop %v1535
  %1538 = vrot.lane.b32.xlu0 %v1536, 64
  %v1539 = vpop.permute.xlu0 %1538
  %v1541 = vmul.f32 %v1523, %v1539
  %1542 = vst.msk [vmem:[#allocation3 + $0x48] sm:$0xff] %vm536, %v1541
  %v1543 = vld [vmem:[#allocation2 + $0xa0] sm:$0xff]
  %v1544 = vld [vmem:[#allocation2 + $0xa8] sm:$0xff]
  %v1546 = vsel %vm429, %v1541, 0
  %1548 = vmatprep.subr.mxu0 %v412
  %1549 = vmatpush1.msra.mxu0 %v411
  %1550 = vmatprep.subr.mxu0 %v414
  %1551 = vmatpush1.msra.mxu0 %v413
  %1552 = vmatprep.subr.mxu0 %v416
  %1553 = vmatpush1.msra.mxu0 %v415
  %1554 = vmatprep.subr.mxu0 %v418
  %1555 = vmatpush1.msra.mxu0 %v417
  %1556 = vmatprep.subr.mxu0 %v420
  %1557 = vmatpush1.msra.mxu0 %v419
  %1558 = vmatprep.subr.mxu0 %v422
  %1559 = vmatpush1.msra.mxu0 %v421
  %1560 = vmatprep.subr.mxu0 %v424
  %1561 = vmatpush1.msra.mxu0 %v423
  %1562 = vmatprep.subr.mxu0 %v426
  %1563 = vmatpush1.msra.mxu0 %v425
  %1564 = vmatprep.subr.mxu0 0.0
  %1565 = vmatpush1.msra.mxu0 0.0
  %1566 = vmatprep.subr.mxu0 0.0
  %1567 = vmatpush1.msra.mxu0 0.0
  %1568 = vmatprep.subr.mxu0 0.0
  %1569 = vmatpush1.msra.mxu0 0.0
  %1570 = vmatprep.subr.mxu0 0.0
  %1571 = vmatpush1.msra.mxu0 0.0
  %1572 = vmatprep.subr.mxu0 0.0
  %1573 = vmatpush1.msra.mxu0 0.0
  %1574 = vmatprep.subr.mxu0 0.0
  %1575 = vmatpush1.msra.mxu0 0.0
  %1576 = vmatprep.subr.mxu0 0.0
  %1577 = vmatpush1.msra.mxu0 0.0
  %1578 = vmatprep.subr.mxu0 0.0
  %1579 = vmatpush1.msra.mxu0 0.0
  %1580 = vmatprep.subr.mxu0 0.0
  %1581 = vmatpush1.msra.mxu0 0.0
  %1582 = vmatprep.subr.mxu0 0.0
  %1583 = vmatpush1.msra.mxu0 0.0
  %1584 = vmatprep.subr.mxu0 0.0
  %1585 = vmatpush1.msra.mxu0 0.0
  %1586 = vmatprep.subr.mxu0 0.0
  %1587 = vmatpush1.msra.mxu0 0.0
  %1588 = vmatprep.subr.mxu0 0.0
  %1589 = vmatpush1.msra.mxu0 0.0
  %1590 = vmatprep.subr.mxu0 0.0
  %1591 = vmatpush1.msra.mxu0 0.0
  %1592 = vmatprep.subr.mxu0 0.0
  %1593 = vmatpush1.msra.mxu0 0.0
  %1594 = vmatprep.subr.mxu0 0.0
  %1595 = vmatpush1.msra.mxu0 0.0
  %1596 = vmatprep.subr.mxu0 0.0
  %1597 = vmatpush1.msra.mxu0 0.0
  %1598 = vmatprep.subr.mxu0 0.0
  %1599 = vmatpush1.msra.mxu0 0.0
  %1600 = vmatprep.subr.mxu0 0.0
  %1601 = vmatpush1.msra.mxu0 0.0
  %1602 = vmatprep.subr.mxu0 0.0
  %1603 = vmatpush1.msra.mxu0 0.0
  %1604 = vmatprep.subr.mxu0 0.0
  %1605 = vmatpush1.msra.mxu0 0.0
  %1606 = vmatprep.subr.mxu0 0.0
  %1607 = vmatpush1.msra.mxu0 0.0
  %1608 = vmatprep.subr.mxu0 0.0
  %1609 = vmatpush1.msra.mxu0 0.0
  %1610 = vmatprep.subr.mxu0 0.0
  %1611 = vmatpush1.msra.mxu0 0.0
  %1612 = vmatprep.mubr.f32.mxu0 0.0
  %1613 = vmatmul.mubr.f32.gmra.mrb[0].mxu0 %v1546
  %v1614 = vpop.f32.mrb[0].mxu0
  %v1615 = vadd.f32 0.0, %v1614
  %v1616 = vpop.f32.mrb[0].mxu0
  %v1617 = vadd.f32 0.0, %v1616
  %1618 = vdwg.mxu0
  %v1619 = vadd.f32 %v1543, %v1615
  %v1620 = vadd.f32 %v1544, %v1617
  %v1621 = vxor.u32 %v1619, 2147483648
  %v1622 = vxor.u32 %v1620, 2147483648
  %v1623 = vmul.f32 %v1621, 1.442695
  %v1624 = vpow.pop %v1623
  %v1625 = vmul.f32 %v1622, 1.442695
  %v1626 = vpow.pop %v1625
  %v1627 = vadd.f32 %v1624, 1.0
  %v1628 = vadd.f32 %v1626, 1.0
  %v1629 = vrcp.pop %v1627
  %v1630 = vmul.f32 1.0, %v1629
  %v1631 = vrcp.pop %v1628
  %v1632 = vmul.f32 1.0, %v1631
  %v1633 = vtanh.pop %v1620
  %v1634 = vmul.f32 %v1630, %v1535
  %1636 = vrot.lane.b32.xlu0 %v1633, 64
  %v1637 = vpop.permute.xlu0 %1636
  %v1639 = vmul.f32 %v1630, %v1637
  %1641 = vrot.lane.b32.xlu0 %v1639, 64
  %v1642 = vpop.permute.xlu0 %1641
  %v1644 = vadd.f32 %v1634, %v1642
  %v1645 = vtanh.pop %v1644
  %1647 = vrot.lane.b32.xlu0 %v1645, 64
  %v1648 = vpop.permute.xlu0 %1647
  %v1650 = vmul.f32 %v1632, %v1648
  %1651 = vst.msk [vmem:[#allocation3 + $0x50] sm:$0xff] %vm536, %v1650
  %v1652 = vld [vmem:[#allocation2 + $0xb0] sm:$0xff]
  %v1653 = vld [vmem:[#allocation2 + $0xb8] sm:$0xff]
  %v1655 = vsel %vm429, %v1650, 0
  %1657 = vmatprep.subr.mxu0 %v412
  %1658 = vmatpush1.msra.mxu0 %v411
  %1659 = vmatprep.subr.mxu0 %v414
  %1660 = vmatpush1.msra.mxu0 %v413
  %1661 = vmatprep.subr.mxu0 %v416
  %1662 = vmatpush1.msra.mxu0 %v415
  %1663 = vmatprep.subr.mxu0 %v418
  %1664 = vmatpush1.msra.mxu0 %v417
  %1665 = vmatprep.subr.mxu0 %v420
  %1666 = vmatpush1.msra.mxu0 %v419
  %1667 = vmatprep.subr.mxu0 %v422
  %1668 = vmatpush1.msra.mxu0 %v421
  %1669 = vmatprep.subr.mxu0 %v424
  %1670 = vmatpush1.msra.mxu0 %v423
  %1671 = vmatprep.subr.mxu0 %v426
  %1672 = vmatpush1.msra.mxu0 %v425
  %1673 = vmatprep.subr.mxu0 0.0
  %1674 = vmatpush1.msra.mxu0 0.0
  %1675 = vmatprep.subr.mxu0 0.0
  %1676 = vmatpush1.msra.mxu0 0.0
  %1677 = vmatprep.subr.mxu0 0.0
  %1678 = vmatpush1.msra.mxu0 0.0
  %1679 = vmatprep.subr.mxu0 0.0
  %1680 = vmatpush1.msra.mxu0 0.0
  %1681 = vmatprep.subr.mxu0 0.0
  %1682 = vmatpush1.msra.mxu0 0.0
  %1683 = vmatprep.subr.mxu0 0.0
  %1684 = vmatpush1.msra.mxu0 0.0
  %1685 = vmatprep.subr.mxu0 0.0
  %1686 = vmatpush1.msra.mxu0 0.0
  %1687 = vmatprep.subr.mxu0 0.0
  %1688 = vmatpush1.msra.mxu0 0.0
  %1689 = vmatprep.subr.mxu0 0.0
  %1690 = vmatpush1.msra.mxu0 0.0
  %1691 = vmatprep.subr.mxu0 0.0
  %1692 = vmatpush1.msra.mxu0 0.0
  %1693 = vmatprep.subr.mxu0 0.0
  %1694 = vmatpush1.msra.mxu0 0.0
  %1695 = vmatprep.subr.mxu0 0.0
  %1696 = vmatpush1.msra.mxu0 0.0
  %1697 = vmatprep.subr.mxu0 0.0
  %1698 = vmatpush1.msra.mxu0 0.0
  %1699 = vmatprep.subr.mxu0 0.0
  %1700 = vmatpush1.msra.mxu0 0.0
  %1701 = vmatprep.subr.mxu0 0.0
  %1702 = vmatpush1.msra.mxu0 0.0
  %1703 = vmatprep.subr.mxu0 0.0
  %1704 = vmatpush1.msra.mxu0 0.0
  %1705 = vmatprep.subr.mxu0 0.0
  %1706 = vmatpush1.msra.mxu0 0.0
  %1707 = vmatprep.subr.mxu0 0.0
  %1708 = vmatpush1.msra.mxu0 0.0
  %1709 = vmatprep.subr.mxu0 0.0
  %1710 = vmatpush1.msra.mxu0 0.0
  %1711 = vmatprep.subr.mxu0 0.0
  %1712 = vmatpush1.msra.mxu0 0.0
  %1713 = vmatprep.subr.mxu0 0.0
  %1714 = vmatpush1.msra.mxu0 0.0
  %1715 = vmatprep.subr.mxu0 0.0
  %1716 = vmatpush1.msra.mxu0 0.0
  %1717 = vmatprep.subr.mxu0 0.0
  %1718 = vmatpush1.msra.mxu0 0.0
  %1719 = vmatprep.subr.mxu0 0.0
  %1720 = vmatpush1.msra.mxu0 0.0
  %1721 = vmatprep.mubr.f32.mxu0 0.0
  %1722 = vmatmul.mubr.f32.gmra.mrb[0].mxu0 %v1655
  %v1723 = vpop.f32.mrb[0].mxu0
  %v1724 = vadd.f32 0.0, %v1723
  %v1725 = vpop.f32.mrb[0].mxu0
  %v1726 = vadd.f32 0.0, %v1725
  %1727 = vdwg.mxu0
  %v1728 = vadd.f32 %v1652, %v1724
  %v1729 = vadd.f32 %v1653, %v1726
  %v1730 = vxor.u32 %v1728, 2147483648
  %v1731 = vxor.u32 %v1729, 2147483648
  %v1732 = vmul.f32 %v1730, 1.442695
  %v1733 = vpow.pop %v1732
  %v1734 = vmul.f32 %v1731, 1.442695
  %v1735 = vpow.pop %v1734
  %v1736 = vadd.f32 %v1733, 1.0
  %v1737 = vadd.f32 %v1735, 1.0
  %v1738 = vrcp.pop %v1736
  %v1739 = vmul.f32 1.0, %v1738
  %v1740 = vrcp.pop %v1737
  %v1741 = vmul.f32 1.0, %v1740
  %v1742 = vtanh.pop %v1729
  %v1743 = vmul.f32 %v1739, %v1644
  %1745 = vrot.lane.b32.xlu0 %v1742, 64
  %v1746 = vpop.permute.xlu0 %1745
  %v1748 = vmul.f32 %v1739, %v1746
  %1750 = vrot.lane.b32.xlu0 %v1748, 64
  %v1751 = vpop.permute.xlu0 %1750
  %v1753 = vadd.f32 %v1743, %v1751
  %v1754 = vtanh.pop %v1753
  %1756 = vrot.lane.b32.xlu0 %v1754, 64
  %v1757 = vpop.permute.xlu0 %1756
  %v1759 = vmul.f32 %v1741, %v1757
  %1760 = vst.msk [vmem:[#allocation3 + $0x58] sm:$0xff] %vm536, %v1759
  %v1761 = vld [vmem:[%s3] sm:$0xff]
  %v1762 = vld [vmem:[%s3 + $0x8] sm:$0xff]
  %v1763 = vld [vmem:[%s3 + $0x10] sm:$0xff]
  %v1764 = vld [vmem:[%s3 + $0x18] sm:$0xff]
  %v1765 = vld [vmem:[%s3 + $0x20] sm:$0xff]
  %v1766 = vld [vmem:[%s3 + $0x28] sm:$0xff]
  %v1767 = vld [vmem:[%s3 + $0x30] sm:$0xff]
  %v1768 = vld [vmem:[%s3 + $0x38] sm:$0xff]
  %v1769 = vld [vmem:[%s3 + $0x40] sm:$0xff]
  %v1770 = vld [vmem:[%s3 + $0x48] sm:$0xff]
  %v1771 = vld [vmem:[%s3 + $0x50] sm:$0xff]
  %v1772 = vld [vmem:[%s3 + $0x58] sm:$0xff]
  %v1773 = vld [vmem:[%s3 + $0x60] sm:$0x1]
  %v1774 = vld [vmem:[%s3 + $0x61] sm:$0x1]
  %v1775 = vld [vmem:[%s3 + $0x62] sm:$0x1]
  %v1776 = vld [vmem:[%s3 + $0x63] sm:$0x1]
  %v1777 = vld [vmem:[%s3 + $0x64] sm:$0x1]
  %v1778 = vld [vmem:[%s3 + $0x68] sm:$0xff]
  %v1779 = vld [vmem:[%s3 + $0x70] sm:$0xff]
  %v1780 = vld [vmem:[%s3 + $0x78] sm:$0xff]
  %v1781 = vld [vmem:[%s3 + $0x80] sm:$0xff]
  %v1782 = vld [vmem:[%s3 + $0x88] sm:$0xff]
  %v1783 = vld [vmem:[%s3 + $0x90] sm:$0xff]
  %v1784 = vld [vmem:[%s3 + $0x98] sm:$0xff]
  %v1785 = vld [vmem:[%s3 + $0xa0] sm:$0xff]
  %v1786 = vld [vmem:[#allocation3] sm:$0xff]
  %v1787 = vld [vmem:[#allocation3 + $0x8] sm:$0xff]
  %v1788 = vld [vmem:[#allocation3 + $0x10] sm:$0xff]
  %v1789 = vld [vmem:[#allocation3 + $0x18] sm:$0xff]
  %v1790 = vld [vmem:[#allocation3 + $0x20] sm:$0xff]
  %v1791 = vld [vmem:[#allocation3 + $0x28] sm:$0xff]
  %v1792 = vld [vmem:[#allocation3 + $0x30] sm:$0xff]
  %v1793 = vld [vmem:[#allocation3 + $0x38] sm:$0xff]
  %v1794 = vld [vmem:[#allocation3 + $0x40] sm:$0xff]
  %v1795 = vld [vmem:[#allocation3 + $0x48] sm:$0xff]
  %v1796 = vld [vmem:[#allocation3 + $0x50] sm:$0xff]
  %v1797 = vld [vmem:[#allocation3 + $0x58] sm:$0xff]
  %v1798 = vld [vmem:[#allocation3 + $0x60] sm:$0xff]
  %v1799 = vld [vmem:[#allocation3 + $0x68] sm:$0xff]
  %v1800 = vld [vmem:[#allocation3 + $0x70] sm:$0xff]
  %v1801 = vld [vmem:[#allocation3 + $0x78] sm:$0xff]
  %v1802 = vld [vmem:[#allocation3 + $0x80] sm:$0xff]
  %v1803 = vld [vmem:[#allocation3 + $0x88] sm:$0xff]
  %v1804 = vlaneseq
  %v1805 = vshrl.u32 %v1804, 7
  %v1806 = vsub.s32 0, %v1805
  %v1807 = vrot.slane %v1773, %v1806
  %v1809 = vsel %vm536, %v1786, 0
  %v1812 = vsel %vm536, %v1787, 0
  %v1815 = vsel %vm536, %v1788, 0
  %v1818 = vsel %vm536, %v1789, 0
  %v1821 = vsel %vm536, %v1790, 0
  %v1824 = vsel %vm536, %v1791, 0
  %v1827 = vsel %vm536, %v1792, 0
  %v1830 = vsel %vm536, %v1793, 0
  %v1833 = vsel %vm536, %v1794, 0
  %v1836 = vsel %vm536, %v1795, 0
  %v1839 = vsel %vm536, %v1796, 0
  %v1842 = vsel %vm536, %v1797, 0
  %v1845 = vsel %vm536, %v1798, 0
  %v1848 = vsel %vm536, %v1799, 0
  %v1851 = vsel %vm536, %v1800, 0
  %v1854 = vsel %vm536, %v1801, 0
  %v1857 = vsel %vm536, %v1802, 0
  %v1860 = vsel %vm536, %v1803, 0
  %1862 = vmatprep.subr.mxu0 0.0
  %1863 = vmatpush1.msra.mxu0 %v1769
  %1864 = vmatprep.subr.mxu0 0.0
  %1865 = vmatpush1.msra.mxu0 %v1770
  %1866 = vmatprep.subr.mxu0 0.0
  %1867 = vmatpush1.msra.mxu0 %v1771
  %1868 = vmatprep.subr.mxu0 0.0
  %1869 = vmatpush1.msra.mxu0 %v1772
  %1870 = vmatprep.subr.mxu0 0.0
  %1871 = vmatpush1.msra.mxu0 0.0
  %1872 = vmatprep.subr.mxu0 0.0
  %1873 = vmatpush1.msra.mxu0 0.0
  %1874 = vmatprep.subr.mxu0 0.0
  %1875 = vmatpush1.msra.mxu0 0.0
  %1876 = vmatprep.subr.mxu0 0.0
  %1877 = vmatpush1.msra.mxu0 0.0
  %1878 = vmatprep.subr.mxu0 0.0
  %1879 = vmatpush1.msra.mxu0 0.0
  %1880 = vmatprep.subr.mxu0 0.0
  %1881 = vmatpush1.msra.mxu0 0.0
  %1882 = vmatprep.subr.mxu0 0.0
  %1883 = vmatpush1.msra.mxu0 0.0
  %1884 = vmatprep.subr.mxu0 0.0
  %1885 = vmatpush1.msra.mxu0 0.0
  %1886 = vmatprep.subr.mxu0 0.0
  %1887 = vmatpush1.msra.mxu0 0.0
  %1888 = vmatprep.subr.mxu0 0.0
  %1889 = vmatpush1.msra.mxu0 0.0
  %1890 = vmatprep.subr.mxu0 0.0
  %1891 = vmatpush1.msra.mxu0 0.0
  %1892 = vmatprep.subr.mxu0 0.0
  %1893 = vmatpush1.msra.mxu0 0.0
  %1894 = vmatprep.subr.mxu0 0.0
  %1895 = vmatpush1.msra.mxu0 0.0
  %1896 = vmatprep.subr.mxu0 0.0
  %1897 = vmatpush1.msra.mxu0 0.0
  %1898 = vmatprep.subr.mxu0 0.0
  %1899 = vmatpush1.msra.mxu0 0.0
  %1900 = vmatprep.subr.mxu0 0.0
  %1901 = vmatpush1.msra.mxu0 0.0
  %1902 = vmatprep.subr.mxu0 0.0
  %1903 = vmatpush1.msra.mxu0 0.0
  %1904 = vmatprep.subr.mxu0 0.0
  %1905 = vmatpush1.msra.mxu0 0.0
  %1906 = vmatprep.subr.mxu0 0.0
  %1907 = vmatpush1.msra.mxu0 0.0
  %1908 = vmatprep.subr.mxu0 0.0
  %1909 = vmatpush1.msra.mxu0 0.0
  %1910 = vmatprep.subr.mxu0 0.0
  %1911 = vmatpush1.msra.mxu0 0.0
  %1912 = vmatprep.subr.mxu0 0.0
  %1913 = vmatpush1.msra.mxu0 0.0
  %1914 = vmatprep.subr.mxu0 0.0
  %1915 = vmatpush1.msra.mxu0 0.0
  %1916 = vmatprep.subr.mxu0 0.0
  %1917 = vmatpush1.msra.mxu0 0.0
  %1918 = vmatprep.subr.mxu0 0.0
  %1919 = vmatpush1.msra.mxu0 0.0
  %1920 = vmatprep.subr.mxu0 0.0
  %1921 = vmatpush1.msra.mxu0 0.0
  %1922 = vmatprep.subr.mxu0 0.0
  %1923 = vmatpush1.msra.mxu0 0.0
  %1924 = vmatprep.subr.mxu0 0.0
  %1925 = vmatpush1.msra.mxu0 0.0
  %1926 = vmatprep.mubr.f32.mxu0 0.0
  %1927 = vmatmul.mubr.f32.gmra.mrb[0].mxu0 %v1809
  %v1928 = vpop.f32.mrb[0].mxu0
  %v1929 = vadd.f32 %v1807, %v1928
  %v1930 = vpop.f32.mrb[0].mxu0
  %1931 = vmatprep.mubr.f32.mxu0 0.0
  %1932 = vmatmul.mubr.f32.gmra.mrb[0].mxu0 %v1812
  %v1933 = vpop.f32.mrb[0].mxu0
  %v1934 = vadd.f32 %v1807, %v1933
  %v1935 = vpop.f32.mrb[0].mxu0
  %1936 = vmatprep.mubr.f32.mxu0 0.0
  %1937 = vmatmul.mubr.f32.gmra.mrb[0].mxu0 %v1815
  %v1938 = vpop.f32.mrb[0].mxu0
  %v1939 = vadd.f32 %v1807, %v1938
  %v1940 = vpop.f32.mrb[0].mxu0
  %1941 = vmatprep.mubr.f32.mxu0 0.0
  %1942 = vmatmul.mubr.f32.gmra.mrb[0].mxu0 %v1818
  %v1943 = vpop.f32.mrb[0].mxu0
  %v1944 = vadd.f32 %v1807, %v1943
  %v1945 = vpop.f32.mrb[0].mxu0
  %1946 = vmatprep.mubr.f32.mxu0 0.0
  %1947 = vmatmul.mubr.f32.gmra.mrb[0].mxu0 %v1821
  %v1948 = vpop.f32.mrb[0].mxu0
  %v1949 = vadd.f32 %v1807, %v1948
  %v1950 = vpop.f32.mrb[0].mxu0
  %1951 = vmatprep.mubr.f32.mxu0 0.0
  %1952 = vmatmul.mubr.f32.gmra.mrb[0].mxu0 %v1824
  %v1953 = vpop.f32.mrb[0].mxu0
  %v1954 = vadd.f32 %v1807, %v1953
  %v1955 = vpop.f32.mrb[0].mxu0
  %1956 = vmatprep.mubr.f32.mxu0 0.0
  %1957 = vmatmul.mubr.f32.gmra.mrb[0].mxu0 %v1827
  %v1958 = vpop.f32.mrb[0].mxu0
  %v1959 = vadd.f32 %v1807, %v1958
  %v1960 = vpop.f32.mrb[0].mxu0
  %1961 = vmatprep.mubr.f32.mxu0 0.0
  %1962 = vmatmul.mubr.f32.gmra.mrb[0].mxu0 %v1830
  %v1963 = vpop.f32.mrb[0].mxu0
  %v1964 = vadd.f32 %v1807, %v1963
  %v1965 = vpop.f32.mrb[0].mxu0
  %1966 = vmatprep.mubr.f32.mxu0 0.0
  %1967 = vmatmul.mubr.f32.gmra.mrb[0].mxu0 %v1833
  %v1968 = vpop.f32.mrb[0].mxu0
  %v1969 = vadd.f32 %v1807, %v1968
  %v1970 = vpop.f32.mrb[0].mxu0
  %1971 = vmatprep.mubr.f32.mxu0 0.0
  %1972 = vmatmul.mubr.f32.gmra.mrb[0].mxu0 %v1836
  %v1973 = vpop.f32.mrb[0].mxu0
  %v1974 = vadd.f32 %v1807, %v1973
  %v1975 = vpop.f32.mrb[0].mxu0
  %1976 = vmatprep.mubr.f32.mxu0 0.0
  %1977 = vmatmul.mubr.f32.gmra.mrb[0].mxu0 %v1839
  %v1978 = vpop.f32.mrb[0].mxu0
  %v1979 = vadd.f32 %v1807, %v1978
  %v1980 = vpop.f32.mrb[0].mxu0
  %1981 = vmatprep.mubr.f32.mxu0 0.0
  %1982 = vmatmul.mubr.f32.gmra.mrb[0].mxu0 %v1842
  %v1983 = vpop.f32.mrb[0].mxu0
  %v1984 = vadd.f32 %v1807, %v1983
  %v1985 = vpop.f32.mrb[0].mxu0
  %1986 = vmatprep.mubr.f32.mxu0 0.0
  %1987 = vmatmul.mubr.f32.gmra.mrb[0].mxu0 %v1845
  %v1988 = vpop.f32.mrb[0].mxu0
  %v1989 = vadd.f32 %v1807, %v1988
  %v1990 = vpop.f32.mrb[0].mxu0
  %1991 = vmatprep.mubr.f32.mxu0 0.0
  %1992 = vmatmul.mubr.f32.gmra.mrb[0].mxu0 %v1848
  %v1993 = vpop.f32.mrb[0].mxu0
  %v1994 = vadd.f32 %v1807, %v1993
  %v1995 = vpop.f32.mrb[0].mxu0
  %1996 = vmatprep.mubr.f32.mxu0 0.0
  %1997 = vmatmul.mubr.f32.gmra.mrb[0].mxu0 %v1851
  %v1998 = vpop.f32.mrb[0].mxu0
  %v1999 = vadd.f32 %v1807, %v1998
  %v2000 = vpop.f32.mrb[0].mxu0
  %2001 = vmatprep.mubr.f32.mxu0 0.0
  %2002 = vmatmul.mubr.f32.gmra.mrb[0].mxu0 %v1854
  %v2003 = vpop.f32.mrb[0].mxu0
  %v2004 = vadd.f32 %v1807, %v2003
  %v2005 = vpop.f32.mrb[0].mxu0
  %2006 = vmatprep.mubr.f32.mxu0 0.0
  %2007 = vmatmul.mubr.f32.gmra.mrb[0].mxu0 %v1857
  %v2008 = vpop.f32.mrb[0].mxu0
  %v2009 = vadd.f32 %v1807, %v2008
  %v2010 = vpop.f32.mrb[0].mxu0
  %2011 = vmatprep.mubr.f32.mxu0 0.0
  %2012 = vmatmul.mubr.f32.gmra.mrb[0].mxu0 %v1860
  %v2013 = vpop.f32.mrb[0].mxu0
  %v2014 = vadd.f32 %v1807, %v2013
  %v2015 = vpop.f32.mrb[0].mxu0
  %2016 = vdwg.mxu0
  %v2017 = vsel %vm536, %v1759, %v1101
  %v2018 = vlaneseq
  %v2019 = vshrl.u32 %v2018, 7
  %v2020 = vsub.s32 0, %v2019
  %v2021 = vrot.slane %v1775, %v2020
  %v2023 = vsel %vm429, %v2017, 0
  %2025 = vmatprep.subr.mxu0 0.0
  %2026 = vmatpush1.msra.mxu0 %v1761
  %2027 = vmatprep.subr.mxu0 0.0
  %2028 = vmatpush1.msra.mxu0 %v1762
  %2029 = vmatprep.subr.mxu0 0.0
  %2030 = vmatpush1.msra.mxu0 %v1763
  %2031 = vmatprep.subr.mxu0 0.0
  %2032 = vmatpush1.msra.mxu0 %v1764
  %2033 = vmatprep.subr.mxu0 0.0
  %2034 = vmatpush1.msra.mxu0 %v1765
  %2035 = vmatprep.subr.mxu0 0.0
  %2036 = vmatpush1.msra.mxu0 %v1766
  %2037 = vmatprep.subr.mxu0 0.0
  %2038 = vmatpush1.msra.mxu0 %v1767
  %2039 = vmatprep.subr.mxu0 0.0
  %2040 = vmatpush1.msra.mxu0 %v1768
  %2041 = vmatprep.subr.mxu0 0.0
  %2042 = vmatpush1.msra.mxu0 0.0
  %2043 = vmatprep.subr.mxu0 0.0
  %2044 = vmatpush1.msra.mxu0 0.0
  %2045 = vmatprep.subr.mxu0 0.0
  %2046 = vmatpush1.msra.mxu0 0.0
  %2047 = vmatprep.subr.mxu0 0.0
  %2048 = vmatpush1.msra.mxu0 0.0
  %2049 = vmatprep.subr.mxu0 0.0
  %2050 = vmatpush1.msra.mxu0 0.0
  %2051 = vmatprep.subr.mxu0 0.0
  %2052 = vmatpush1.msra.mxu0 0.0
  %2053 = vmatprep.subr.mxu0 0.0
  %2054 = vmatpush1.msra.mxu0 0.0
  %2055 = vmatprep.subr.mxu0 0.0
  %2056 = vmatpush1.msra.mxu0 0.0
  %2057 = vmatprep.subr.mxu0 0.0
  %2058 = vmatpush1.msra.mxu0 0.0
  %2059 = vmatprep.subr.mxu0 0.0
  %2060 = vmatpush1.msra.mxu0 0.0
  %2061 = vmatprep.subr.mxu0 0.0
  %2062 = vmatpush1.msra.mxu0 0.0
  %2063 = vmatprep.subr.mxu0 0.0
  %2064 = vmatpush1.msra.mxu0 0.0
  %2065 = vmatprep.subr.mxu0 0.0
  %2066 = vmatpush1.msra.mxu0 0.0
  %2067 = vmatprep.subr.mxu0 0.0
  %2068 = vmatpush1.msra.mxu0 0.0
  %2069 = vmatprep.subr.mxu0 0.0
  %2070 = vmatpush1.msra.mxu0 0.0
  %2071 = vmatprep.subr.mxu0 0.0
  %2072 = vmatpush1.msra.mxu0 0.0
  %2073 = vmatprep.subr.mxu0 0.0
  %2074 = vmatpush1.msra.mxu0 0.0
  %2075 = vmatprep.subr.mxu0 0.0
  %2076 = vmatpush1.msra.mxu0 0.0
  %2077 = vmatprep.subr.mxu0 0.0
  %2078 = vmatpush1.msra.mxu0 0.0
  %2079 = vmatprep.subr.mxu0 0.0
  %2080 = vmatpush1.msra.mxu0 0.0
  %2081 = vmatprep.subr.mxu0 0.0
  %2082 = vmatpush1.msra.mxu0 0.0
  %2083 = vmatprep.subr.mxu0 0.0
  %2084 = vmatpush1.msra.mxu0 0.0
  %2085 = vmatprep.subr.mxu0 0.0
  %2086 = vmatpush1.msra.mxu0 0.0
  %2087 = vmatprep.subr.mxu0 0.0
  %2088 = vmatpush1.msra.mxu0 0.0
  %2089 = vmatprep.mubr.f32.mxu0 0.0
  %2090 = vmatmul.mubr.f32.gmra.mrb[0].mxu0 %v2023
  %v2091 = vpop.f32.mrb[0].mxu0
  %v2092 = vadd.f32 %v2021, %v2091
  %v2093 = vpop.f32.mrb[0].mxu0
  %2094 = vdwg.mxu0
  %2096 = vrot.lane.b32.xlu0 %v2092, 96
  %v2097 = vpop.permute.xlu0 %2096
  %v2099 = vlaneseq
  %v2100 = vshrl.u32 %v2099, 7
  %v2101 = vadd.s32 %v2100, 8
  %v2102 = vadd.s32 %v2100, 16
  %v2103 = vadd.s32 %v2100, 24
  %v2104 = vadd.s32 %v2100, 32
  %v2105 = vadd.s32 %v2100, 40
  %v2106 = vadd.s32 %v2100, 48
  %v2107 = vadd.s32 %v2100, 56
  %v2108 = vadd.s32 %v2100, 64
  %v2109 = vadd.s32 %v2100, 72
  %v2110 = vadd.s32 %v2100, 80
  %v2111 = vadd.s32 %v2100, 88
  %v2112 = vadd.s32 %v2100, 96
  %v2113 = vadd.s32 %v2100, 104
  %v2114 = vadd.s32 %v2100, 112
  %v2115 = vadd.s32 %v2100, 120
  %v2116 = vadd.s32 %v2100, 128
  %v2117 = vadd.s32 %v2100, 136
  %v2118 = vand.u32 %v2100, 7
  %v2119 = vand.u32 %v2101, 7
  %v2120 = vand.u32 %v2102, 7
  %v2121 = vand.u32 %v2103, 7
  %v2122 = vand.u32 %v2104, 7
  %v2123 = vand.u32 %v2105, 7
  %v2124 = vand.u32 %v2106, 7
  %v2125 = vand.u32 %v2107, 7
  %v2126 = vand.u32 %v2108, 7
  %v2127 = vand.u32 %v2109, 7
  %v2128 = vand.u32 %v2110, 7
  %v2129 = vand.u32 %v2111, 7
  %v2130 = vand.u32 %v2112, 7
  %v2131 = vand.u32 %v2113, 7
  %v2132 = vand.u32 %v2114, 7
  %v2133 = vand.u32 %v2115, 7
  %v2134 = vand.u32 %v2116, 7
  %v2135 = vand.u32 %v2117, 7
  %vm2136 = vcmp.ge.s32.totalorder %v2100, 96
  %vm2137 = vcmp.ge.s32.totalorder %v2101, 96
  %vm2138 = vcmp.ge.s32.totalorder %v2102, 96
  %vm2139 = vcmp.ge.s32.totalorder %v2103, 96
  %vm2140 = vcmp.ge.s32.totalorder %v2104, 96
  %vm2141 = vcmp.ge.s32.totalorder %v2105, 96
  %vm2142 = vcmp.ge.s32.totalorder %v2106, 96
  %vm2143 = vcmp.ge.s32.totalorder %v2107, 96
  %vm2144 = vcmp.ge.s32.totalorder %v2108, 96
  %vm2145 = vcmp.ge.s32.totalorder %v2109, 96
  %vm2146 = vcmp.ge.s32.totalorder %v2110, 96
  %vm2147 = vcmp.ge.s32.totalorder %v2111, 96
  %vm2148 = vcmp.ge.s32.totalorder %v2112, 96
  %vm2149 = vcmp.ge.s32.totalorder %v2113, 96
  %vm2150 = vcmp.ge.s32.totalorder %v2114, 96
  %vm2151 = vcmp.ge.s32.totalorder %v2115, 96
  %vm2152 = vcmp.ge.s32.totalorder %v2116, 96
  %vm2153 = vcmp.ge.s32.totalorder %v2117, 96
  %v2154 = vsel %vm2136, 1, 0
  %v2155 = vsel %vm2137, 1, 0
  %v2156 = vsel %vm2138, 1, 0
  %v2157 = vsel %vm2139, 1, 0
  %v2158 = vsel %vm2140, 1, 0
  %v2159 = vsel %vm2141, 1, 0
  %v2160 = vsel %vm2142, 1, 0
  %v2161 = vsel %vm2143, 1, 0
  %v2162 = vsel %vm2144, 1, 0
  %v2163 = vsel %vm2145, 1, 0
  %v2164 = vsel %vm2146, 1, 0
  %v2165 = vsel %vm2147, 1, 0
  %v2166 = vsel %vm2148, 1, 0
  %v2167 = vsel %vm2149, 1, 0
  %v2168 = vsel %vm2150, 1, 0
  %v2169 = vsel %vm2151, 1, 0
  %v2170 = vsel %vm2152, 1, 0
  %v2171 = vsel %vm2153, 1, 0
  %v2172 = vmul.u32 %v2154, 8
  %v2173 = vmul.u32 %v2155, 8
  %v2174 = vmul.u32 %v2156, 8
  %v2175 = vmul.u32 %v2157, 8
  %v2176 = vmul.u32 %v2158, 8
  %v2177 = vmul.u32 %v2159, 8
  %v2178 = vmul.u32 %v2160, 8
  %v2179 = vmul.u32 %v2161, 8
  %v2180 = vmul.u32 %v2162, 8
  %v2181 = vmul.u32 %v2163, 8
  %v2182 = vmul.u32 %v2164, 8
  %v2183 = vmul.u32 %v2165, 8
  %v2184 = vmul.u32 %v2166, 8
  %v2185 = vmul.u32 %v2167, 8
  %v2186 = vmul.u32 %v2168, 8
  %v2187 = vmul.u32 %v2169, 8
  %v2188 = vmul.u32 %v2170, 8
  %v2189 = vmul.u32 %v2171, 8
  %v2190 = vadd.s32 %v2118, %v2172
  %v2191 = vadd.s32 %v2119, %v2173
  %v2192 = vadd.s32 %v2120, %v2174
  %v2193 = vadd.s32 %v2121, %v2175
  %v2194 = vadd.s32 %v2122, %v2176
  %v2195 = vadd.s32 %v2123, %v2177
  %v2196 = vadd.s32 %v2124, %v2178
  %v2197 = vadd.s32 %v2125, %v2179
  %v2198 = vadd.s32 %v2126, %v2180
  %v2199 = vadd.s32 %v2127, %v2181
  %v2200 = vadd.s32 %v2128, %v2182
  %v2201 = vadd.s32 %v2129, %v2183
  %v2202 = vadd.s32 %v2130, %v2184
  %v2203 = vadd.s32 %v2131, %v2185
  %v2204 = vadd.s32 %v2132, %v2186
  %v2205 = vadd.s32 %v2133, %v2187
  %v2206 = vadd.s32 %v2134, %v2188
  %v2207 = vadd.s32 %v2135, %v2189
  %vm2208 = vcmp.eq.s32.totalorder %v30, %v2190
  %vm2209 = vcmp.eq.s32.totalorder %v30, %v2191
  %vm2210 = vcmp.eq.s32.totalorder %v30, %v2192
  %vm2211 = vcmp.eq.s32.totalorder %v30, %v2193
  %vm2212 = vcmp.eq.s32.totalorder %v30, %v2194
  %vm2213 = vcmp.eq.s32.totalorder %v30, %v2195
  %vm2214 = vcmp.eq.s32.totalorder %v30, %v2196
  %vm2215 = vcmp.eq.s32.totalorder %v30, %v2197
  %vm2216 = vcmp.eq.s32.totalorder %v30, %v2198
  %vm2217 = vcmp.eq.s32.totalorder %v30, %v2199
  %vm2218 = vcmp.eq.s32.totalorder %v30, %v2200
  %vm2219 = vcmp.eq.s32.totalorder %v30, %v2201
  %vm2220 = vcmp.eq.s32.totalorder %v30, %v2202
  %vm2221 = vcmp.eq.s32.totalorder %v30, %v2203
  %vm2222 = vcmp.eq.s32.totalorder %v30, %v2204
  %vm2223 = vcmp.eq.s32.totalorder %v30, %v2205
  %vm2224 = vcmp.eq.s32.totalorder %v30, %v2206
  %vm2225 = vcmp.eq.s32.totalorder %v30, %v2207
  %v2226 = vsel %vm2208, 1, 0
  %v2227 = vsel %vm2209, 1, 0
  %v2228 = vsel %vm2210, 1, 0
  %v2229 = vsel %vm2211, 1, 0
  %v2230 = vsel %vm2212, 1, 0
  %v2231 = vsel %vm2213, 1, 0
  %v2232 = vsel %vm2214, 1, 0
  %v2233 = vsel %vm2215, 1, 0
  %v2234 = vsel %vm2216, 1, 0
  %v2235 = vsel %vm2217, 1, 0
  %v2236 = vsel %vm2218, 1, 0
  %v2237 = vsel %vm2219, 1, 0
  %v2238 = vsel %vm2220, 1, 0
  %v2239 = vsel %vm2221, 1, 0
  %v2240 = vsel %vm2222, 1, 0
  %v2241 = vsel %vm2223, 1, 0
  %v2242 = vsel %vm2224, 1, 0
  %v2243 = vsel %vm2225, 1, 0
  %v2244 = vcvt.s32.f32 %v2226
  %v2245 = vcvt.s32.f32 %v2227
  %v2246 = vcvt.s32.f32 %v2228
  %v2247 = vcvt.s32.f32 %v2229
  %v2248 = vcvt.s32.f32 %v2230
  %v2249 = vcvt.s32.f32 %v2231
  %v2250 = vcvt.s32.f32 %v2232
  %v2251 = vcvt.s32.f32 %v2233
  %v2252 = vcvt.s32.f32 %v2234
  %v2253 = vcvt.s32.f32 %v2235
  %v2254 = vcvt.s32.f32 %v2236
  %v2255 = vcvt.s32.f32 %v2237
  %v2256 = vcvt.s32.f32 %v2238
  %v2257 = vcvt.s32.f32 %v2239
  %v2258 = vcvt.s32.f32 %v2240
  %v2259 = vcvt.s32.f32 %v2241
  %v2260 = vcvt.s32.f32 %v2242
  %v2261 = vcvt.s32.f32 %v2243
  %vm2262 = vcmask 130048
  %v2264 = vsel %vm2262, %v2244, 0
  %v2267 = vsel %vm2262, %v2245, 0
  %v2270 = vsel %vm2262, %v2246, 0
  %v2273 = vsel %vm2262, %v2247, 0
  %v2276 = vsel %vm2262, %v2248, 0
  %v2279 = vsel %vm2262, %v2249, 0
  %v2282 = vsel %vm2262, %v2250, 0
  %v2285 = vsel %vm2262, %v2251, 0
  %v2288 = vsel %vm2262, %v2252, 0
  %v2291 = vsel %vm2262, %v2253, 0
  %v2294 = vsel %vm2262, %v2254, 0
  %v2297 = vsel %vm2262, %v2255, 0
  %v2300 = vsel %vm2262, %v2256, 0
  %v2303 = vsel %vm2262, %v2257, 0
  %v2306 = vsel %vm2262, %v2258, 0
  %v2309 = vsel %vm2262, %v2259, 0
  %v2312 = vsel %vm2262, %v2260, 0
  %v2315 = vsel %vm2262, %v2261, 0
  %2317 = vmatprep.subr.mxu0 0.0
  %2318 = vmatpush1.msra.mxu0 %v2092
  %2319 = vmatprep.subr.mxu0 0.0
  %2320 = vmatpush1.msra.mxu0 %v2097
  %2321 = vmatprep.subr.mxu0 0.0
  %2322 = vmatpush1.msra.mxu0 0.0
  %2323 = vmatprep.subr.mxu0 0.0
  %2324 = vmatpush1.msra.mxu0 0.0
  %2325 = vmatprep.subr.mxu0 0.0
  %2326 = vmatpush1.msra.mxu0 0.0
  %2327 = vmatprep.subr.mxu0 0.0
  %2328 = vmatpush1.msra.mxu0 0.0
  %2329 = vmatprep.subr.mxu0 0.0
  %2330 = vmatpush1.msra.mxu0 0.0
  %2331 = vmatprep.subr.mxu0 0.0
  %2332 = vmatpush1.msra.mxu0 0.0
  %2333 = vmatprep.subr.mxu0 0.0
  %2334 = vmatpush1.msra.mxu0 0.0
  %2335 = vmatprep.subr.mxu0 0.0
  %2336 = vmatpush1.msra.mxu0 0.0
  %2337 = vmatprep.subr.mxu0 0.0
  %2338 = vmatpush1.msra.mxu0 0.0
  %2339 = vmatprep.subr.mxu0 0.0
  %2340 = vmatpush1.msra.mxu0 0.0
  %2341 = vmatprep.subr.mxu0 0.0
  %2342 = vmatpush1.msra.mxu0 0.0
  %2343 = vmatprep.subr.mxu0 0.0
  %2344 = vmatpush1.msra.mxu0 0.0
  %2345 = vmatprep.subr.mxu0 0.0
  %2346 = vmatpush1.msra.mxu0 0.0
  %2347 = vmatprep.subr.mxu0 0.0
  %2348 = vmatpush1.msra.mxu0 0.0
  %2349 = vmatprep.subr.mxu0 0.0
  %2350 = vmatpush1.msra.mxu0 0.0
  %2351 = vmatprep.subr.mxu0 0.0
  %2352 = vmatpush1.msra.mxu0 0.0
  %2353 = vmatprep.subr.mxu0 0.0
  %2354 = vmatpush1.msra.mxu0 0.0
  %2355 = vmatprep.subr.mxu0 0.0
  %2356 = vmatpush1.msra.mxu0 0.0
  %2357 = vmatprep.subr.mxu0 0.0
  %2358 = vmatpush1.msra.mxu0 0.0
  %2359 = vmatprep.subr.mxu0 0.0
  %2360 = vmatpush1.msra.mxu0 0.0
  %2361 = vmatprep.subr.mxu0 0.0
  %2362 = vmatpush1.msra.mxu0 0.0
  %2363 = vmatprep.subr.mxu0 0.0
  %2364 = vmatpush1.msra.mxu0 0.0
  %2365 = vmatprep.subr.mxu0 0.0
  %2366 = vmatpush1.msra.mxu0 0.0
  %2367 = vmatprep.subr.mxu0 0.0
  %2368 = vmatpush1.msra.mxu0 0.0
  %2369 = vmatprep.subr.mxu0 0.0
  %2370 = vmatpush1.msra.mxu0 0.0
  %2371 = vmatprep.subr.mxu0 0.0
  %2372 = vmatpush1.msra.mxu0 0.0
  %2373 = vmatprep.subr.mxu0 0.0
  %2374 = vmatpush1.msra.mxu0 0.0
  %2375 = vmatprep.subr.mxu0 0.0
  %2376 = vmatpush1.msra.mxu0 0.0
  %2377 = vmatprep.subr.mxu0 0.0
  %2378 = vmatpush1.msra.mxu0 0.0
  %2379 = vmatprep.subr.mxu0 0.0
  %2380 = vmatpush1.msra.mxu0 0.0
  %2381 = vmatprep.mubr.f32.mxu0 0.0
  %2382 = vmatmul.mubr.f32.gmra.mrb[0].mxu0 %v2264
  %v2383 = vpop.f32.mrb[0].mxu0
  %v2384 = vadd.f32 0.0, %v2383
  %v2385 = vpop.f32.mrb[0].mxu0
  %2386 = vmatprep.mubr.f32.mxu0 0.0
  %2387 = vmatmul.mubr.f32.gmra.mrb[0].mxu0 %v2267
  %v2388 = vpop.f32.mrb[0].mxu0
  %v2389 = vadd.f32 0.0, %v2388
  %v2390 = vpop.f32.mrb[0].mxu0
  %2391 = vmatprep.mubr.f32.mxu0 0.0
  %2392 = vmatmul.mubr.f32.gmra.mrb[0].mxu0 %v2270
  %v2393 = vpop.f32.mrb[0].mxu0
  %v2394 = vadd.f32 0.0, %v2393
  %v2395 = vpop.f32.mrb[0].mxu0
  %2396 = vmatprep.mubr.f32.mxu0 0.0
  %2397 = vmatmul.mubr.f32.gmra.mrb[0].mxu0 %v2273
  %v2398 = vpop.f32.mrb[0].mxu0
  %v2399 = vadd.f32 0.0, %v2398
  %v2400 = vpop.f32.mrb[0].mxu0
  %2401 = vmatprep.mubr.f32.mxu0 0.0
  %2402 = vmatmul.mubr.f32.gmra.mrb[0].mxu0 %v2276
  %v2403 = vpop.f32.mrb[0].mxu0
  %v2404 = vadd.f32 0.0, %v2403
  %v2405 = vpop.f32.mrb[0].mxu0
  %2406 = vmatprep.mubr.f32.mxu0 0.0
  %2407 = vmatmul.mubr.f32.gmra.mrb[0].mxu0 %v2279
  %v2408 = vpop.f32.mrb[0].mxu0
  %v2409 = vadd.f32 0.0, %v2408
  %v2410 = vpop.f32.mrb[0].mxu0
  %2411 = vmatprep.mubr.f32.mxu0 0.0
  %2412 = vmatmul.mubr.f32.gmra.mrb[0].mxu0 %v2282
  %v2413 = vpop.f32.mrb[0].mxu0
  %v2414 = vadd.f32 0.0, %v2413
  %v2415 = vpop.f32.mrb[0].mxu0
  %2416 = vmatprep.mubr.f32.mxu0 0.0
  %2417 = vmatmul.mubr.f32.gmra.mrb[0].mxu0 %v2285
  %v2418 = vpop.f32.mrb[0].mxu0
  %v2419 = vadd.f32 0.0, %v2418
  %v2420 = vpop.f32.mrb[0].mxu0
  %2421 = vmatprep.mubr.f32.mxu0 0.0
  %2422 = vmatmul.mubr.f32.gmra.mrb[0].mxu0 %v2288
  %v2423 = vpop.f32.mrb[0].mxu0
  %v2424 = vadd.f32 0.0, %v2423
  %v2425 = vpop.f32.mrb[0].mxu0
  %2426 = vmatprep.mubr.f32.mxu0 0.0
  %2427 = vmatmul.mubr.f32.gmra.mrb[0].mxu0 %v2291
  %v2428 = vpop.f32.mrb[0].mxu0
  %v2429 = vadd.f32 0.0, %v2428
  %v2430 = vpop.f32.mrb[0].mxu0
  %2431 = vmatprep.mubr.f32.mxu0 0.0
  %2432 = vmatmul.mubr.f32.gmra.mrb[0].mxu0 %v2294
  %v2433 = vpop.f32.mrb[0].mxu0
  %v2434 = vadd.f32 0.0, %v2433
  %v2435 = vpop.f32.mrb[0].mxu0
  %2436 = vmatprep.mubr.f32.mxu0 0.0
  %2437 = vmatmul.mubr.f32.gmra.mrb[0].mxu0 %v2297
  %v2438 = vpop.f32.mrb[0].mxu0
  %v2439 = vadd.f32 0.0, %v2438
  %v2440 = vpop.f32.mrb[0].mxu0
  %2441 = vmatprep.mubr.f32.mxu0 0.0
  %2442 = vmatmul.mubr.f32.gmra.mrb[0].mxu0 %v2300
  %v2443 = vpop.f32.mrb[0].mxu0
  %v2444 = vadd.f32 0.0, %v2443
  %v2445 = vpop.f32.mrb[0].mxu0
  %2446 = vmatprep.mubr.f32.mxu0 0.0
  %2447 = vmatmul.mubr.f32.gmra.mrb[0].mxu0 %v2303
  %v2448 = vpop.f32.mrb[0].mxu0
  %v2449 = vadd.f32 0.0, %v2448
  %v2450 = vpop.f32.mrb[0].mxu0
  %2451 = vmatprep.mubr.f32.mxu0 0.0
  %2452 = vmatmul.mubr.f32.gmra.mrb[0].mxu0 %v2306
  %v2453 = vpop.f32.mrb[0].mxu0
  %v2454 = vadd.f32 0.0, %v2453
  %v2455 = vpop.f32.mrb[0].mxu0
  %2456 = vmatprep.mubr.f32.mxu0 0.0
  %2457 = vmatmul.mubr.f32.gmra.mrb[0].mxu0 %v2309
  %v2458 = vpop.f32.mrb[0].mxu0
  %v2459 = vadd.f32 0.0, %v2458
  %v2460 = vpop.f32.mrb[0].mxu0
  %2461 = vmatprep.mubr.f32.mxu0 0.0
  %2462 = vmatmul.mubr.f32.gmra.mrb[0].mxu0 %v2312
  %v2463 = vpop.f32.mrb[0].mxu0
  %v2464 = vadd.f32 0.0, %v2463
  %v2465 = vpop.f32.mrb[0].mxu0
  %2466 = vmatprep.mubr.f32.mxu0 0.0
  %2467 = vmatmul.mubr.f32.gmra.mrb[0].mxu0 %v2315
  %v2468 = vpop.f32.mrb[0].mxu0
  %v2469 = vadd.f32 0.0, %v2468
  %v2470 = vpop.f32.mrb[0].mxu0
  %2471 = vdwg.mxu0
  %v2472 = vadd.f32 %v1929, %v2384
  %v2473 = vadd.f32 %v1934, %v2389
  %v2474 = vadd.f32 %v1939, %v2394
  %v2475 = vadd.f32 %v1944, %v2399
  %v2476 = vadd.f32 %v1949, %v2404
  %v2477 = vadd.f32 %v1954, %v2409
  %v2478 = vadd.f32 %v1959, %v2414
  %v2479 = vadd.f32 %v1964, %v2419
  %v2480 = vadd.f32 %v1969, %v2424
  %v2481 = vadd.f32 %v1974, %v2429
  %v2482 = vadd.f32 %v1979, %v2434
  %v2483 = vadd.f32 %v1984, %v2439
  %v2484 = vadd.f32 %v1989, %v2444
  %v2485 = vadd.f32 %v1994, %v2449
  %v2486 = vadd.f32 %v1999, %v2454
  %v2487 = vadd.f32 %v2004, %v2459
  %v2488 = vadd.f32 %v2009, %v2464
  %v2489 = vadd.f32 %v2014, %v2469
  %v2490 = vtanh.pop %v2472
  %v2491 = vtanh.pop %v2473
  %v2492 = vtanh.pop %v2474
  %v2493 = vtanh.pop %v2475
  %v2494 = vtanh.pop %v2476
  %v2495 = vtanh.pop %v2477
  %v2496 = vtanh.pop %v2478
  %v2497 = vtanh.pop %v2479
  %v2498 = vtanh.pop %v2480
  %v2499 = vtanh.pop %v2481
  %v2500 = vtanh.pop %v2482
  %v2501 = vtanh.pop %v2483
  %v2502 = vtanh.pop %v2484
  %v2503 = vtanh.pop %v2485
  %v2504 = vtanh.pop %v2486
  %v2505 = vtanh.pop %v2487
  %v2506 = vtanh.pop %v2488
  %v2507 = vtanh.pop %v2489
  %v2508 = vlaneseq
  %v2509 = vshrl.u32 %v2508, 7
  %v2510 = vsub.s32 0, %v2509
  %v2511 = vrot.slane %v1774, %v2510
  %v2512 = vmul.f32 %v2490, %v2511
  %v2513 = vmul.f32 %v2491, %v2511
  %v2514 = vmul.f32 %v2492, %v2511
  %v2515 = vmul.f32 %v2493, %v2511
  %v2516 = vmul.f32 %v2494, %v2511
  %v2517 = vmul.f32 %v2495, %v2511
  %v2518 = vmul.f32 %v2496, %v2511
  %v2519 = vmul.f32 %v2497, %v2511
  %v2520 = vmul.f32 %v2498, %v2511
  %v2521 = vmul.f32 %v2499, %v2511
  %v2522 = vmul.f32 %v2500, %v2511
  %v2523 = vmul.f32 %v2501, %v2511
  %v2524 = vmul.f32 %v2502, %v2511
  %v2525 = vmul.f32 %v2503, %v2511
  %v2526 = vmul.f32 %v2504, %v2511
  %v2527 = vmul.f32 %v2505, %v2511
  %v2528 = vmul.f32 %v2506, %v2511
  %v2529 = vmul.f32 %v2507, %v2511
  %v2530 = vsel %vm536, %v2512, 0.0
  %2531 = vadd.xlane.f32.xlu0 %v2530
  %v2532 = vpop.xlane.xlu0 %2531
  %v2533 = vsel %vm536, %v2513, 0.0
  %2534 = vadd.xlane.f32.xlu0 %v2533
  %v2535 = vpop.xlane.xlu0 %2534
  %v2536 = vsel %vm536, %v2514, 0.0
  %2537 = vadd.xlane.f32.xlu0 %v2536
  %v2538 = vpop.xlane.xlu0 %2537
  %v2539 = vsel %vm536, %v2515, 0.0
  %2540 = vadd.xlane.f32.xlu0 %v2539
  %v2541 = vpop.xlane.xlu0 %2540
  %v2542 = vsel %vm536, %v2516, 0.0
  %2543 = vadd.xlane.f32.xlu0 %v2542
  %v2544 = vpop.xlane.xlu0 %2543
  %v2545 = vsel %vm536, %v2517, 0.0
  %2546 = vadd.xlane.f32.xlu0 %v2545
  %v2547 = vpop.xlane.xlu0 %2546
  %v2548 = vsel %vm536, %v2518, 0.0
  %2549 = vadd.xlane.f32.xlu0 %v2548
  %v2550 = vpop.xlane.xlu0 %2549
  %v2551 = vsel %vm536, %v2519, 0.0
  %2552 = vadd.xlane.f32.xlu0 %v2551
  %v2553 = vpop.xlane.xlu0 %2552
  %v2554 = vsel %vm536, %v2520, 0.0
  %2555 = vadd.xlane.f32.xlu0 %v2554
  %v2556 = vpop.xlane.xlu0 %2555
  %v2557 = vsel %vm536, %v2521, 0.0
  %2558 = vadd.xlane.f32.xlu0 %v2557
  %v2559 = vpop.xlane.xlu0 %2558
  %v2560 = vsel %vm536, %v2522, 0.0
  %2561 = vadd.xlane.f32.xlu0 %v2560
  %v2562 = vpop.xlane.xlu0 %2561
  %v2563 = vsel %vm536, %v2523, 0.0
  %2564 = vadd.xlane.f32.xlu0 %v2563
  %v2565 = vpop.xlane.xlu0 %2564
  %v2566 = vsel %vm536, %v2524, 0.0
  %2567 = vadd.xlane.f32.xlu0 %v2566
  %v2568 = vpop.xlane.xlu0 %2567
  %v2569 = vsel %vm536, %v2525, 0.0
  %2570 = vadd.xlane.f32.xlu0 %v2569
  %v2571 = vpop.xlane.xlu0 %2570
  %v2572 = vsel %vm536, %v2526, 0.0
  %2573 = vadd.xlane.f32.xlu0 %v2572
  %v2574 = vpop.xlane.xlu0 %2573
  %v2575 = vsel %vm536, %v2527, 0.0
  %2576 = vadd.xlane.f32.xlu0 %v2575
  %v2577 = vpop.xlane.xlu0 %2576
  %v2578 = vsel %vm536, %v2528, 0.0
  %2579 = vadd.xlane.f32.xlu0 %v2578
  %v2580 = vpop.xlane.xlu0 %2579
  %v2581 = vsel %vm536, %v2529, 0.0
  %2582 = vadd.xlane.f32.xlu0 %v2581
  %v2583 = vpop.xlane.xlu0 %2582
  %v2584 = vld [vmem:[%s1] sm:$0xff]
  %v2585 = vld [vmem:[%s1 + $0x8] sm:$0xff]
  %v2586 = vld [vmem:[%s1 + $0x10] sm:$0xff]
  %v2587 = vld [vmem:[%s1 + $0x18] sm:$0xff]
  %v2588 = vld [vmem:[%s1 + $0x20] sm:$0xff]
  %v2589 = vld [vmem:[%s1 + $0x28] sm:$0xff]
  %v2590 = vld [vmem:[%s1 + $0x30] sm:$0xff]
  %v2591 = vld [vmem:[%s1 + $0x38] sm:$0xff]
  %v2592 = vld [vmem:[%s1 + $0x40] sm:$0xff]
  %v2593 = vld [vmem:[%s1 + $0x48] sm:$0xff]
  %v2594 = vld [vmem:[%s1 + $0x50] sm:$0xff]
  %v2595 = vld [vmem:[%s1 + $0x58] sm:$0xff]
  %v2596 = vld [vmem:[%s1 + $0x60] sm:$0xff]
  %v2597 = vld [vmem:[%s1 + $0x68] sm:$0xff]
  %v2598 = vld [vmem:[%s1 + $0x70] sm:$0xff]
  %v2599 = vld [vmem:[%s1 + $0x78] sm:$0xff]
  %v2600 = vld [vmem:[%s1 + $0x80] sm:$0xff]
  %v2601 = vld [vmem:[%s1 + $0x88] sm:$0xff]
  %v2602 = vadd.f32 %v2532, %v2584
  %v2603 = vadd.f32 %v2535, %v2585
  %v2604 = vadd.f32 %v2538, %v2586
  %v2605 = vadd.f32 %v2541, %v2587
  %v2606 = vadd.f32 %v2544, %v2588
  %v2607 = vadd.f32 %v2547, %v2589
  %v2608 = vadd.f32 %v2550, %v2590
  %v2609 = vadd.f32 %v2553, %v2591
  %v2610 = vadd.f32 %v2556, %v2592
  %v2611 = vadd.f32 %v2559, %v2593
  %v2612 = vadd.f32 %v2562, %v2594
  %v2613 = vadd.f32 %v2565, %v2595
  %v2614 = vadd.f32 %v2568, %v2596
  %v2615 = vadd.f32 %v2571, %v2597
  %v2616 = vadd.f32 %v2574, %v2598
  %v2617 = vadd.f32 %v2577, %v2599
  %v2618 = vadd.f32 %v2580, %v2600
  %v2619 = vadd.f32 %v2583, %v2601
  %vm2620 = vcmask 7168
  %v2621 = vsel %vm2620, %v2602, -inf
  %v2622 = vsel %vm2620, %v2603, -inf
  %v2623 = vsel %vm2620, %v2604, -inf
  %v2624 = vsel %vm2620, %v2605, -inf
  %v2625 = vsel %vm2620, %v2606, -inf
  %v2626 = vmax.f32 %v2621, %v2625
  %v2627 = vsel %vm2620, %v2607, -inf
  %v2628 = vmax.f32 %v2622, %v2627
  %v2629 = vsel %vm2620, %v2608, -inf
  %v2630 = vmax.f32 %v2623, %v2629
  %v2631 = vsel %vm2620, %v2609, -inf
  %v2632 = vmax.f32 %v2624, %v2631
  %v2633 = vsel %vm2620, %v2610, -inf
  %v2634 = vmax.f32 %v2626, %v2633
  %v2635 = vsel %vm2620, %v2611, -inf
  %v2636 = vmax.f32 %v2628, %v2635
  %v2637 = vsel %vm2620, %v2612, -inf
  %v2638 = vmax.f32 %v2630, %v2637
  %v2639 = vsel %vm2620, %v2613, -inf
  %v2640 = vmax.f32 %v2632, %v2639
  %v2641 = vmax.f32 %v2634, %v2636
  %v2642 = vmax.f32 %v2638, %v2640
  %v2643 = vmax.f32 %v2641, %v2642
  %v2644 = vrot.slane %v2643, 4
  %v2645 = vmax.f32 %v2643, %v2644
  %v2646 = vrot.slane %v2645, 2
  %v2647 = vmax.f32 %v2645, %v2646
  %v2648 = vrot.slane %v2647, 1
  %v2649 = vmax.f32 %v2647, %v2648
  %v2650 = vsub.f32 %v2602, %v2649
  %v2651 = vsub.f32 %v2603, %v2649
  %v2652 = vsub.f32 %v2604, %v2649
  %v2653 = vsub.f32 %v2605, %v2649
  %v2654 = vsub.f32 %v2606, %v2649
  %v2655 = vsub.f32 %v2607, %v2649
  %v2656 = vsub.f32 %v2608, %v2649
  %v2657 = vsub.f32 %v2609, %v2649
  %v2658 = vsub.f32 %v2610, %v2649
  %v2659 = vsub.f32 %v2611, %v2649
  %v2660 = vsub.f32 %v2612, %v2649
  %v2661 = vsub.f32 %v2613, %v2649
  %v2662 = vmul.f32 %v2650, 1.442695
  %v2663 = vpow.pop %v2662
  %v2664 = vmul.f32 %v2651, 1.442695
  %v2665 = vpow.pop %v2664
  %v2666 = vmul.f32 %v2652, 1.442695
  %v2667 = vpow.pop %v2666
  %v2668 = vmul.f32 %v2653, 1.442695
  %v2669 = vpow.pop %v2668
  %v2670 = vmul.f32 %v2654, 1.442695
  %v2671 = vpow.pop %v2670
  %v2672 = vmul.f32 %v2655, 1.442695
  %v2673 = vpow.pop %v2672
  %v2674 = vmul.f32 %v2656, 1.442695
  %v2675 = vpow.pop %v2674
  %v2676 = vmul.f32 %v2657, 1.442695
  %v2677 = vpow.pop %v2676
  %v2678 = vmul.f32 %v2658, 1.442695
  %v2679 = vpow.pop %v2678
  %v2680 = vmul.f32 %v2659, 1.442695
  %v2681 = vpow.pop %v2680
  %v2682 = vmul.f32 %v2660, 1.442695
  %v2683 = vpow.pop %v2682
  %v2684 = vmul.f32 %v2661, 1.442695
  %v2685 = vpow.pop %v2684
  %v2686 = vand.u32 %v30, 7
  %vm2687 = vcmp.eq.s32.totalorder %v2686, %v2100
  %v2688 = vsel %vm2687, 1, 0
  %v2689 = vcvt.s32.f32 %v2688
  %2691 = vset.pattern.permute.xlu0 0
  %2692 = vperm.xlu0 %2691, %v2663
  %v2693 = vpop.permute.xlu0 %2692
  %2696 = vset.pattern.permute.xlu0 0
  %2697 = vperm.xlu0 %2696, %v2665
  %v2698 = vpop.permute.xlu0 %2697
  %2701 = vset.pattern.permute.xlu0 0
  %2702 = vperm.xlu0 %2701, %v2667
  %v2703 = vpop.permute.xlu0 %2702
  %2706 = vset.pattern.permute.xlu0 0
  %2707 = vperm.xlu0 %2706, %v2669
  %v2708 = vpop.permute.xlu0 %2707
  %2711 = vset.pattern.permute.xlu0 0
  %2712 = vperm.xlu0 %2711, %v2671
  %v2713 = vpop.permute.xlu0 %2712
  %2716 = vset.pattern.permute.xlu0 0
  %2717 = vperm.xlu0 %2716, %v2673
  %v2718 = vpop.permute.xlu0 %2717
  %2721 = vset.pattern.permute.xlu0 0
  %2722 = vperm.xlu0 %2721, %v2675
  %v2723 = vpop.permute.xlu0 %2722
  %2726 = vset.pattern.permute.xlu0 0
  %2727 = vperm.xlu0 %2726, %v2677
  %v2728 = vpop.permute.xlu0 %2727
  %2731 = vset.pattern.permute.xlu0 0
  %2732 = vperm.xlu0 %2731, %v2679
  %v2733 = vpop.permute.xlu0 %2732
  %2736 = vset.pattern.permute.xlu0 0
  %2737 = vperm.xlu0 %2736, %v2681
  %v2738 = vpop.permute.xlu0 %2737
  %2741 = vset.pattern.permute.xlu0 0
  %2742 = vperm.xlu0 %2741, %v2683
  %v2743 = vpop.permute.xlu0 %2742
  %2746 = vset.pattern.permute.xlu0 0
  %2747 = vperm.xlu0 %2746, %v2685
  %v2748 = vpop.permute.xlu0 %2747
  %v2750 = vmul.f32 %v2693, %v1929
  %v2751 = vmul.f32 %v2698, %v1934
  %v2752 = vmul.f32 %v2703, %v1939
  %v2753 = vmul.f32 %v2708, %v1944
  %v2754 = vmul.f32 %v2713, %v1949
  %v2755 = vmul.f32 %v2718, %v1954
  %v2756 = vmul.f32 %v2723, %v1959
  %v2757 = vmul.f32 %v2728, %v1964
  %v2758 = vmul.f32 %v2733, %v1969
  %v2759 = vmul.f32 %v2738, %v1974
  %v2760 = vmul.f32 %v2743, %v1979
  %v2761 = vmul.f32 %v2748, %v1984
  %2774 = vrot.lane.b32.xlu0 %v2750, 1
  %v2775 = vpop.permute.xlu0 %2774
  %2776 = vrot.lane.b32.xlu0 %v2751, 1
  %v2777 = vpop.permute.xlu0 %2776
  %2778 = vrot.lane.b32.xlu0 %v2752, 1
  %v2779 = vpop.permute.xlu0 %2778
  %2780 = vrot.lane.b32.xlu0 %v2753, 1
  %v2781 = vpop.permute.xlu0 %2780
  %2782 = vrot.lane.b32.xlu0 %v2754, 1
  %v2783 = vpop.permute.xlu0 %2782
  %2784 = vrot.lane.b32.xlu0 %v2755, 1
  %v2785 = vpop.permute.xlu0 %2784
  %2786 = vrot.lane.b32.xlu0 %v2756, 1
  %v2787 = vpop.permute.xlu0 %2786
  %2788 = vrot.lane.b32.xlu0 %v2757, 1
  %v2789 = vpop.permute.xlu0 %2788
  %2790 = vrot.lane.b32.xlu0 %v2758, 1
  %v2791 = vpop.permute.xlu0 %2790
  %2792 = vrot.lane.b32.xlu0 %v2759, 1
  %v2793 = vpop.permute.xlu0 %2792
  %2794 = vrot.lane.b32.xlu0 %v2760, 1
  %v2795 = vpop.permute.xlu0 %2794
  %2796 = vrot.lane.b32.xlu0 %v2761, 1
  %v2797 = vpop.permute.xlu0 %2796
  %v2810 = vsel %vm2620, %v2663, %v2775
  %v2811 = vsel %vm2620, %v2665, %v2777
  %v2812 = vsel %vm2620, %v2667, %v2779
  %v2813 = vsel %vm2620, %v2669, %v2781
  %v2814 = vsel %vm2620, %v2671, %v2783
  %v2815 = vsel %vm2620, %v2673, %v2785
  %v2816 = vsel %vm2620, %v2675, %v2787
  %v2817 = vsel %vm2620, %v2677, %v2789
  %v2818 = vsel %vm2620, %v2679, %v2791
  %v2819 = vsel %vm2620, %v2681, %v2793
  %v2820 = vsel %vm2620, %v2683, %v2795
  %v2821 = vsel %vm2620, %v2685, %v2797
  %vm2822 = vcmask 785408
  %v2824 = vsel %vm2822, %v2689, 0
  %2826 = vmatprep.subr.mxu0 0.0
  %2827 = vmatpush1.msra.mxu0 %v2810
  %2828 = vmatprep.subr.mxu0 0.0
  %2829 = vmatpush1.msra.mxu0 %v2811
  %2830 = vmatprep.subr.mxu0 0.0
  %2831 = vmatpush1.msra.mxu0 %v2812
  %2832 = vmatprep.subr.mxu0 0.0
  %2833 = vmatpush1.msra.mxu0 %v2813
  %2834 = vmatprep.subr.mxu0 0.0
  %2835 = vmatpush1.msra.mxu0 %v2814
  %2836 = vmatprep.subr.mxu0 0.0
  %2837 = vmatpush1.msra.mxu0 %v2815
  %2838 = vmatprep.subr.mxu0 0.0
  %2839 = vmatpush1.msra.mxu0 %v2816
  %2840 = vmatprep.subr.mxu0 0.0
  %2841 = vmatpush1.msra.mxu0 %v2817
  %2842 = vmatprep.subr.mxu0 0.0
  %2843 = vmatpush1.msra.mxu0 %v2818
  %2844 = vmatprep.subr.mxu0 0.0
  %2845 = vmatpush1.msra.mxu0 %v2819
  %2846 = vmatprep.subr.mxu0 0.0
  %2847 = vmatpush1.msra.mxu0 %v2820
  %2848 = vmatprep.subr.mxu0 0.0
  %2849 = vmatpush1.msra.mxu0 %v2821
  %2850 = vmatprep.subr.mxu0 0.0
  %2851 = vmatpush1.msra.mxu0 0.0
  %2852 = vmatprep.subr.mxu0 0.0
  %2853 = vmatpush1.msra.mxu0 0.0
  %2854 = vmatprep.subr.mxu0 0.0
  %2855 = vmatpush1.msra.mxu0 0.0
  %2856 = vmatprep.subr.mxu0 0.0
  %2857 = vmatpush1.msra.mxu0 0.0
  %2858 = vmatprep.subr.mxu0 0.0
  %2859 = vmatpush1.msra.mxu0 0.0
  %2860 = vmatprep.subr.mxu0 0.0
  %2861 = vmatpush1.msra.mxu0 0.0
  %2862 = vmatprep.subr.mxu0 0.0
  %2863 = vmatpush1.msra.mxu0 0.0
  %2864 = vmatprep.subr.mxu0 0.0
  %2865 = vmatpush1.msra.mxu0 0.0
  %2866 = vmatprep.subr.mxu0 0.0
  %2867 = vmatpush1.msra.mxu0 0.0
  %2868 = vmatprep.subr.mxu0 0.0
  %2869 = vmatpush1.msra.mxu0 0.0
  %2870 = vmatprep.subr.mxu0 0.0
  %2871 = vmatpush1.msra.mxu0 0.0
  %2872 = vmatprep.subr.mxu0 0.0
  %2873 = vmatpush1.msra.mxu0 0.0
  %2874 = vmatprep.subr.mxu0 0.0
  %2875 = vmatpush1.msra.mxu0 0.0
  %2876 = vmatprep.subr.mxu0 0.0
  %2877 = vmatpush1.msra.mxu0 0.0
  %2878 = vmatprep.subr.mxu0 0.0
  %2879 = vmatpush1.msra.mxu0 0.0
  %2880 = vmatprep.subr.mxu0 0.0
  %2881 = vmatpush1.msra.mxu0 0.0
  %2882 = vmatprep.subr.mxu0 0.0
  %2883 = vmatpush1.msra.mxu0 0.0
  %2884 = vmatprep.subr.mxu0 0.0
  %2885 = vmatpush1.msra.mxu0 0.0
  %2886 = vmatprep.subr.mxu0 0.0
  %2887 = vmatpush1.msra.mxu0 0.0
  %2888 = vmatprep.subr.mxu0 0.0
  %2889 = vmatpush1.msra.mxu0 0.0
  %2890 = vmatprep.mubr.f32.mxu0 0.0
  %2891 = vmatmul.mubr.f32.gmra.mrb[0].mxu0 %v2824
  %v2892 = vpop.f32.mrb[0].mxu0
  %v2893 = vadd.f32 0.0, %v2892
  %v2894 = vpop.f32.mrb[0].mxu0
  %2895 = vdwg.mxu0
  %v2896 = vmax.f32 %v2893, 1e-30
  %v2897 = vrcp.pop %v2896
  %2899 = vset.pattern.permute.xlu0 0
  %2900 = vperm.xlu0 %2899, %v2897
  %v2901 = vpop.permute.xlu0 %2900
  %v2903 = vmul.f32 %v2893, %v2901
  %v2904 = vsel %vm2620, %v2614, -inf
  %v2905 = vsel %vm2620, %v2615, -inf
  %v2906 = vsel %vm2620, %v2616, -inf
  %v2907 = vsel %vm2620, %v2617, -inf
  %v2908 = vsel %vm2620, %v2618, -inf
  %v2909 = vmax.f32 %v2904, %v2908
  %v2910 = vsel %vm2620, %v2619, -inf
  %v2911 = vmax.f32 %v2905, %v2910
  %v2912 = vmax.f32 %v2909, %v2911
  %v2913 = vmax.f32 %v2906, %v2907
  %v2914 = vmax.f32 %v2912, %v2913
  %v2915 = vrot.slane %v2914, 4
  %v2916 = vmax.f32 %v2914, %v2915
  %v2917 = vrot.slane %v2916, 2
  %v2918 = vmax.f32 %v2916, %v2917
  %v2919 = vrot.slane %v2918, 1
  %v2920 = vmax.f32 %v2918, %v2919
  %v2921 = vsub.f32 %v2614, %v2920
  %v2922 = vsub.f32 %v2615, %v2920
  %v2923 = vsub.f32 %v2616, %v2920
  %v2924 = vsub.f32 %v2617, %v2920
  %v2925 = vsub.f32 %v2618, %v2920
  %v2926 = vsub.f32 %v2619, %v2920
  %v2927 = vmul.f32 %v2921, 1.442695
  %v2928 = vpow.pop %v2927
  %v2929 = vmul.f32 %v2922, 1.442695
  %v2930 = vpow.pop %v2929
  %v2931 = vmul.f32 %v2923, 1.442695
  %v2932 = vpow.pop %v2931
  %v2933 = vmul.f32 %v2924, 1.442695
  %v2934 = vpow.pop %v2933
  %v2935 = vmul.f32 %v2925, 1.442695
  %v2936 = vpow.pop %v2935
  %v2937 = vmul.f32 %v2926, 1.442695
  %v2938 = vpow.pop %v2937
  %2940 = vset.pattern.permute.xlu0 0
  %2941 = vperm.xlu0 %2940, %v2928
  %v2942 = vpop.permute.xlu0 %2941
  %2945 = vset.pattern.permute.xlu0 0
  %2946 = vperm.xlu0 %2945, %v2930
  %v2947 = vpop.permute.xlu0 %2946
  %2950 = vset.pattern.permute.xlu0 0
  %2951 = vperm.xlu0 %2950, %v2932
  %v2952 = vpop.permute.xlu0 %2951
  %2955 = vset.pattern.permute.xlu0 0
  %2956 = vperm.xlu0 %2955, %v2934
  %v2957 = vpop.permute.xlu0 %2956
  %2960 = vset.pattern.permute.xlu0 0
  %2961 = vperm.xlu0 %2960, %v2936
  %v2962 = vpop.permute.xlu0 %2961
  %2965 = vset.pattern.permute.xlu0 0
  %2966 = vperm.xlu0 %2965, %v2938
  %v2967 = vpop.permute.xlu0 %2966
  %v2969 = vmul.f32 %v2942, %v1989
  %v2970 = vmul.f32 %v2947, %v1994
  %v2971 = vmul.f32 %v2952, %v1999
  %v2972 = vmul.f32 %v2957, %v2004
  %v2973 = vmul.f32 %v2962, %v2009
  %v2974 = vmul.f32 %v2967, %v2014
  %2981 = vrot.lane.b32.xlu0 %v2969, 1
  %v2982 = vpop.permute.xlu0 %2981
  %2983 = vrot.lane.b32.xlu0 %v2970, 1
  %v2984 = vpop.permute.xlu0 %2983
  %2985 = vrot.lane.b32.xlu0 %v2971, 1
  %v2986 = vpop.permute.xlu0 %2985
  %2987 = vrot.lane.b32.xlu0 %v2972, 1
  %v2988 = vpop.permute.xlu0 %2987
  %2989 = vrot.lane.b32.xlu0 %v2973, 1
  %v2990 = vpop.permute.xlu0 %2989
  %2991 = vrot.lane.b32.xlu0 %v2974, 1
  %v2992 = vpop.permute.xlu0 %2991
  %v2999 = vsel %vm2620, %v2928, %v2982
  %v3000 = vsel %vm2620, %v2930, %v2984
  %v3001 = vsel %vm2620, %v2932, %v2986
  %v3002 = vsel %vm2620, %v2934, %v2988
  %v3003 = vsel %vm2620, %v2936, %v2990
  %v3004 = vsel %vm2620, %v2938, %v2992
  %vm3005 = vcmask 392192
  %v3006 = vsel %vm3005, %v2689, 0
  %3008 = vmatprep.subr.mxu0 0.0
  %3009 = vmatpush1.msra.mxu0 %v2999
  %3010 = vmatprep.subr.mxu0 0.0
  %3011 = vmatpush1.msra.mxu0 %v3000
  %3012 = vmatprep.subr.mxu0 0.0
  %3013 = vmatpush1.msra.mxu0 %v3001
  %3014 = vmatprep.subr.mxu0 0.0
  %3015 = vmatpush1.msra.mxu0 %v3002
  %3016 = vmatprep.subr.mxu0 0.0
  %3017 = vmatpush1.msra.mxu0 %v3003
  %3018 = vmatprep.subr.mxu0 0.0
  %3019 = vmatpush1.msra.mxu0 %v3004
  %3020 = vmatprep.subr.mxu0 0.0
  %3021 = vmatpush1.msra.mxu0 0.0
  %3022 = vmatprep.subr.mxu0 0.0
  %3023 = vmatpush1.msra.mxu0 0.0
  %3024 = vmatprep.subr.mxu0 0.0
  %3025 = vmatpush1.msra.mxu0 0.0
  %3026 = vmatprep.subr.mxu0 0.0
  %3027 = vmatpush1.msra.mxu0 0.0
  %3028 = vmatprep.subr.mxu0 0.0
  %3029 = vmatpush1.msra.mxu0 0.0
  %3030 = vmatprep.subr.mxu0 0.0
  %3031 = vmatpush1.msra.mxu0 0.0
  %3032 = vmatprep.subr.mxu0 0.0
  %3033 = vmatpush1.msra.mxu0 0.0
  %3034 = vmatprep.subr.mxu0 0.0
  %3035 = vmatpush1.msra.mxu0 0.0
  %3036 = vmatprep.subr.mxu0 0.0
  %3037 = vmatpush1.msra.mxu0 0.0
  %3038 = vmatprep.subr.mxu0 0.0
  %3039 = vmatpush1.msra.mxu0 0.0
  %3040 = vmatprep.subr.mxu0 0.0
  %3041 = vmatpush1.msra.mxu0 0.0
  %3042 = vmatprep.subr.mxu0 0.0
  %3043 = vmatpush1.msra.mxu0 0.0
  %3044 = vmatprep.subr.mxu0 0.0
  %3045 = vmatpush1.msra.mxu0 0.0
  %3046 = vmatprep.subr.mxu0 0.0
  %3047 = vmatpush1.msra.mxu0 0.0
  %3048 = vmatprep.subr.mxu0 0.0
  %3049 = vmatpush1.msra.mxu0 0.0
  %3050 = vmatprep.subr.mxu0 0.0
  %3051 = vmatpush1.msra.mxu0 0.0
  %3052 = vmatprep.subr.mxu0 0.0
  %3053 = vmatpush1.msra.mxu0 0.0
  %3054 = vmatprep.subr.mxu0 0.0
  %3055 = vmatpush1.msra.mxu0 0.0
  %3056 = vmatprep.subr.mxu0 0.0
  %3057 = vmatpush1.msra.mxu0 0.0
  %3058 = vmatprep.subr.mxu0 0.0
  %3059 = vmatpush1.msra.mxu0 0.0
  %3060 = vmatprep.subr.mxu0 0.0
  %3061 = vmatpush1.msra.mxu0 0.0
  %3062 = vmatprep.subr.mxu0 0.0
  %3063 = vmatpush1.msra.mxu0 0.0
  %3064 = vmatprep.subr.mxu0 0.0
  %3065 = vmatpush1.msra.mxu0 0.0
  %3066 = vmatprep.subr.mxu0 0.0
  %3067 = vmatpush1.msra.mxu0 0.0
  %3068 = vmatprep.subr.mxu0 0.0
  %3069 = vmatpush1.msra.mxu0 0.0
  %3070 = vmatprep.subr.mxu0 0.0
  %3071 = vmatpush1.msra.mxu0 0.0
  %3072 = vmatprep.mubr.f32.mxu0 0.0
  %3073 = vmatmul.mubr.f32.gmra.mrb[0].mxu0 %v3006
  %v3074 = vpop.f32.mrb[0].mxu0
  %v3075 = vadd.f32 0.0, %v3074
  %v3076 = vpop.f32.mrb[0].mxu0
  %3077 = vdwg.mxu0
  %v3078 = vmax.f32 %v3075, 1e-30
  %v3079 = vrcp.pop %v3078
  %3081 = vset.pattern.permute.xlu0 0
  %3082 = vperm.xlu0 %3081, %v3079
  %v3083 = vpop.permute.xlu0 %3082
  %v3085 = vmul.f32 %v3075, %v3083
  %3087 = vrot.lane.b32.xlu0 %v2903, 127
  %v3088 = vpop.permute.xlu0 %3087
  %3091 = vrot.lane.b32.xlu0 %v3085, 31
  %v3092 = vpop.permute.xlu0 %3091
  %v3094 = vsel %vm536, %v3088, %v3092
  %v3095 = vlaneseq
  %v3096 = vshrl.u32 %v3095, 7
  %v3097 = vsub.s32 0, %v3096
  %v3098 = vrot.slane %v1776, %v3097
  %v3100 = vsel %vm429, %v3094, 0
  %3102 = vmatprep.subr.mxu0 0.0
  %3103 = vmatpush1.msra.mxu0 %v1778
  %3104 = vmatprep.subr.mxu0 0.0
  %3105 = vmatpush1.msra.mxu0 %v1779
  %3106 = vmatprep.subr.mxu0 0.0
  %3107 = vmatpush1.msra.mxu0 %v1780
  %3108 = vmatprep.subr.mxu0 0.0
  %3109 = vmatpush1.msra.mxu0 %v1781
  %3110 = vmatprep.subr.mxu0 0.0
  %3111 = vmatpush1.msra.mxu0 %v1782
  %3112 = vmatprep.subr.mxu0 0.0
  %3113 = vmatpush1.msra.mxu0 %v1783
  %3114 = vmatprep.subr.mxu0 0.0
  %3115 = vmatpush1.msra.mxu0 %v1784
  %3116 = vmatprep.subr.mxu0 0.0
  %3117 = vmatpush1.msra.mxu0 %v1785
  %3118 = vmatprep.subr.mxu0 0.0
  %3119 = vmatpush1.msra.mxu0 0.0
  %3120 = vmatprep.subr.mxu0 0.0
  %3121 = vmatpush1.msra.mxu0 0.0
  %3122 = vmatprep.subr.mxu0 0.0
  %3123 = vmatpush1.msra.mxu0 0.0
  %3124 = vmatprep.subr.mxu0 0.0
  %3125 = vmatpush1.msra.mxu0 0.0
  %3126 = vmatprep.subr.mxu0 0.0
  %3127 = vmatpush1.msra.mxu0 0.0
  %3128 = vmatprep.subr.mxu0 0.0
  %3129 = vmatpush1.msra.mxu0 0.0
  %3130 = vmatprep.subr.mxu0 0.0
  %3131 = vmatpush1.msra.mxu0 0.0
  %3132 = vmatprep.subr.mxu0 0.0
  %3133 = vmatpush1.msra.mxu0 0.0
  %3134 = vmatprep.subr.mxu0 0.0
  %3135 = vmatpush1.msra.mxu0 0.0
  %3136 = vmatprep.subr.mxu0 0.0
  %3137 = vmatpush1.msra.mxu0 0.0
  %3138 = vmatprep.subr.mxu0 0.0
  %3139 = vmatpush1.msra.mxu0 0.0
  %3140 = vmatprep.subr.mxu0 0.0
  %3141 = vmatpush1.msra.mxu0 0.0
  %3142 = vmatprep.subr.mxu0 0.0
  %3143 = vmatpush1.msra.mxu0 0.0
  %3144 = vmatprep.subr.mxu0 0.0
  %3145 = vmatpush1.msra.mxu0 0.0
  %3146 = vmatprep.subr.mxu0 0.0
  %3147 = vmatpush1.msra.mxu0 0.0
  %3148 = vmatprep.subr.mxu0 0.0
  %3149 = vmatpush1.msra.mxu0 0.0
  %3150 = vmatprep.subr.mxu0 0.0
  %3151 = vmatpush1.msra.mxu0 0.0
  %3152 = vmatprep.subr.mxu0 0.0
  %3153 = vmatpush1.msra.mxu0 0.0
  %3154 = vmatprep.subr.mxu0 0.0
  %3155 = vmatpush1.msra.mxu0 0.0
  %3156 = vmatprep.subr.mxu0 0.0
  %3157 = vmatpush1.msra.mxu0 0.0
  %3158 = vmatprep.subr.mxu0 0.0
  %3159 = vmatpush1.msra.mxu0 0.0
  %3160 = vmatprep.subr.mxu0 0.0
  %3161 = vmatpush1.msra.mxu0 0.0
  %3162 = vmatprep.subr.mxu0 0.0
  %3163 = vmatpush1.msra.mxu0 0.0
  %3164 = vmatprep.subr.mxu0 0.0
  %3165 = vmatpush1.msra.mxu0 0.0
  %3166 = vmatprep.mubr.f32.mxu0 0.0
  %3167 = vmatmul.mubr.f32.gmra.mrb[0].mxu0 %v3100
  %v3168 = vpop.f32.mrb[0].mxu0
  %v3169 = vadd.f32 %v3098, %v3168
  %v3170 = vpop.f32.mrb[0].mxu0
  %3171 = vdwg.mxu0
  %s3173 = vtos %v1777
  %v3174 = vstv %s3173
  %v3176 = vmul.f32 %v3174, %v3169
  %v3177 = vsub.f32 1.0, %v1777
  %s3179 = vtos %v3177
  %v3180 = vstv %s3179
  %v3182 = vmul.f32 %v3180, %v3169
  %3184 = vrot.lane.b32.xlu0 %v3182, 126
  %v3185 = vpop.permute.xlu0 %3184
  %v3187 = vadd.f32 %v3176, %v3185
  %vm3188 = vcmask 15360
  %v3189 = vsel %vm3188, %v3187, -inf
  %3190 = vmax.xlane.f32.xlu0 %v3189
  %v3191 = vpop.xlane.xlu0 %3190
  %v3192 = vsub.f32 %v3187, %v3191
  %v3193 = vmul.f32 %v3192, 1.442695
  %v3194 = vpow.pop %v3193
  %v3195 = vsel %vm3188, %v3194, 0.0
  %3196 = vadd.xlane.f32.xlu0 %v3195
  %v3197 = vpop.xlane.xlu0 %3196
  %v3198 = vrcp.pop %v3197
  %v3199 = vmul.f32 %v3194, %v3198
  %3200 = vst.msk [vmem:[%s4] sm:$0xff] %vm3188, %v3199
  // Predicated region
  $region18: #{att_cls_forward.1} parent=0 // pred_check
    _
  $region19: #{att_cls_forward.1} parent=0 // pred_check_branch
    %3202 = sbr.rel (0) target = $region21
  $region20: #{att_cls_forward.1} parent=0 // pred_region
    _
  $region21: #{att_cls_forward.1} parent=0 // pred_fallthru
    _
  // Predicated region
  $region22: #{att_cls_forward.1} parent=0 // pred_check
    _
  $region23: #{att_cls_forward.1} parent=0 // pred_check_branch
    %3204 = sbr.rel (0) target = $region25
  $region24: #{att_cls_forward.1} parent=0 // pred_region
    _
  $region25: #{att_cls_forward.1} parent=0 // pred_fallthru
    _

</llo_original>
